<compile_context>
chip_gen: v6e
topology: v6e:2x2x1
jax: 0.10.0
libtpu: 0.0.40
codegen_flags: <defaults>
</compile_context>

<pallas_src>
import math

import jax
import jax.numpy as jnp
from jax.experimental import pallas as pl
from jax.experimental.pallas import tpu as pltpu

# ---------------------------- model configuration ----------------------------
B = 2
IMG_SIZE = 16
PATCH_SIZE = 4
CSIZE = 3
DSIZE = 32
NHEADS = 4
FFN = 64
NLAYERS = 2
NCLASSES = 10

SEQ = (IMG_SIZE // PATCH_SIZE) ** 2            # 16 patches
SEQ1 = SEQ + 1                                 # +1 class token
S_PAD = 24                                     # padded per-image sequence (sublane mult)
BS = B * S_PAD                                 # 48 rows: whole batch folded into one call
PATCH_DIM = CSIZE * PATCH_SIZE * PATCH_SIZE    # 48
HEAD_DIM = DSIZE // NHEADS                     # 8
C_PAD = 128                                    # lane-dense head output width
LN_EPS = 1e-5
ATT_SCALE = 1.0 / math.sqrt(HEAD_DIM)
NEG_INF = -1e30

# ------------------------- packed-parameter slab layout -----------------------
# One bf16 matrix slab (rows x 128 lanes) + one f32 vector slab.  All row
# offsets for the bf16 slab are multiples of 16 (native bf16 sublane tiling).
_W_PROJ_OFF = 0                                      # (PATCH_DIM, DSIZE)
_W_LAYER_OFF = PATCH_DIM                             # 48
_W_LAYER_STRIDE = 3 * DSIZE + FFN                    # wqkv(32)+wo(32)+w1(32)+w2(64)=160
_W_QKV, _W_O, _W_1, _W_2 = 0, DSIZE, 2 * DSIZE, 3 * DSIZE
_W_HEAD_OFF = _W_LAYER_OFF + NLAYERS * _W_LAYER_STRIDE   # 368
_W_ROWS = _W_HEAD_OFF + DSIZE                             # 400

_V_ADD0_OFF = 0                                      # (BS, DSIZE): pos-enc + cls token, tiled
_V_LAYER_OFF = BS                                    # 48
_V_LAYER_STRIDE = 8
(_V_LN1G, _V_LN1B, _V_BQKV, _V_BO,
 _V_LN2G, _V_LN2B, _V_B1, _V_B2) = range(8)
_V_HEADB_OFF = _V_LAYER_OFF + NLAYERS * _V_LAYER_STRIDE   # 64
_V_ROWS = ((_V_HEADB_OFF + 1 + 7) // 8) * 8               # 72


# ------------------------------- fused kernel --------------------------------
def _vit_kernel(x_ref, w_ref, v_ref, o_ref):
    f32, bf16 = jnp.float32, jnp.bfloat16

    def wrow(off, nrows, ncols):          # bf16 weight matrix slice
        return w_ref[off:off + nrows, 0:ncols]

    def vrow(off, ncols):                 # f32 (1, ncols) bias / LN vector
        return v_ref[off:off + 1, 0:ncols]

    def layernorm(t, g, b):
        mu = jnp.mean(t, axis=-1, keepdims=True)
        var = jnp.mean(jnp.square(t - mu), axis=-1, keepdims=True)
        return (t - mu) * jax.lax.rsqrt(var + LN_EPS) * g + b

    # Patch projection.  The host placed patches at rows 1..SEQ of every
    # S_PAD-row block (row 0 = class-token slot, rows SEQ1.. zero), so adding
    # the batch-tiled (pos-enc + class-token) tensor finishes
    # PositionalEncoding with no in-kernel concat.
    xp = x_ref[...].astype(bf16)                                        # (BS, PATCH_DIM)
    x = jnp.dot(xp, wrow(_W_PROJ_OFF, PATCH_DIM, DSIZE),
                preferred_element_type=f32)
    x = x + v_ref[_V_ADD0_OFF:_V_ADD0_OFF + BS, 0:DSIZE]                # (BS, DSIZE)

    # Additive key-padding mask (key index >= SEQ1 is padding), computed once.
    key_idx = jax.lax.broadcasted_iota(jnp.int32, (1, S_PAD, S_PAD), 2)
    mask = jnp.where(key_idx < SEQ1, 0.0, NEG_INF).astype(f32)          # (1, S, S)

    for l in range(NLAYERS):  # small static unroll
        wl = _W_LAYER_OFF + l * _W_LAYER_STRIDE
        vl = _V_LAYER_OFF + l * _V_LAYER_STRIDE

        # -------------------- multi-head self-attention (pre-LN) -------------
        xn = layernorm(x, vrow(vl + _V_LN1G, DSIZE), vrow(vl + _V_LN1B, DSIZE))
        # ONE lane-dense QKV matmul for the whole batch: (48,32) x (32,96).
        qkv = jnp.dot(xn.astype(bf16), wrow(wl + _W_QKV, DSIZE, 3 * DSIZE),
                      preferred_element_type=f32) + vrow(vl + _V_BQKV, 3 * DSIZE)

        def heads(base):
            # split per batch element (8-aligned sublane slices) and per head
            return jnp.stack([
                qkv[b * S_PAD:(b + 1) * S_PAD,
                    base + h * HEAD_DIM: base + (h + 1) * HEAD_DIM]
                for b in range(B) for h in range(NHEADS)])              # (B*H, S, HD)

        q, k, v = heads(0), heads(DSIZE), heads(2 * DSIZE)
        s = jnp.einsum('nqd,nkd->nqk', q.astype(bf16), k.astype(bf16),
                       preferred_element_type=f32) * ATT_SCALE + mask   # (B*H, S, S)
        m = jnp.max(s, axis=-1, keepdims=True)
        e = jnp.exp(s - m)
        p = e * pl.reciprocal(jnp.sum(e, axis=-1, keepdims=True), approx=True)
        ctx = jnp.einsum('nqk,nkd->nqd', p.astype(bf16), v.astype(bf16),
                         preferred_element_type=f32)                    # (B*H, S, HD)
        # concat heads back onto the lane axis, batches back onto sublanes
        ctx = jnp.concatenate(
            [jnp.concatenate([ctx[b * NHEADS + h] for h in range(NHEADS)], axis=-1)
             for b in range(B)], axis=0)                                # (BS, DSIZE)
        # ONE lane-dense output projection on the original (D, D) weight.
        attn = jnp.dot(ctx.astype(bf16), wrow(wl + _W_O, DSIZE, DSIZE),
                       preferred_element_type=f32) + vrow(vl + _V_BO, DSIZE)
        x = x + attn

        # ------------------------------- MLP (pre-LN) -------------------------
        xn2 = layernorm(x, vrow(vl + _V_LN2G, DSIZE), vrow(vl + _V_LN2B, DSIZE))
        hid = jnp.dot(xn2.astype(bf16), wrow(wl + _W_1, DSIZE, FFN),
                      preferred_element_type=f32) + vrow(vl + _V_B1, FFN)
        # TODO(synk): PyTorch nn.GELU default is exact erf; tanh approx used here.
        hid = jax.nn.gelu(hid, approximate=True)
        x = x + jnp.dot(hid.astype(bf16), wrow(wl + _W_2, FFN, DSIZE),
                        preferred_element_type=f32) + vrow(vl + _V_B2, DSIZE)

    # ------------------ MLP head on all class tokens at once ------------------
    cls = jnp.concatenate([x[b * S_PAD: b * S_PAD + 1, :] for b in range(B)],
                          axis=0)                                       # (B, DSIZE)
    logits = jnp.dot(cls.astype(bf16), wrow(_W_HEAD_OFF, DSIZE, C_PAD),
                     preferred_element_type=f32) + vrow(_V_HEADB_OFF, C_PAD)
    mlog = jnp.max(logits, axis=-1, keepdims=True)
    e = jnp.exp(logits - mlog)                                          # pad lanes -> 0
    # exact normalization (approx reciprocal here broke the row-sum check)
    o_ref[...] = e / jnp.sum(e, axis=-1, keepdims=True)                 # (B, C_PAD)


# --------------------------------- wrapper ------------------------------------
@jax.jit
def vit_forward(x, wslab, vslab):
    b = x.shape[0]
    # Place patches at rows 1..SEQ of each S_PAD-row block; row 0 (class-token
    # slot) and rows SEQ1..S_PAD-1 stay zero so the projection leaves them zero.
    x_pad = jnp.pad(x, ((0, 0), (1, S_PAD - SEQ - 1), (0, 0)))   # (B, S_PAD, PATCH_DIM)
    x_flat = x_pad.reshape(b * S_PAD, PATCH_DIM)                 # batch folded into rows

    vmem = pl.BlockSpec(memory_space=pltpu.MemorySpace.VMEM)     # whole array in VMEM
    out = pl.pallas_call(
        _vit_kernel,
        out_shape=jax.ShapeDtypeStruct((b, C_PAD), jnp.float32),
        in_specs=[vmem, vmem, vmem],
        out_specs=vmem,
    )(x_flat, wslab, vslab)
    return out[:, :NCLASSES]


# ------------------------------- param handling --------------------------------
def init_params(key):
    ks = iter(jax.random.split(key, 6 + NLAYERS * 6))
    p = {
        "w_proj": 0.02 * jax.random.normal(next(ks), (PATCH_DIM, DSIZE), jnp.float32),
        "class_token": jax.random.normal(next(ks), (DSIZE,), jnp.float32),
        "pos_enc": jax.random.normal(next(ks), (SEQ1, DSIZE), jnp.float32),
        "head_w": 0.02 * jax.random.normal(next(ks), (DSIZE, NCLASSES), jnp.float32),
        "head_b": jnp.zeros((NCLASSES,), jnp.float32),
        "layers": [],
    }
    for _ in range(NLAYERS):
        p["layers"].append({
            "ln1_g": jnp.ones((DSIZE,), jnp.float32),
            "ln1_b": jnp.zeros((DSIZE,), jnp.float32),
            # applied as x @ W: columns [q | k | v], head h at cols h*HEAD_DIM..
            # (NOTE: transposed relative to PyTorch's in_proj_weight convention)
            "wqkv": 0.02 * jax.random.normal(next(ks), (DSIZE, 3 * DSIZE), jnp.float32),
            "bqkv": jnp.zeros((3 * DSIZE,), jnp.float32),
            "wo": 0.02 * jax.random.normal(next(ks), (DSIZE, DSIZE), jnp.float32),
            "bo": jnp.zeros((DSIZE,), jnp.float32),
            "ln2_g": jnp.ones((DSIZE,), jnp.float32),
            "ln2_b": jnp.zeros((DSIZE,), jnp.float32),
            "w1": 0.02 * jax.random.normal(next(ks), (DSIZE, FFN), jnp.float32),
            "b1": jnp.zeros((FFN,), jnp.float32),
            "w2": 0.02 * jax.random.normal(next(ks), (FFN, DSIZE), jnp.float32),
            "b2": jnp.zeros((DSIZE,), jnp.float32),
        })
    return p


def pack_params(p):
    """Pack all parameters into two contiguous tile-aligned slabs:
       * wslab: (400, 128) bf16 -- every matrix weight, lane-padded to 128.
       * vslab: (72, 128) f32  -- (pos-enc + class-token) batch-tiled, all
         LN / bias vectors, and the (-1e30 padded) head bias."""
    def lane_pad(a):
        return jnp.pad(a, ((0, 0), (0, C_PAD - a.shape[-1])))

    # ---- bf16 matrix slab ----
    mats = [p["w_proj"]]
    for lp in p["layers"]:
        mats += [lp["wqkv"], lp["wo"], lp["w1"], lp["w2"]]
    mats.append(p["head_w"])
    wslab = jnp.concatenate([lane_pad(m) for m in mats], axis=0).astype(jnp.bfloat16)
    assert wslab.shape == (_W_ROWS, C_PAD), wslab.shape

    # ---- f32 vector slab ----
    pos = jnp.pad(p["pos_enc"], ((0, S_PAD - SEQ1), (0, 0)))     # (S_PAD, DSIZE)
    add0 = pos.at[0, :].add(p["class_token"])                    # cls token merged into row 0
    add0 = jnp.tile(add0, (B, 1))                                # (BS, DSIZE), batch-tiled

    vecs = [lane_pad(add0)]
    for lp in p["layers"]:
        for name in ("ln1_g", "ln1_b", "bqkv", "bo", "ln2_g", "ln2_b", "b1", "b2"):
            vecs.append(lane_pad(lp[name][None, :]))
    # padded logit lanes get -1e30 via the bias so they softmax to exactly 0
    head_b = jnp.concatenate(
        [p["head_b"], jnp.full((C_PAD - NCLASSES,), NEG_INF, jnp.float32)])[None, :]
    vecs.append(head_b)
    vslab = jnp.concatenate(vecs, axis=0)
    vslab = jnp.pad(vslab, ((0, _V_ROWS - vslab.shape[0]), (0, 0)))
    assert vslab.shape == (_V_ROWS, C_PAD), vslab.shape
    return wslab, vslab.astype(jnp.float32)


if __name__ == "__main__":
    key = jax.random.PRNGKey(0)
    k_x, k_p = jax.random.split(key)
    # x is patch-flattened: (B, num_patches, csize * patch_size**2)
    x = jax.random.normal(k_x, (B, SEQ, PATCH_DIM), jnp.float32)
    wslab, vslab = pack_params(init_params(k_p))

    out = jax.block_until_ready(vit_forward(x, wslab, vslab))

    assert out.shape == (B, NCLASSES), out.shape
    assert bool(jnp.all(jnp.isfinite(out)))
    # head softmax is exactly normalized now -> rows sum to 1
    assert bool(jnp.allclose(jnp.sum(out, axis=-1), 1.0, atol=1e-3)), jnp.sum(out, axis=-1)
    print("KERNEL_OK")
</pallas_src>

<mosaic_0001>
module attributes {stable_mosaic.version = 11 : i64} {
  func.func @_vit_kernel(%arg0: memref<48x48xf32, #tpu.memory_space<vmem>>, %arg1: memref<400x128xbf16, #tpu.memory_space<vmem>>, %arg2: memref<72x128xf32, #tpu.memory_space<vmem>>, %arg3: memref<2x128xf32, #tpu.memory_space<vmem>>) attributes {dimension_semantics = [], scalar_prefetch = 0 : i64, scratch_operands = 0 : i64, tpu.core_type = #tpu.core_type<tc>} {
    %c0 = arith.constant 0 : index
    %c0_0 = arith.constant 0 : index
    %0 = vector.load %arg0[%c0, %c0_0] : memref<48x48xf32, #tpu.memory_space<vmem>>, vector<48x48xf32>
    %1 = arith.truncf %0 : vector<48x48xf32> to vector<48x48xbf16>
    %c0_1 = arith.constant 0 : index
    %c0_2 = arith.constant 0 : index
    %2 = vector.load %arg1[%c0_1, %c0_2] : memref<400x128xbf16, #tpu.memory_space<vmem>>, vector<48x32xbf16>
    %cst = arith.constant dense<0.000000e+00> : vector<48x32xf32>
    %3 = tpu.matmul %1, %2, %cst {dimension_numbers = #tpu.dot_dimension_numbers<[1], [0], [0], [1], [0, 0, 1, 1], [], []>} : vector<48x48xbf16>, vector<48x32xbf16>, vector<48x32xf32> -> vector<48x32xf32>
    %c0_3 = arith.constant 0 : index
    %c0_4 = arith.constant 0 : index
    %4 = vector.load %arg2[%c0_3, %c0_4] : memref<72x128xf32, #tpu.memory_space<vmem>>, vector<48x32xf32>
    %5 = arith.addf %3, %4 : vector<48x32xf32>
    %6 = tpu.iota {dimensions = array<i32: 2>} : vector<1x24x24xi32>
    %c17_i32 = arith.constant 17 : i32
    %7 = vector.broadcast %c17_i32 : i32 to vector<1x24x24xi32>
    %8 = arith.cmpi slt, %6, %7 : vector<1x24x24xi32>
    %cst_5 = arith.constant 0.000000e+00 : f32
    %cst_6 = arith.constant -1.000000e+30 : f32
    %9 = vector.broadcast %cst_5 : f32 to vector<1x24x24xf32>
    %10 = vector.broadcast %cst_6 : f32 to vector<1x24x24xf32>
    %11 = arith.select %8, %9, %10 : vector<1x24x24xi1>, vector<1x24x24xf32>
    %c48 = arith.constant 48 : index
    %c0_7 = arith.constant 0 : index
    %12 = vector.load %arg2[%c48, %c0_7] : memref<72x128xf32, #tpu.memory_space<vmem>>, vector<1x32xf32>
    %c49 = arith.constant 49 : index
    %c0_8 = arith.constant 0 : index
    %13 = vector.load %arg2[%c49, %c0_8] : memref<72x128xf32, #tpu.memory_space<vmem>>, vector<1x32xf32>
    %cst_9 = arith.constant dense<0.000000e+00> : vector<48xf32>
    %14 = vector.multi_reduction <add>, %5, %cst_9 [1] : vector<48x32xf32> to vector<48xf32>
    %15 = vector.shape_cast %14 : vector<48xf32> to vector<48x1xf32>
    %cst_10 = arith.constant 3.200000e+01 : f32
    %16 = vector.broadcast %cst_10 : f32 to vector<48x1xf32>
    %17 = arith.divf %15, %16 : vector<48x1xf32>
    %18 = vector.broadcast %17 : vector<48x1xf32> to vector<48x32xf32>
    %19 = arith.subf %5, %18 : vector<48x32xf32>
    %20 = arith.mulf %19, %19 : vector<48x32xf32>
    %cst_11 = arith.constant dense<0.000000e+00> : vector<48xf32>
    %21 = vector.multi_reduction <add>, %20, %cst_11 [1] : vector<48x32xf32> to vector<48xf32>
    %22 = vector.shape_cast %21 : vector<48xf32> to vector<48x1xf32>
    %cst_12 = arith.constant 3.200000e+01 : f32
    %23 = vector.broadcast %cst_12 : f32 to vector<48x1xf32>
    %24 = arith.divf %22, %23 : vector<48x1xf32>
    %25 = vector.broadcast %17 : vector<48x1xf32> to vector<48x32xf32>
    %26 = arith.subf %5, %25 : vector<48x32xf32>
    %cst_13 = arith.constant 9.99999974E-6 : f32
    %27 = vector.broadcast %cst_13 : f32 to vector<48x1xf32>
    %28 = arith.addf %24, %27 : vector<48x1xf32>
    %29 = math.rsqrt %28 : vector<48x1xf32>
    %30 = vector.broadcast %29 : vector<48x1xf32> to vector<48x32xf32>
    %31 = arith.mulf %26, %30 : vector<48x32xf32>
    %32 = vector.broadcast %12 : vector<1x32xf32> to vector<48x32xf32>
    %33 = arith.mulf %31, %32 : vector<48x32xf32>
    %34 = vector.broadcast %13 : vector<1x32xf32> to vector<48x32xf32>
    %35 = arith.addf %33, %34 : vector<48x32xf32>
    %36 = arith.truncf %35 : vector<48x32xf32> to vector<48x32xbf16>
    %c48_14 = arith.constant 48 : index
    %c0_15 = arith.constant 0 : index
    %37 = vector.load %arg1[%c48_14, %c0_15] : memref<400x128xbf16, #tpu.memory_space<vmem>>, vector<32x96xbf16>
    %cst_16 = arith.constant dense<0.000000e+00> : vector<48x96xf32>
    %38 = tpu.matmul %36, %37, %cst_16 {dimension_numbers = #tpu.dot_dimension_numbers<[1], [0], [0], [1], [0, 0, 1, 1], [], []>} : vector<48x32xbf16>, vector<32x96xbf16>, vector<48x96xf32> -> vector<48x96xf32>
    %c50 = arith.constant 50 : index
    %c0_17 = arith.constant 0 : index
    %39 = vector.load %arg2[%c50, %c0_17] : memref<72x128xf32, #tpu.memory_space<vmem>>, vector<1x96xf32>
    %40 = vector.broadcast %39 : vector<1x96xf32> to vector<48x96xf32>
    %41 = arith.addf %38, %40 : vector<48x96xf32>
    %42 = vector.extract_strided_slice %41 {offsets = [0, 0], sizes = [24, 8], strides = [1, 1]} : vector<48x96xf32> to vector<24x8xf32>
    %43 = vector.extract_strided_slice %41 {offsets = [0, 8], sizes = [24, 8], strides = [1, 1]} : vector<48x96xf32> to vector<24x8xf32>
    %44 = vector.extract_strided_slice %41 {offsets = [0, 16], sizes = [24, 8], strides = [1, 1]} : vector<48x96xf32> to vector<24x8xf32>
    %45 = vector.extract_strided_slice %41 {offsets = [0, 24], sizes = [24, 8], strides = [1, 1]} : vector<48x96xf32> to vector<24x8xf32>
    %46 = vector.extract_strided_slice %41 {offsets = [24, 0], sizes = [24, 8], strides = [1, 1]} : vector<48x96xf32> to vector<24x8xf32>
    %47 = vector.extract_strided_slice %41 {offsets = [24, 8], sizes = [24, 8], strides = [1, 1]} : vector<48x96xf32> to vector<24x8xf32>
    %48 = vector.extract_strided_slice %41 {offsets = [24, 16], sizes = [24, 8], strides = [1, 1]} : vector<48x96xf32> to vector<24x8xf32>
    %49 = vector.extract_strided_slice %41 {offsets = [24, 24], sizes = [24, 8], strides = [1, 1]} : vector<48x96xf32> to vector<24x8xf32>
    %50 = vector.shape_cast %42 : vector<24x8xf32> to vector<1x24x8xf32>
    %51 = vector.shape_cast %43 : vector<24x8xf32> to vector<1x24x8xf32>
    %52 = vector.shape_cast %44 : vector<24x8xf32> to vector<1x24x8xf32>
    %53 = vector.shape_cast %45 : vector<24x8xf32> to vector<1x24x8xf32>
    %54 = vector.shape_cast %46 : vector<24x8xf32> to vector<1x24x8xf32>
    %55 = vector.shape_cast %47 : vector<24x8xf32> to vector<1x24x8xf32>
    %56 = vector.shape_cast %48 : vector<24x8xf32> to vector<1x24x8xf32>
    %57 = vector.shape_cast %49 : vector<24x8xf32> to vector<1x24x8xf32>
    %58 = tpu.concatenate %50, %51, %52, %53, %54, %55, %56, %57 in 0 : vector<1x24x8xf32>, vector<1x24x8xf32>, vector<1x24x8xf32>, vector<1x24x8xf32>, vector<1x24x8xf32>, vector<1x24x8xf32>, vector<1x24x8xf32>, vector<1x24x8xf32> -> vector<8x24x8xf32>
    %59 = vector.extract_strided_slice %41 {offsets = [0, 32], sizes = [24, 8], strides = [1, 1]} : vector<48x96xf32> to vector<24x8xf32>
    %60 = vector.extract_strided_slice %41 {offsets = [0, 40], sizes = [24, 8], strides = [1, 1]} : vector<48x96xf32> to vector<24x8xf32>
    %61 = vector.extract_strided_slice %41 {offsets = [0, 48], sizes = [24, 8], strides = [1, 1]} : vector<48x96xf32> to vector<24x8xf32>
    %62 = vector.extract_strided_slice %41 {offsets = [0, 56], sizes = [24, 8], strides = [1, 1]} : vector<48x96xf32> to vector<24x8xf32>
    %63 = vector.extract_strided_slice %41 {offsets = [24, 32], sizes = [24, 8], strides = [1, 1]} : vector<48x96xf32> to vector<24x8xf32>
    %64 = vector.extract_strided_slice %41 {offsets = [24, 40], sizes = [24, 8], strides = [1, 1]} : vector<48x96xf32> to vector<24x8xf32>
    %65 = vector.extract_strided_slice %41 {offsets = [24, 48], sizes = [24, 8], strides = [1, 1]} : vector<48x96xf32> to vector<24x8xf32>
    %66 = vector.extract_strided_slice %41 {offsets = [24, 56], sizes = [24, 8], strides = [1, 1]} : vector<48x96xf32> to vector<24x8xf32>
    %67 = vector.shape_cast %59 : vector<24x8xf32> to vector<1x24x8xf32>
    %68 = vector.shape_cast %60 : vector<24x8xf32> to vector<1x24x8xf32>
    %69 = vector.shape_cast %61 : vector<24x8xf32> to vector<1x24x8xf32>
    %70 = vector.shape_cast %62 : vector<24x8xf32> to vector<1x24x8xf32>
    %71 = vector.shape_cast %63 : vector<24x8xf32> to vector<1x24x8xf32>
    %72 = vector.shape_cast %64 : vector<24x8xf32> to vector<1x24x8xf32>
    %73 = vector.shape_cast %65 : vector<24x8xf32> to vector<1x24x8xf32>
    %74 = vector.shape_cast %66 : vector<24x8xf32> to vector<1x24x8xf32>
    %75 = tpu.concatenate %67, %68, %69, %70, %71, %72, %73, %74 in 0 : vector<1x24x8xf32>, vector<1x24x8xf32>, vector<1x24x8xf32>, vector<1x24x8xf32>, vector<1x24x8xf32>, vector<1x24x8xf32>, vector<1x24x8xf32>, vector<1x24x8xf32> -> vector<8x24x8xf32>
    %76 = vector.extract_strided_slice %41 {offsets = [0, 64], sizes = [24, 8], strides = [1, 1]} : vector<48x96xf32> to vector<24x8xf32>
    %77 = vector.extract_strided_slice %41 {offsets = [0, 72], sizes = [24, 8], strides = [1, 1]} : vector<48x96xf32> to vector<24x8xf32>
    %78 = vector.extract_strided_slice %41 {offsets = [0, 80], sizes = [24, 8], strides = [1, 1]} : vector<48x96xf32> to vector<24x8xf32>
    %79 = vector.extract_strided_slice %41 {offsets = [0, 88], sizes = [24, 8], strides = [1, 1]} : vector<48x96xf32> to vector<24x8xf32>
    %80 = vector.extract_strided_slice %41 {offsets = [24, 64], sizes = [24, 8], strides = [1, 1]} : vector<48x96xf32> to vector<24x8xf32>
    %81 = vector.extract_strided_slice %41 {offsets = [24, 72], sizes = [24, 8], strides = [1, 1]} : vector<48x96xf32> to vector<24x8xf32>
    %82 = vector.extract_strided_slice %41 {offsets = [24, 80], sizes = [24, 8], strides = [1, 1]} : vector<48x96xf32> to vector<24x8xf32>
    %83 = vector.extract_strided_slice %41 {offsets = [24, 88], sizes = [24, 8], strides = [1, 1]} : vector<48x96xf32> to vector<24x8xf32>
    %84 = vector.shape_cast %76 : vector<24x8xf32> to vector<1x24x8xf32>
    %85 = vector.shape_cast %77 : vector<24x8xf32> to vector<1x24x8xf32>
    %86 = vector.shape_cast %78 : vector<24x8xf32> to vector<1x24x8xf32>
    %87 = vector.shape_cast %79 : vector<24x8xf32> to vector<1x24x8xf32>
    %88 = vector.shape_cast %80 : vector<24x8xf32> to vector<1x24x8xf32>
    %89 = vector.shape_cast %81 : vector<24x8xf32> to vector<1x24x8xf32>
    %90 = vector.shape_cast %82 : vector<24x8xf32> to vector<1x24x8xf32>
    %91 = vector.shape_cast %83 : vector<24x8xf32> to vector<1x24x8xf32>
    %92 = tpu.concatenate %84, %85, %86, %87, %88, %89, %90, %91 in 0 : vector<1x24x8xf32>, vector<1x24x8xf32>, vector<1x24x8xf32>, vector<1x24x8xf32>, vector<1x24x8xf32>, vector<1x24x8xf32>, vector<1x24x8xf32>, vector<1x24x8xf32> -> vector<8x24x8xf32>
    %93 = arith.truncf %58 : vector<8x24x8xf32> to vector<8x24x8xbf16>
    %94 = arith.truncf %75 : vector<8x24x8xf32> to vector<8x24x8xbf16>
    "tpu.trace_start"() <{level = 10 : i32, message = "nqd,nkd->nqk"}> : () -> ()
    %cst_18 = arith.constant dense<0.000000e+00> : vector<8x24x24xf32>
    %95 = tpu.matmul %93, %94, %cst_18 {dimension_numbers = #tpu.dot_dimension_numbers<[2], [2], [1], [1], [0, 0, 0, 1, 1, 1], [0], [0]>} : vector<8x24x8xbf16>, vector<8x24x8xbf16>, vector<8x24x24xf32> -> vector<8x24x24xf32>
    "tpu.trace_stop"() : () -> ()
    %cst_19 = arith.constant 0.353553385 : f32
    %96 = vector.broadcast %cst_19 : f32 to vector<8x24x24xf32>
    %97 = arith.mulf %95, %96 : vector<8x24x24xf32>
    %98 = vector.broadcast %11 : vector<1x24x24xf32> to vector<8x24x24xf32>
    %99 = arith.addf %97, %98 : vector<8x24x24xf32>
    %cst_20 = arith.constant dense<0xFF800000> : vector<8x24xf32>
    %100 = vector.multi_reduction <maximumf>, %99, %cst_20 [2] : vector<8x24x24xf32> to vector<8x24xf32>
    %101 = vector.shape_cast %100 : vector<8x24xf32> to vector<8x24x1xf32>
    %102 = vector.broadcast %101 : vector<8x24x1xf32> to vector<8x24x24xf32>
    %103 = arith.subf %99, %102 : vector<8x24x24xf32>
    %104 = math.exp %103 : vector<8x24x24xf32>
    %cst_21 = arith.constant dense<0.000000e+00> : vector<8x24xf32>
    %105 = vector.multi_reduction <add>, %104, %cst_21 [2] : vector<8x24x24xf32> to vector<8x24xf32>
    %106 = vector.shape_cast %105 : vector<8x24xf32> to vector<8x24x1xf32>
    %107 = tpu.reciprocal %106 {approx = true} : vector<8x24x1xf32> -> vector<8x24x1xf32>
    %108 = vector.broadcast %107 : vector<8x24x1xf32> to vector<8x24x24xf32>
    %109 = arith.mulf %104, %108 : vector<8x24x24xf32>
    %110 = arith.truncf %109 : vector<8x24x24xf32> to vector<8x24x24xbf16>
    %111 = arith.truncf %92 : vector<8x24x8xf32> to vector<8x24x8xbf16>
    "tpu.trace_start"() <{level = 10 : i32, message = "nqk,nkd->nqd"}> : () -> ()
    %cst_22 = arith.constant dense<0.000000e+00> : vector<8x24x8xf32>
    %112 = tpu.matmul %110, %111, %cst_22 {dimension_numbers = #tpu.dot_dimension_numbers<[2], [1], [1], [2], [0, 0, 0, 1, 1, 2], [0], [0]>} : vector<8x24x24xbf16>, vector<8x24x8xbf16>, vector<8x24x8xf32> -> vector<8x24x8xf32>
    "tpu.trace_stop"() : () -> ()
    %113 = vector.extract_strided_slice %112 {offsets = [0, 0, 0], sizes = [1, 24, 8], strides = [1, 1, 1]} : vector<8x24x8xf32> to vector<1x24x8xf32>
    %114 = vector.shape_cast %113 : vector<1x24x8xf32> to vector<24x8xf32>
    %115 = vector.extract_strided_slice %112 {offsets = [1, 0, 0], sizes = [1, 24, 8], strides = [1, 1, 1]} : vector<8x24x8xf32> to vector<1x24x8xf32>
    %116 = vector.shape_cast %115 : vector<1x24x8xf32> to vector<24x8xf32>
    %117 = vector.extract_strided_slice %112 {offsets = [2, 0, 0], sizes = [1, 24, 8], strides = [1, 1, 1]} : vector<8x24x8xf32> to vector<1x24x8xf32>
    %118 = vector.shape_cast %117 : vector<1x24x8xf32> to vector<24x8xf32>
    %119 = vector.extract_strided_slice %112 {offsets = [3, 0, 0], sizes = [1, 24, 8], strides = [1, 1, 1]} : vector<8x24x8xf32> to vector<1x24x8xf32>
    %120 = vector.shape_cast %119 : vector<1x24x8xf32> to vector<24x8xf32>
    %121 = tpu.concatenate %114, %116, %118, %120 in 1 : vector<24x8xf32>, vector<24x8xf32>, vector<24x8xf32>, vector<24x8xf32> -> vector<24x32xf32>
    %122 = vector.extract_strided_slice %112 {offsets = [4, 0, 0], sizes = [1, 24, 8], strides = [1, 1, 1]} : vector<8x24x8xf32> to vector<1x24x8xf32>
    %123 = vector.shape_cast %122 : vector<1x24x8xf32> to vector<24x8xf32>
    %124 = vector.extract_strided_slice %112 {offsets = [5, 0, 0], sizes = [1, 24, 8], strides = [1, 1, 1]} : vector<8x24x8xf32> to vector<1x24x8xf32>
    %125 = vector.shape_cast %124 : vector<1x24x8xf32> to vector<24x8xf32>
    %126 = vector.extract_strided_slice %112 {offsets = [6, 0, 0], sizes = [1, 24, 8], strides = [1, 1, 1]} : vector<8x24x8xf32> to vector<1x24x8xf32>
    %127 = vector.shape_cast %126 : vector<1x24x8xf32> to vector<24x8xf32>
    %128 = vector.extract_strided_slice %112 {offsets = [7, 0, 0], sizes = [1, 24, 8], strides = [1, 1, 1]} : vector<8x24x8xf32> to vector<1x24x8xf32>
    %129 = vector.shape_cast %128 : vector<1x24x8xf32> to vector<24x8xf32>
    %130 = tpu.concatenate %123, %125, %127, %129 in 1 : vector<24x8xf32>, vector<24x8xf32>, vector<24x8xf32>, vector<24x8xf32> -> vector<24x32xf32>
    %131 = tpu.concatenate %121, %130 in 0 : vector<24x32xf32>, vector<24x32xf32> -> vector<48x32xf32>
    %132 = arith.truncf %131 : vector<48x32xf32> to vector<48x32xbf16>
    %c80 = arith.constant 80 : index
    %c0_23 = arith.constant 0 : index
    %133 = vector.load %arg1[%c80, %c0_23] : memref<400x128xbf16, #tpu.memory_space<vmem>>, vector<32x32xbf16>
    %cst_24 = arith.constant dense<0.000000e+00> : vector<48x32xf32>
    %134 = tpu.matmul %132, %133, %cst_24 {dimension_numbers = #tpu.dot_dimension_numbers<[1], [0], [0], [1], [0, 0, 1, 1], [], []>} : vector<48x32xbf16>, vector<32x32xbf16>, vector<48x32xf32> -> vector<48x32xf32>
    %c51 = arith.constant 51 : index
    %c0_25 = arith.constant 0 : index
    %135 = vector.load %arg2[%c51, %c0_25] : memref<72x128xf32, #tpu.memory_space<vmem>>, vector<1x32xf32>
    %136 = vector.broadcast %135 : vector<1x32xf32> to vector<48x32xf32>
    %137 = arith.addf %134, %136 : vector<48x32xf32>
    %138 = arith.addf %5, %137 : vector<48x32xf32>
    %c52 = arith.constant 52 : index
    %c0_26 = arith.constant 0 : index
    %139 = vector.load %arg2[%c52, %c0_26] : memref<72x128xf32, #tpu.memory_space<vmem>>, vector<1x32xf32>
    %c53 = arith.constant 53 : index
    %c0_27 = arith.constant 0 : index
    %140 = vector.load %arg2[%c53, %c0_27] : memref<72x128xf32, #tpu.memory_space<vmem>>, vector<1x32xf32>
    %cst_28 = arith.constant dense<0.000000e+00> : vector<48xf32>
    %141 = vector.multi_reduction <add>, %138, %cst_28 [1] : vector<48x32xf32> to vector<48xf32>
    %142 = vector.shape_cast %141 : vector<48xf32> to vector<48x1xf32>
    %cst_29 = arith.constant 3.200000e+01 : f32
    %143 = vector.broadcast %cst_29 : f32 to vector<48x1xf32>
    %144 = arith.divf %142, %143 : vector<48x1xf32>
    %145 = vector.broadcast %144 : vector<48x1xf32> to vector<48x32xf32>
    %146 = arith.subf %138, %145 : vector<48x32xf32>
    %147 = arith.mulf %146, %146 : vector<48x32xf32>
    %cst_30 = arith.constant dense<0.000000e+00> : vector<48xf32>
    %148 = vector.multi_reduction <add>, %147, %cst_30 [1] : vector<48x32xf32> to vector<48xf32>
    %149 = vector.shape_cast %148 : vector<48xf32> to vector<48x1xf32>
    %cst_31 = arith.constant 3.200000e+01 : f32
    %150 = vector.broadcast %cst_31 : f32 to vector<48x1xf32>
    %151 = arith.divf %149, %150 : vector<48x1xf32>
    %152 = vector.broadcast %144 : vector<48x1xf32> to vector<48x32xf32>
    %153 = arith.subf %138, %152 : vector<48x32xf32>
    %cst_32 = arith.constant 9.99999974E-6 : f32
    %154 = vector.broadcast %cst_32 : f32 to vector<48x1xf32>
    %155 = arith.addf %151, %154 : vector<48x1xf32>
    %156 = math.rsqrt %155 : vector<48x1xf32>
    %157 = vector.broadcast %156 : vector<48x1xf32> to vector<48x32xf32>
    %158 = arith.mulf %153, %157 : vector<48x32xf32>
    %159 = vector.broadcast %139 : vector<1x32xf32> to vector<48x32xf32>
    %160 = arith.mulf %158, %159 : vector<48x32xf32>
    %161 = vector.broadcast %140 : vector<1x32xf32> to vector<48x32xf32>
    %162 = arith.addf %160, %161 : vector<48x32xf32>
    %163 = arith.truncf %162 : vector<48x32xf32> to vector<48x32xbf16>
    %c112 = arith.constant 112 : index
    %c0_33 = arith.constant 0 : index
    %164 = vector.load %arg1[%c112, %c0_33] : memref<400x128xbf16, #tpu.memory_space<vmem>>, vector<32x64xbf16>
    %cst_34 = arith.constant dense<0.000000e+00> : vector<48x64xf32>
    %165 = tpu.matmul %163, %164, %cst_34 {dimension_numbers = #tpu.dot_dimension_numbers<[1], [0], [0], [1], [0, 0, 1, 1], [], []>} : vector<48x32xbf16>, vector<32x64xbf16>, vector<48x64xf32> -> vector<48x64xf32>
    %c54 = arith.constant 54 : index
    %c0_35 = arith.constant 0 : index
    %166 = vector.load %arg2[%c54, %c0_35] : memref<72x128xf32, #tpu.memory_space<vmem>>, vector<1x64xf32>
    %167 = vector.broadcast %166 : vector<1x64xf32> to vector<48x64xf32>
    %168 = arith.addf %165, %167 : vector<48x64xf32>
    %169 = arith.mulf %168, %168 : vector<48x64xf32>
    %170 = arith.mulf %168, %169 : vector<48x64xf32>
    %cst_36 = arith.constant 4.471500e-02 : f32
    %171 = vector.broadcast %cst_36 : f32 to vector<48x64xf32>
    %172 = arith.mulf %171, %170 : vector<48x64xf32>
    %173 = arith.addf %168, %172 : vector<48x64xf32>
    %cst_37 = arith.constant 0.797884583 : f32
    %174 = vector.broadcast %cst_37 : f32 to vector<48x64xf32>
    %175 = arith.mulf %174, %173 : vector<48x64xf32>
    %176 = math.tanh %175 : vector<48x64xf32>
    %cst_38 = arith.constant 1.000000e+00 : f32
    %177 = vector.broadcast %cst_38 : f32 to vector<48x64xf32>
    %178 = arith.addf %177, %176 : vector<48x64xf32>
    %cst_39 = arith.constant 5.000000e-01 : f32
    %179 = vector.broadcast %cst_39 : f32 to vector<48x64xf32>
    %180 = arith.mulf %179, %178 : vector<48x64xf32>
    %181 = arith.mulf %168, %180 : vector<48x64xf32>
    %182 = arith.truncf %181 : vector<48x64xf32> to vector<48x64xbf16>
    %c144 = arith.constant 144 : index
    %c0_40 = arith.constant 0 : index
    %183 = vector.load %arg1[%c144, %c0_40] : memref<400x128xbf16, #tpu.memory_space<vmem>>, vector<64x32xbf16>
    %cst_41 = arith.constant dense<0.000000e+00> : vector<48x32xf32>
    %184 = tpu.matmul %182, %183, %cst_41 {dimension_numbers = #tpu.dot_dimension_numbers<[1], [0], [0], [1], [0, 0, 1, 1], [], []>} : vector<48x64xbf16>, vector<64x32xbf16>, vector<48x32xf32> -> vector<48x32xf32>
    %185 = arith.addf %138, %184 : vector<48x32xf32>
    %c55 = arith.constant 55 : index
    %c0_42 = arith.constant 0 : index
    %186 = vector.load %arg2[%c55, %c0_42] : memref<72x128xf32, #tpu.memory_space<vmem>>, vector<1x32xf32>
    %187 = vector.broadcast %186 : vector<1x32xf32> to vector<48x32xf32>
    %188 = arith.addf %185, %187 : vector<48x32xf32>
    %c56 = arith.constant 56 : index
    %c0_43 = arith.constant 0 : index
    %189 = vector.load %arg2[%c56, %c0_43] : memref<72x128xf32, #tpu.memory_space<vmem>>, vector<1x32xf32>
    %c57 = arith.constant 57 : index
    %c0_44 = arith.constant 0 : index
    %190 = vector.load %arg2[%c57, %c0_44] : memref<72x128xf32, #tpu.memory_space<vmem>>, vector<1x32xf32>
    %cst_45 = arith.constant dense<0.000000e+00> : vector<48xf32>
    %191 = vector.multi_reduction <add>, %188, %cst_45 [1] : vector<48x32xf32> to vector<48xf32>
    %192 = vector.shape_cast %191 : vector<48xf32> to vector<48x1xf32>
    %cst_46 = arith.constant 3.200000e+01 : f32
    %193 = vector.broadcast %cst_46 : f32 to vector<48x1xf32>
    %194 = arith.divf %192, %193 : vector<48x1xf32>
    %195 = vector.broadcast %194 : vector<48x1xf32> to vector<48x32xf32>
    %196 = arith.subf %188, %195 : vector<48x32xf32>
    %197 = arith.mulf %196, %196 : vector<48x32xf32>
    %cst_47 = arith.constant dense<0.000000e+00> : vector<48xf32>
    %198 = vector.multi_reduction <add>, %197, %cst_47 [1] : vector<48x32xf32> to vector<48xf32>
    %199 = vector.shape_cast %198 : vector<48xf32> to vector<48x1xf32>
    %cst_48 = arith.constant 3.200000e+01 : f32
    %200 = vector.broadcast %cst_48 : f32 to vector<48x1xf32>
    %201 = arith.divf %199, %200 : vector<48x1xf32>
    %202 = vector.broadcast %194 : vector<48x1xf32> to vector<48x32xf32>
    %203 = arith.subf %188, %202 : vector<48x32xf32>
    %cst_49 = arith.constant 9.99999974E-6 : f32
    %204 = vector.broadcast %cst_49 : f32 to vector<48x1xf32>
    %205 = arith.addf %201, %204 : vector<48x1xf32>
    %206 = math.rsqrt %205 : vector<48x1xf32>
    %207 = vector.broadcast %206 : vector<48x1xf32> to vector<48x32xf32>
    %208 = arith.mulf %203, %207 : vector<48x32xf32>
    %209 = vector.broadcast %189 : vector<1x32xf32> to vector<48x32xf32>
    %210 = arith.mulf %208, %209 : vector<48x32xf32>
    %211 = vector.broadcast %190 : vector<1x32xf32> to vector<48x32xf32>
    %212 = arith.addf %210, %211 : vector<48x32xf32>
    %213 = arith.truncf %212 : vector<48x32xf32> to vector<48x32xbf16>
    %c208 = arith.constant 208 : index
    %c0_50 = arith.constant 0 : index
    %214 = vector.load %arg1[%c208, %c0_50] : memref<400x128xbf16, #tpu.memory_space<vmem>>, vector<32x96xbf16>
    %cst_51 = arith.constant dense<0.000000e+00> : vector<48x96xf32>
    %215 = tpu.matmul %213, %214, %cst_51 {dimension_numbers = #tpu.dot_dimension_numbers<[1], [0], [0], [1], [0, 0, 1, 1], [], []>} : vector<48x32xbf16>, vector<32x96xbf16>, vector<48x96xf32> -> vector<48x96xf32>
    %c58 = arith.constant 58 : index
    %c0_52 = arith.constant 0 : index
    %216 = vector.load %arg2[%c58, %c0_52] : memref<72x128xf32, #tpu.memory_space<vmem>>, vector<1x96xf32>
    %217 = vector.broadcast %216 : vector<1x96xf32> to vector<48x96xf32>
    %218 = arith.addf %215, %217 : vector<48x96xf32>
    %219 = vector.extract_strided_slice %218 {offsets = [0, 0], sizes = [24, 8], strides = [1, 1]} : vector<48x96xf32> to vector<24x8xf32>
    %220 = vector.extract_strided_slice %218 {offsets = [0, 8], sizes = [24, 8], strides = [1, 1]} : vector<48x96xf32> to vector<24x8xf32>
    %221 = vector.extract_strided_slice %218 {offsets = [0, 16], sizes = [24, 8], strides = [1, 1]} : vector<48x96xf32> to vector<24x8xf32>
    %222 = vector.extract_strided_slice %218 {offsets = [0, 24], sizes = [24, 8], strides = [1, 1]} : vector<48x96xf32> to vector<24x8xf32>
    %223 = vector.extract_strided_slice %218 {offsets = [24, 0], sizes = [24, 8], strides = [1, 1]} : vector<48x96xf32> to vector<24x8xf32>
    %224 = vector.extract_strided_slice %218 {offsets = [24, 8], sizes = [24, 8], strides = [1, 1]} : vector<48x96xf32> to vector<24x8xf32>
    %225 = vector.extract_strided_slice %218 {offsets = [24, 16], sizes = [24, 8], strides = [1, 1]} : vector<48x96xf32> to vector<24x8xf32>
    %226 = vector.extract_strided_slice %218 {offsets = [24, 24], sizes = [24, 8], strides = [1, 1]} : vector<48x96xf32> to vector<24x8xf32>
    %227 = vector.shape_cast %219 : vector<24x8xf32> to vector<1x24x8xf32>
    %228 = vector.shape_cast %220 : vector<24x8xf32> to vector<1x24x8xf32>
    %229 = vector.shape_cast %221 : vector<24x8xf32> to vector<1x24x8xf32>
    %230 = vector.shape_cast %222 : vector<24x8xf32> to vector<1x24x8xf32>
    %231 = vector.shape_cast %223 : vector<24x8xf32> to vector<1x24x8xf32>
    %232 = vector.shape_cast %224 : vector<24x8xf32> to vector<1x24x8xf32>
    %233 = vector.shape_cast %225 : vector<24x8xf32> to vector<1x24x8xf32>
    %234 = vector.shape_cast %226 : vector<24x8xf32> to vector<1x24x8xf32>
    %235 = tpu.concatenate %227, %228, %229, %230, %231, %232, %233, %234 in 0 : vector<1x24x8xf32>, vector<1x24x8xf32>, vector<1x24x8xf32>, vector<1x24x8xf32>, vector<1x24x8xf32>, vector<1x24x8xf32>, vector<1x24x8xf32>, vector<1x24x8xf32> -> vector<8x24x8xf32>
    %236 = vector.extract_strided_slice %218 {offsets = [0, 32], sizes = [24, 8], strides = [1, 1]} : vector<48x96xf32> to vector<24x8xf32>
    %237 = vector.extract_strided_slice %218 {offsets = [0, 40], sizes = [24, 8], strides = [1, 1]} : vector<48x96xf32> to vector<24x8xf32>
    %238 = vector.extract_strided_slice %218 {offsets = [0, 48], sizes = [24, 8], strides = [1, 1]} : vector<48x96xf32> to vector<24x8xf32>
    %239 = vector.extract_strided_slice %218 {offsets = [0, 56], sizes = [24, 8], strides = [1, 1]} : vector<48x96xf32> to vector<24x8xf32>
    %240 = vector.extract_strided_slice %218 {offsets = [24, 32], sizes = [24, 8], strides = [1, 1]} : vector<48x96xf32> to vector<24x8xf32>
    %241 = vector.extract_strided_slice %218 {offsets = [24, 40], sizes = [24, 8], strides = [1, 1]} : vector<48x96xf32> to vector<24x8xf32>
    %242 = vector.extract_strided_slice %218 {offsets = [24, 48], sizes = [24, 8], strides = [1, 1]} : vector<48x96xf32> to vector<24x8xf32>
    %243 = vector.extract_strided_slice %218 {offsets = [24, 56], sizes = [24, 8], strides = [1, 1]} : vector<48x96xf32> to vector<24x8xf32>
    %244 = vector.shape_cast %236 : vector<24x8xf32> to vector<1x24x8xf32>
    %245 = vector.shape_cast %237 : vector<24x8xf32> to vector<1x24x8xf32>
    %246 = vector.shape_cast %238 : vector<24x8xf32> to vector<1x24x8xf32>
    %247 = vector.shape_cast %239 : vector<24x8xf32> to vector<1x24x8xf32>
    %248 = vector.shape_cast %240 : vector<24x8xf32> to vector<1x24x8xf32>
    %249 = vector.shape_cast %241 : vector<24x8xf32> to vector<1x24x8xf32>
    %250 = vector.shape_cast %242 : vector<24x8xf32> to vector<1x24x8xf32>
    %251 = vector.shape_cast %243 : vector<24x8xf32> to vector<1x24x8xf32>
    %252 = tpu.concatenate %244, %245, %246, %247, %248, %249, %250, %251 in 0 : vector<1x24x8xf32>, vector<1x24x8xf32>, vector<1x24x8xf32>, vector<1x24x8xf32>, vector<1x24x8xf32>, vector<1x24x8xf32>, vector<1x24x8xf32>, vector<1x24x8xf32> -> vector<8x24x8xf32>
    %253 = vector.extract_strided_slice %218 {offsets = [0, 64], sizes = [24, 8], strides = [1, 1]} : vector<48x96xf32> to vector<24x8xf32>
    %254 = vector.extract_strided_slice %218 {offsets = [0, 72], sizes = [24, 8], strides = [1, 1]} : vector<48x96xf32> to vector<24x8xf32>
    %255 = vector.extract_strided_slice %218 {offsets = [0, 80], sizes = [24, 8], strides = [1, 1]} : vector<48x96xf32> to vector<24x8xf32>
    %256 = vector.extract_strided_slice %218 {offsets = [0, 88], sizes = [24, 8], strides = [1, 1]} : vector<48x96xf32> to vector<24x8xf32>
    %257 = vector.extract_strided_slice %218 {offsets = [24, 64], sizes = [24, 8], strides = [1, 1]} : vector<48x96xf32> to vector<24x8xf32>
    %258 = vector.extract_strided_slice %218 {offsets = [24, 72], sizes = [24, 8], strides = [1, 1]} : vector<48x96xf32> to vector<24x8xf32>
    %259 = vector.extract_strided_slice %218 {offsets = [24, 80], sizes = [24, 8], strides = [1, 1]} : vector<48x96xf32> to vector<24x8xf32>
    %260 = vector.extract_strided_slice %218 {offsets = [24, 88], sizes = [24, 8], strides = [1, 1]} : vector<48x96xf32> to vector<24x8xf32>
    %261 = vector.shape_cast %253 : vector<24x8xf32> to vector<1x24x8xf32>
    %262 = vector.shape_cast %254 : vector<24x8xf32> to vector<1x24x8xf32>
    %263 = vector.shape_cast %255 : vector<24x8xf32> to vector<1x24x8xf32>
    %264 = vector.shape_cast %256 : vector<24x8xf32> to vector<1x24x8xf32>
    %265 = vector.shape_cast %257 : vector<24x8xf32> to vector<1x24x8xf32>
    %266 = vector.shape_cast %258 : vector<24x8xf32> to vector<1x24x8xf32>
    %267 = vector.shape_cast %259 : vector<24x8xf32> to vector<1x24x8xf32>
    %268 = vector.shape_cast %260 : vector<24x8xf32> to vector<1x24x8xf32>
    %269 = tpu.concatenate %261, %262, %263, %264, %265, %266, %267, %268 in 0 : vector<1x24x8xf32>, vector<1x24x8xf32>, vector<1x24x8xf32>, vector<1x24x8xf32>, vector<1x24x8xf32>, vector<1x24x8xf32>, vector<1x24x8xf32>, vector<1x24x8xf32> -> vector<8x24x8xf32>
    %270 = arith.truncf %235 : vector<8x24x8xf32> to vector<8x24x8xbf16>
    %271 = arith.truncf %252 : vector<8x24x8xf32> to vector<8x24x8xbf16>
    "tpu.trace_start"() <{level = 10 : i32, message = "nqd,nkd->nqk"}> : () -> ()
    %cst_53 = arith.constant dense<0.000000e+00> : vector<8x24x24xf32>
    %272 = tpu.matmul %270, %271, %cst_53 {dimension_numbers = #tpu.dot_dimension_numbers<[2], [2], [1], [1], [0, 0, 0, 1, 1, 1], [0], [0]>} : vector<8x24x8xbf16>, vector<8x24x8xbf16>, vector<8x24x24xf32> -> vector<8x24x24xf32>
    "tpu.trace_stop"() : () -> ()
    %cst_54 = arith.constant 0.353553385 : f32
    %273 = vector.broadcast %cst_54 : f32 to vector<8x24x24xf32>
    %274 = arith.mulf %272, %273 : vector<8x24x24xf32>
    %275 = vector.broadcast %11 : vector<1x24x24xf32> to vector<8x24x24xf32>
    %276 = arith.addf %274, %275 : vector<8x24x24xf32>
    %cst_55 = arith.constant dense<0xFF800000> : vector<8x24xf32>
    %277 = vector.multi_reduction <maximumf>, %276, %cst_55 [2] : vector<8x24x24xf32> to vector<8x24xf32>
    %278 = vector.shape_cast %277 : vector<8x24xf32> to vector<8x24x1xf32>
    %279 = vector.broadcast %278 : vector<8x24x1xf32> to vector<8x24x24xf32>
    %280 = arith.subf %276, %279 : vector<8x24x24xf32>
    %281 = math.exp %280 : vector<8x24x24xf32>
    %cst_56 = arith.constant dense<0.000000e+00> : vector<8x24xf32>
    %282 = vector.multi_reduction <add>, %281, %cst_56 [2] : vector<8x24x24xf32> to vector<8x24xf32>
    %283 = vector.shape_cast %282 : vector<8x24xf32> to vector<8x24x1xf32>
    %284 = tpu.reciprocal %283 {approx = true} : vector<8x24x1xf32> -> vector<8x24x1xf32>
    %285 = vector.broadcast %284 : vector<8x24x1xf32> to vector<8x24x24xf32>
    %286 = arith.mulf %281, %285 : vector<8x24x24xf32>
    %287 = arith.truncf %286 : vector<8x24x24xf32> to vector<8x24x24xbf16>
    %288 = arith.truncf %269 : vector<8x24x8xf32> to vector<8x24x8xbf16>
    "tpu.trace_start"() <{level = 10 : i32, message = "nqk,nkd->nqd"}> : () -> ()
    %cst_57 = arith.constant dense<0.000000e+00> : vector<8x24x8xf32>
    %289 = tpu.matmul %287, %288, %cst_57 {dimension_numbers = #tpu.dot_dimension_numbers<[2], [1], [1], [2], [0, 0, 0, 1, 1, 2], [0], [0]>} : vector<8x24x24xbf16>, vector<8x24x8xbf16>, vector<8x24x8xf32> -> vector<8x24x8xf32>
    "tpu.trace_stop"() : () -> ()
    %290 = vector.extract_strided_slice %289 {offsets = [0, 0, 0], sizes = [1, 24, 8], strides = [1, 1, 1]} : vector<8x24x8xf32> to vector<1x24x8xf32>
    %291 = vector.shape_cast %290 : vector<1x24x8xf32> to vector<24x8xf32>
    %292 = vector.extract_strided_slice %289 {offsets = [1, 0, 0], sizes = [1, 24, 8], strides = [1, 1, 1]} : vector<8x24x8xf32> to vector<1x24x8xf32>
    %293 = vector.shape_cast %292 : vector<1x24x8xf32> to vector<24x8xf32>
    %294 = vector.extract_strided_slice %289 {offsets = [2, 0, 0], sizes = [1, 24, 8], strides = [1, 1, 1]} : vector<8x24x8xf32> to vector<1x24x8xf32>
    %295 = vector.shape_cast %294 : vector<1x24x8xf32> to vector<24x8xf32>
    %296 = vector.extract_strided_slice %289 {offsets = [3, 0, 0], sizes = [1, 24, 8], strides = [1, 1, 1]} : vector<8x24x8xf32> to vector<1x24x8xf32>
    %297 = vector.shape_cast %296 : vector<1x24x8xf32> to vector<24x8xf32>
    %298 = tpu.concatenate %291, %293, %295, %297 in 1 : vector<24x8xf32>, vector<24x8xf32>, vector<24x8xf32>, vector<24x8xf32> -> vector<24x32xf32>
    %299 = vector.extract_strided_slice %289 {offsets = [4, 0, 0], sizes = [1, 24, 8], strides = [1, 1, 1]} : vector<8x24x8xf32> to vector<1x24x8xf32>
    %300 = vector.shape_cast %299 : vector<1x24x8xf32> to vector<24x8xf32>
    %301 = vector.extract_strided_slice %289 {offsets = [5, 0, 0], sizes = [1, 24, 8], strides = [1, 1, 1]} : vector<8x24x8xf32> to vector<1x24x8xf32>
    %302 = vector.shape_cast %301 : vector<1x24x8xf32> to vector<24x8xf32>
    %303 = vector.extract_strided_slice %289 {offsets = [6, 0, 0], sizes = [1, 24, 8], strides = [1, 1, 1]} : vector<8x24x8xf32> to vector<1x24x8xf32>
    %304 = vector.shape_cast %303 : vector<1x24x8xf32> to vector<24x8xf32>
    %305 = vector.extract_strided_slice %289 {offsets = [7, 0, 0], sizes = [1, 24, 8], strides = [1, 1, 1]} : vector<8x24x8xf32> to vector<1x24x8xf32>
    %306 = vector.shape_cast %305 : vector<1x24x8xf32> to vector<24x8xf32>
    %307 = tpu.concatenate %300, %302, %304, %306 in 1 : vector<24x8xf32>, vector<24x8xf32>, vector<24x8xf32>, vector<24x8xf32> -> vector<24x32xf32>
    %308 = tpu.concatenate %298, %307 in 0 : vector<24x32xf32>, vector<24x32xf32> -> vector<48x32xf32>
    %309 = arith.truncf %308 : vector<48x32xf32> to vector<48x32xbf16>
    %c240 = arith.constant 240 : index
    %c0_58 = arith.constant 0 : index
    %310 = vector.load %arg1[%c240, %c0_58] : memref<400x128xbf16, #tpu.memory_space<vmem>>, vector<32x32xbf16>
    %cst_59 = arith.constant dense<0.000000e+00> : vector<48x32xf32>
    %311 = tpu.matmul %309, %310, %cst_59 {dimension_numbers = #tpu.dot_dimension_numbers<[1], [0], [0], [1], [0, 0, 1, 1], [], []>} : vector<48x32xbf16>, vector<32x32xbf16>, vector<48x32xf32> -> vector<48x32xf32>
    %c59 = arith.constant 59 : index
    %c0_60 = arith.constant 0 : index
    %312 = vector.load %arg2[%c59, %c0_60] : memref<72x128xf32, #tpu.memory_space<vmem>>, vector<1x32xf32>
    %313 = vector.broadcast %312 : vector<1x32xf32> to vector<48x32xf32>
    %314 = arith.addf %311, %313 : vector<48x32xf32>
    %315 = arith.addf %188, %314 : vector<48x32xf32>
    %c60 = arith.constant 60 : index
    %c0_61 = arith.constant 0 : index
    %316 = vector.load %arg2[%c60, %c0_61] : memref<72x128xf32, #tpu.memory_space<vmem>>, vector<1x32xf32>
    %c61 = arith.constant 61 : index
    %c0_62 = arith.constant 0 : index
    %317 = vector.load %arg2[%c61, %c0_62] : memref<72x128xf32, #tpu.memory_space<vmem>>, vector<1x32xf32>
    %cst_63 = arith.constant dense<0.000000e+00> : vector<48xf32>
    %318 = vector.multi_reduction <add>, %315, %cst_63 [1] : vector<48x32xf32> to vector<48xf32>
    %319 = vector.shape_cast %318 : vector<48xf32> to vector<48x1xf32>
    %cst_64 = arith.constant 3.200000e+01 : f32
    %320 = vector.broadcast %cst_64 : f32 to vector<48x1xf32>
    %321 = arith.divf %319, %320 : vector<48x1xf32>
    %322 = vector.broadcast %321 : vector<48x1xf32> to vector<48x32xf32>
    %323 = arith.subf %315, %322 : vector<48x32xf32>
    %324 = arith.mulf %323, %323 : vector<48x32xf32>
    %cst_65 = arith.constant dense<0.000000e+00> : vector<48xf32>
    %325 = vector.multi_reduction <add>, %324, %cst_65 [1] : vector<48x32xf32> to vector<48xf32>
    %326 = vector.shape_cast %325 : vector<48xf32> to vector<48x1xf32>
    %cst_66 = arith.constant 3.200000e+01 : f32
    %327 = vector.broadcast %cst_66 : f32 to vector<48x1xf32>
    %328 = arith.divf %326, %327 : vector<48x1xf32>
    %329 = vector.broadcast %321 : vector<48x1xf32> to vector<48x32xf32>
    %330 = arith.subf %315, %329 : vector<48x32xf32>
    %cst_67 = arith.constant 9.99999974E-6 : f32
    %331 = vector.broadcast %cst_67 : f32 to vector<48x1xf32>
    %332 = arith.addf %328, %331 : vector<48x1xf32>
    %333 = math.rsqrt %332 : vector<48x1xf32>
    %334 = vector.broadcast %333 : vector<48x1xf32> to vector<48x32xf32>
    %335 = arith.mulf %330, %334 : vector<48x32xf32>
    %336 = vector.broadcast %316 : vector<1x32xf32> to vector<48x32xf32>
    %337 = arith.mulf %335, %336 : vector<48x32xf32>
    %338 = vector.broadcast %317 : vector<1x32xf32> to vector<48x32xf32>
    %339 = arith.addf %337, %338 : vector<48x32xf32>
    %340 = arith.truncf %339 : vector<48x32xf32> to vector<48x32xbf16>
    %c272 = arith.constant 272 : index
    %c0_68 = arith.constant 0 : index
    %341 = vector.load %arg1[%c272, %c0_68] : memref<400x128xbf16, #tpu.memory_space<vmem>>, vector<32x64xbf16>
    %cst_69 = arith.constant dense<0.000000e+00> : vector<48x64xf32>
    %342 = tpu.matmul %340, %341, %cst_69 {dimension_numbers = #tpu.dot_dimension_numbers<[1], [0], [0], [1], [0, 0, 1, 1], [], []>} : vector<48x32xbf16>, vector<32x64xbf16>, vector<48x64xf32> -> vector<48x64xf32>
    %c62 = arith.constant 62 : index
    %c0_70 = arith.constant 0 : index
    %343 = vector.load %arg2[%c62, %c0_70] : memref<72x128xf32, #tpu.memory_space<vmem>>, vector<1x64xf32>
    %344 = vector.broadcast %343 : vector<1x64xf32> to vector<48x64xf32>
    %345 = arith.addf %342, %344 : vector<48x64xf32>
    %346 = arith.mulf %345, %345 : vector<48x64xf32>
    %347 = arith.mulf %345, %346 : vector<48x64xf32>
    %cst_71 = arith.constant 4.471500e-02 : f32
    %348 = vector.broadcast %cst_71 : f32 to vector<48x64xf32>
    %349 = arith.mulf %348, %347 : vector<48x64xf32>
    %350 = arith.addf %345, %349 : vector<48x64xf32>
    %cst_72 = arith.constant 0.797884583 : f32
    %351 = vector.broadcast %cst_72 : f32 to vector<48x64xf32>
    %352 = arith.mulf %351, %350 : vector<48x64xf32>
    %353 = math.tanh %352 : vector<48x64xf32>
    %cst_73 = arith.constant 1.000000e+00 : f32
    %354 = vector.broadcast %cst_73 : f32 to vector<48x64xf32>
    %355 = arith.addf %354, %353 : vector<48x64xf32>
    %cst_74 = arith.constant 5.000000e-01 : f32
    %356 = vector.broadcast %cst_74 : f32 to vector<48x64xf32>
    %357 = arith.mulf %356, %355 : vector<48x64xf32>
    %358 = arith.mulf %345, %357 : vector<48x64xf32>
    %359 = arith.truncf %358 : vector<48x64xf32> to vector<48x64xbf16>
    %c304 = arith.constant 304 : index
    %c0_75 = arith.constant 0 : index
    %360 = vector.load %arg1[%c304, %c0_75] : memref<400x128xbf16, #tpu.memory_space<vmem>>, vector<64x32xbf16>
    %cst_76 = arith.constant dense<0.000000e+00> : vector<48x32xf32>
    %361 = tpu.matmul %359, %360, %cst_76 {dimension_numbers = #tpu.dot_dimension_numbers<[1], [0], [0], [1], [0, 0, 1, 1], [], []>} : vector<48x64xbf16>, vector<64x32xbf16>, vector<48x32xf32> -> vector<48x32xf32>
    %362 = arith.addf %315, %361 : vector<48x32xf32>
    %c63 = arith.constant 63 : index
    %c0_77 = arith.constant 0 : index
    %363 = vector.load %arg2[%c63, %c0_77] : memref<72x128xf32, #tpu.memory_space<vmem>>, vector<1x32xf32>
    %364 = vector.broadcast %363 : vector<1x32xf32> to vector<48x32xf32>
    %365 = arith.addf %362, %364 : vector<48x32xf32>
    %366 = vector.extract_strided_slice %365 {offsets = [0, 0], sizes = [1, 32], strides = [1, 1]} : vector<48x32xf32> to vector<1x32xf32>
    %367 = vector.extract_strided_slice %365 {offsets = [24, 0], sizes = [1, 32], strides = [1, 1]} : vector<48x32xf32> to vector<1x32xf32>
    %368 = tpu.concatenate %366, %367 in 0 : vector<1x32xf32>, vector<1x32xf32> -> vector<2x32xf32>
    %369 = arith.truncf %368 : vector<2x32xf32> to vector<2x32xbf16>
    %c368 = arith.constant 368 : index
    %c0_78 = arith.constant 0 : index
    %370 = vector.load %arg1[%c368, %c0_78] : memref<400x128xbf16, #tpu.memory_space<vmem>>, vector<32x128xbf16>
    %cst_79 = arith.constant dense<0.000000e+00> : vector<2x128xf32>
    %371 = tpu.matmul %369, %370, %cst_79 {dimension_numbers = #tpu.dot_dimension_numbers<[1], [0], [0], [1], [0, 0, 1, 1], [], []>} : vector<2x32xbf16>, vector<32x128xbf16>, vector<2x128xf32> -> vector<2x128xf32>
    %c64 = arith.constant 64 : index
    %c0_80 = arith.constant 0 : index
    %372 = vector.load %arg2[%c64, %c0_80] : memref<72x128xf32, #tpu.memory_space<vmem>>, vector<1x128xf32>
    %373 = vector.broadcast %372 : vector<1x128xf32> to vector<2x128xf32>
    %374 = arith.addf %371, %373 : vector<2x128xf32>
    %cst_81 = arith.constant dense<0xFF800000> : vector<2xf32>
    %375 = vector.multi_reduction <maximumf>, %374, %cst_81 [1] : vector<2x128xf32> to vector<2xf32>
    %376 = vector.shape_cast %375 : vector<2xf32> to vector<2x1xf32>
    %377 = vector.broadcast %376 : vector<2x1xf32> to vector<2x128xf32>
    %378 = arith.subf %374, %377 : vector<2x128xf32>
    %379 = math.exp %378 : vector<2x128xf32>
    %cst_82 = arith.constant dense<0.000000e+00> : vector<2xf32>
    %380 = vector.multi_reduction <add>, %379, %cst_82 [1] : vector<2x128xf32> to vector<2xf32>
    %381 = vector.shape_cast %380 : vector<2xf32> to vector<2x1xf32>
    %382 = vector.broadcast %381 : vector<2x1xf32> to vector<2x128xf32>
    %383 = arith.divf %379, %382 : vector<2x128xf32>
    %c0_83 = arith.constant 0 : index
    %c0_84 = arith.constant 0 : index
    %384 = vector.load %arg3[%c0_83, %c0_84] : memref<2x128xf32, #tpu.memory_space<vmem>>, vector<2x128xf32>
    tpu.vector_store %arg3[%c0_83, %c0_84], %383 {strides = array<i32>} : memref<2x128xf32, #tpu.memory_space<vmem>>, vector<2x128xf32>,
    return
  }
}

</mosaic_0001>

<llo_original>
// kernel: vit_forward.1
$region0: #{vit_forward.1}
  #allocation0 [shape = 'u32[]', space=smem, size = 0x4, offset = 0x4, fixed_abs, tag = 'smem constant byte address 0x4 - core index']
  #allocation1 [shape = 'u32[144,128]{1,0:T(1,128)}', space=vmem, size = 0x12000, scoped, tag = 'internal scratch']
  %s0 = inlined_call_operand.vmem [shape: f32[48,48], index: 0, kind: input, shape index: {}]
  %s1 = inlined_call_operand.hbm [shape: bf16[400,128], index: 1, kind: input, shape index: {}]
  %s2 = inlined_call_operand.vmem [shape: f32[72,128], index: 2, kind: input, shape index: {}]
  %s3 = inlined_call_operand.hbm [shape: f32[2,128], index: 3, kind: output, shape index: {}]
  %s4 = sld [smem:[#allocation0]]
  $region26: #{vit_forward.1} parent=0
    _
  %s6 = ssub.s32 1, %s4
  %s7 = scalar_select 0, %s6, %s4
  $region1: #{vit_forward.1} parent=0
    #allocation2 [shape = 'u8[102400]{0}', space=vmem, size = 0x19000, scoped, tag = 'input window, operand 1, single buffered']
    #allocation3 [shape = 's32[1]{0}', space=sflag, size = 0x4, scoped, tag = 'scoped memory for vit_forward.1']
    #allocation4 [shape = 's32[1]{0}', space=sflag, size = 0x4, scoped, tag = 'scoped memory for vit_forward.1']
    #allocation5 [shape = 'u8[1024]{0}', space=vmem, size = 0x400, scoped, tag = 'output window, operand 0, single buffered']
    %8 = vsyncpa [#allocation3], 0
    %9 = vsyncpa [#allocation4], 0
    // Predicated region
    $region2: #{vit_forward.1} parent=1 // pred_check
      _
    $region3: #{vit_forward.1} parent=1 // pred_check_branch
      %11 = sbr.rel (0) target = $region5
    $region4: #{vit_forward.1} parent=1 // pred_region
      _
    $region5: #{vit_forward.1} parent=1 // pred_fallthru
      _
    // Predicated region
    $region6: #{vit_forward.1} parent=1 // pred_check
      _
    $region7: #{vit_forward.1} parent=1 // pred_check_branch
      %13 = sbr.rel (0) target = $region9
    $region8: #{vit_forward.1} parent=1 // pred_region
      %s15 = ssub.s32 3200, 3200
      %16 = vsyncadd [#allocation3], %s15
      %s17 = sshll.u32 [#allocation2], 4
      %s18 = int_to_ptr.vmem [resolvable:$true] %s17
      %23 = dma.hbm_to_vmem [thread:$0]  %s1, 3200, %s18, [#allocation3], 64, 64, 4
    $region9: #{vit_forward.1} parent=1 // pred_fallthru
      _
    // Predicated region
    $region10: #{vit_forward.1} parent=1 // pred_check
      _
    $region11: #{vit_forward.1} parent=1 // pred_check_branch
      %25 = sbr.rel (0) target = $region13
    $region12: #{vit_forward.1} parent=1 // pred_region
      _
    $region13: #{vit_forward.1} parent=1 // pred_fallthru
      _
    // Predicated region
    $region14: #{vit_forward.1} parent=1 // pred_check
      _
    $region15: #{vit_forward.1} parent=1 // pred_check_branch
      %27 = sbr.rel (0) target = $region17
    $region16: #{vit_forward.1} parent=1 // pred_region
      %28 = dma.done [#allocation3], 3200
    $region17: #{vit_forward.1} parent=1 // pred_fallthru
      _
    %v30 = vld [vmem:[%s0] sm:$0xff]
    %v31 = vld [vmem:[%s0 + $0x8] sm:$0xff]
    %v32 = vld [vmem:[%s0 + $0x10] sm:$0xff]
    %v33 = vld [vmem:[%s0 + $0x18] sm:$0xff]
    %v34 = vld [vmem:[%s0 + $0x20] sm:$0xff]
    %v35 = vld [vmem:[%s0 + $0x28] sm:$0xff]
    %v36 = vpack.c.bf16 %v31, %v30
    %v37 = vpack.c.bf16 %v33, %v32
    %v38 = vpack.c.bf16 %v35, %v34
    %v39 = vld [vmem:[#allocation2] sm:$0xf]
    %v40 = vld [vmem:[#allocation2 + $0x4] sm:$0xf]
    %v41 = vld [vmem:[#allocation2 + $0x8] sm:$0xf]
    %v42 = vld [vmem:[#allocation2 + $0xc] sm:$0xf]
    %v43 = vld [vmem:[#allocation2 + $0x10] sm:$0xf]
    %v44 = vld [vmem:[#allocation2 + $0x14] sm:$0xf]
    %v45 = vld [vmem:[%s2] sm:$0xff]
    %v46 = vld [vmem:[%s2 + $0x8] sm:$0xff]
    %v47 = vld [vmem:[%s2 + $0x10] sm:$0xff]
    %v48 = vld [vmem:[%s2 + $0x18] sm:$0xff]
    %v49 = vld [vmem:[%s2 + $0x20] sm:$0xff]
    %v50 = vld [vmem:[%s2 + $0x28] sm:$0xff]
    %v57 = vunpack.c.l.b16 %v39
    %v58 = vunpack.c.l.b16 %v40
    %v59 = vunpack.c.l.b16 %v41
    %v60 = vunpack.c.l.b16 %v42
    %v61 = vunpack.c.l.b16 %v43
    %v62 = vunpack.c.l.b16 %v44
    %v63 = vpack.c.b16 %v58, %v57
    %v64 = vpack.c.b16 %v60, %v59
    %v65 = vpack.c.b16 %v62, %v61
    %vm69 = vcmask 392192
    %v71 = vsel %vm69, %v36, 0
    %v74 = vsel %vm69, %v37, 0
    %v77 = vsel %vm69, %v38, 0
    %79 = vmatprep.subr.bf16.mxu0 0
    %80 = vmatpush1.bf16.msra.mxu0 0
    %81 = vmatprep.subr.bf16.mxu0 0
    %82 = vmatpush1.bf16.msra.mxu0 0
    %83 = vmatprep.subr.bf16.mxu0 0
    %84 = vmatpush1.bf16.msra.mxu0 0
    %85 = vmatprep.subr.bf16.mxu0 0
    %86 = vmatpush1.bf16.msra.mxu0 0
    %87 = vmatprep.subr.bf16.mxu0 0
    %88 = vmatpush1.bf16.msra.mxu0 0
    %89 = vmatprep.subr.bf16.mxu0 0
    %90 = vmatpush1.bf16.msra.mxu0 %v65
    %91 = vmatprep.subr.bf16.mxu0 0
    %92 = vmatpush1.bf16.msra.mxu0 %v64
    %93 = vmatprep.subr.bf16.mxu0 0
    %94 = vmatpush1.bf16.msra.mxu0 %v63
    %95 = vmatprep.subr.bf16.mxu0 0
    %96 = vmatpush2.bf16.msra.mxu0 0
    %97 = vmatprep.subr.bf16.mxu0 0
    %98 = vmatpush2.bf16.msra.mxu0 0
    %99 = vmatprep.subr.bf16.mxu0 0
    %100 = vmatpush2.bf16.msra.mxu0 0
    %101 = vmatprep.subr.bf16.mxu0 0
    %102 = vmatpush2.bf16.msra.mxu0 0
    %103 = vmatprep.subr.bf16.mxu0 0
    %104 = vmatpush2.bf16.msra.mxu0 0
    %105 = vmatprep.subr.bf16.mxu0 0
    %106 = vmatpush2.bf16.msra.mxu0 0
    %107 = vmatprep.subr.bf16.mxu0 0
    %108 = vmatpush2.bf16.msra.mxu0 0
    %109 = vmatprep.subr.bf16.mxu0 0
    %110 = vmatpush2.bf16.msra.mxu0 0
    %111 = vmatprep.mubr.bf16.mxu0 0
    %112 = vmatmul.mubr.bf16.gmra.mxu0 %v71
    %v113 = vpop.f32.mrf.mxu0
    %v114 = vadd.f32 %v45, %v113
    %v115 = vpop.f32.mrf.mxu0
    %v116 = vpop.f32.mrf.mxu0
    %v117 = vadd.f32 %v46, %v116
    %v118 = vpop.f32.mrf.mxu0
    %119 = vmatprep.mubr.bf16.mxu0 0
    %120 = vmatmul.mubr.bf16.gmra.mxu0 %v74
    %v121 = vpop.f32.mrf.mxu0
    %v122 = vadd.f32 %v47, %v121
    %v123 = vpop.f32.mrf.mxu0
    %v124 = vpop.f32.mrf.mxu0
    %v125 = vadd.f32 %v48, %v124
    %v126 = vpop.f32.mrf.mxu0
    %127 = vmatprep.mubr.bf16.mxu0 0
    %128 = vmatmul.mubr.bf16.gmra.mxu0 %v77
    %v129 = vpop.f32.mrf.mxu0
    %v130 = vadd.f32 %v49, %v129
    %v131 = vpop.f32.mrf.mxu0
    %v132 = vpop.f32.mrf.mxu0
    %v133 = vadd.f32 %v50, %v132
    %v134 = vpop.f32.mrf.mxu0
    %135 = vdwg.mxu0
    %v136 = vlaneseq
    %v137 = vand.u32 %v136, 127
    %vm138 = vcmp.lt.s32.totalorder %v137, 17
    %v139 = vsel %vm138, 0.0, -1e+30
    %v140 = vld [vmem:[%s2 + $0x30] sm:$0x1]
    %v141 = vld [vmem:[%s2 + $0x31] sm:$0x1]
    %vm142 = vcmask 261120
    %v143 = vsel %vm142, %v114, 0.0
    %144 = vadd.xlane.f32.xlu0 %v143
    %v145 = vpop.xlane.xlu0 %144
    %v146 = vsel %vm142, %v117, 0.0
    %147 = vadd.xlane.f32.xlu0 %v146
    %v148 = vpop.xlane.xlu0 %147
    %v149 = vsel %vm142, %v122, 0.0
    %150 = vadd.xlane.f32.xlu0 %v149
    %v151 = vpop.xlane.xlu0 %150
    %v152 = vsel %vm142, %v125, 0.0
    %153 = vadd.xlane.f32.xlu0 %v152
    %v154 = vpop.xlane.xlu0 %153
    %v155 = vsel %vm142, %v130, 0.0
    %156 = vadd.xlane.f32.xlu0 %v155
    %v157 = vpop.xlane.xlu0 %156
    %v158 = vsel %vm142, %v133, 0.0
    %159 = vadd.xlane.f32.xlu0 %v158
    %v160 = vpop.xlane.xlu0 %159
    %v161 = vrcp.pop 32.0
    %v162 = vmul.f32 %v145, %v161
    %v163 = vmul.f32 %v148, %v161
    %v164 = vmul.f32 %v151, %v161
    %v165 = vmul.f32 %v154, %v161
    %v166 = vmul.f32 %v157, %v161
    %v167 = vmul.f32 %v160, %v161
    %v168 = vsub.f32 %v114, %v162
    %v169 = vsub.f32 %v117, %v163
    %v170 = vsub.f32 %v122, %v164
    %v171 = vsub.f32 %v125, %v165
    %v172 = vsub.f32 %v130, %v166
    %v173 = vsub.f32 %v133, %v167
    %v174 = vmul.f32 %v168, %v168
    %v175 = vmul.f32 %v169, %v169
    %v176 = vmul.f32 %v170, %v170
    %v177 = vmul.f32 %v171, %v171
    %v178 = vmul.f32 %v172, %v172
    %v179 = vmul.f32 %v173, %v173
    %v180 = vsel %vm142, %v174, 0.0
    %181 = vadd.xlane.f32.xlu0 %v180
    %v182 = vpop.xlane.xlu0 %181
    %v183 = vsel %vm142, %v175, 0.0
    %184 = vadd.xlane.f32.xlu0 %v183
    %v185 = vpop.xlane.xlu0 %184
    %v186 = vsel %vm142, %v176, 0.0
    %187 = vadd.xlane.f32.xlu0 %v186
    %v188 = vpop.xlane.xlu0 %187
    %v189 = vsel %vm142, %v177, 0.0
    %190 = vadd.xlane.f32.xlu0 %v189
    %v191 = vpop.xlane.xlu0 %190
    %v192 = vsel %vm142, %v178, 0.0
    %193 = vadd.xlane.f32.xlu0 %v192
    %v194 = vpop.xlane.xlu0 %193
    %v195 = vsel %vm142, %v179, 0.0
    %196 = vadd.xlane.f32.xlu0 %v195
    %v197 = vpop.xlane.xlu0 %196
    %v198 = vmul.f32 %v182, %v161
    %v199 = vmul.f32 %v185, %v161
    %v200 = vmul.f32 %v188, %v161
    %v201 = vmul.f32 %v191, %v161
    %v202 = vmul.f32 %v194, %v161
    %v203 = vmul.f32 %v197, %v161
    %v204 = vadd.f32 %v198, 1e-05
    %v205 = vadd.f32 %v199, 1e-05
    %v206 = vadd.f32 %v200, 1e-05
    %v207 = vadd.f32 %v201, 1e-05
    %v208 = vadd.f32 %v202, 1e-05
    %v209 = vadd.f32 %v203, 1e-05
    %v210 = vrsqrt.pop %v204
    %v211 = vrsqrt.pop %v205
    %v212 = vrsqrt.pop %v206
    %v213 = vrsqrt.pop %v207
    %v214 = vrsqrt.pop %v208
    %v215 = vrsqrt.pop %v209
    %v216 = vmul.f32 %v168, %v210
    %v217 = vmul.f32 %v169, %v211
    %v218 = vmul.f32 %v170, %v212
    %v219 = vmul.f32 %v171, %v213
    %v220 = vmul.f32 %v172, %v214
    %v221 = vmul.f32 %v173, %v215
    %v222 = vlaneseq
    %v223 = vshrl.u32 %v222, 7
    %v224 = vsub.s32 0, %v223
    %v225 = vrot.slane %v140, %v224
    %v226 = vmul.f32 %v216, %v225
    %v227 = vmul.f32 %v217, %v225
    %v228 = vmul.f32 %v218, %v225
    %v229 = vmul.f32 %v219, %v225
    %v230 = vmul.f32 %v220, %v225
    %v231 = vmul.f32 %v221, %v225
    %v232 = vlaneseq
    %v233 = vshrl.u32 %v232, 7
    %v234 = vsub.s32 0, %v233
    %v235 = vrot.slane %v141, %v234
    %v236 = vadd.f32 %v226, %v235
    %v237 = vadd.f32 %v227, %v235
    %v238 = vadd.f32 %v228, %v235
    %v239 = vadd.f32 %v229, %v235
    %v240 = vadd.f32 %v230, %v235
    %v241 = vadd.f32 %v231, %v235
    %v242 = vpack.c.bf16 %v237, %v236
    %v243 = vpack.c.bf16 %v239, %v238
    %v244 = vpack.c.bf16 %v241, %v240
    %v245 = vld [vmem:[#allocation2 + $0x18] sm:$0xf]
    %v246 = vld [vmem:[#allocation2 + $0x1c] sm:$0xf]
    %v247 = vld [vmem:[#allocation2 + $0x20] sm:$0xf]
    %v248 = vld [vmem:[#allocation2 + $0x24] sm:$0xf]
    %v249 = vld [vmem:[%s2 + $0x32] sm:$0x1]
    %v250 = vlaneseq
    %v251 = vshrl.u32 %v250, 7
    %v252 = vsub.s32 0, %v251
    %v253 = vrot.slane %v249, %v252
    %v258 = vunpack.c.l.b16 %v245
    %v259 = vunpack.c.l.b16 %v246
    %v260 = vunpack.c.l.b16 %v247
    %v261 = vunpack.c.l.b16 %v248
    %v262 = vpack.c.b16 %v259, %v258
    %v263 = vpack.c.b16 %v261, %v260
    %v267 = vsel %vm142, %v242, 0
    %v270 = vsel %vm142, %v243, 0
    %v273 = vsel %vm142, %v244, 0
    %275 = vmatprep.subr.bf16.mxu0 0
    %276 = vmatpush1.bf16.msra.mxu0 0
    %277 = vmatprep.subr.bf16.mxu0 0
    %278 = vmatpush1.bf16.msra.mxu0 0
    %279 = vmatprep.subr.bf16.mxu0 0
    %280 = vmatpush1.bf16.msra.mxu0 0
    %281 = vmatprep.subr.bf16.mxu0 0
    %282 = vmatpush1.bf16.msra.mxu0 0
    %283 = vmatprep.subr.bf16.mxu0 0
    %284 = vmatpush1.bf16.msra.mxu0 0
    %285 = vmatprep.subr.bf16.mxu0 0
    %286 = vmatpush1.bf16.msra.mxu0 0
    %287 = vmatprep.subr.bf16.mxu0 0
    %288 = vmatpush1.bf16.msra.mxu0 %v263
    %289 = vmatprep.subr.bf16.mxu0 0
    %290 = vmatpush1.bf16.msra.mxu0 %v262
    %291 = vmatprep.subr.bf16.mxu0 0
    %292 = vmatpush2.bf16.msra.mxu0 0
    %293 = vmatprep.subr.bf16.mxu0 0
    %294 = vmatpush2.bf16.msra.mxu0 0
    %295 = vmatprep.subr.bf16.mxu0 0
    %296 = vmatpush2.bf16.msra.mxu0 0
    %297 = vmatprep.subr.bf16.mxu0 0
    %298 = vmatpush2.bf16.msra.mxu0 0
    %299 = vmatprep.subr.bf16.mxu0 0
    %300 = vmatpush2.bf16.msra.mxu0 0
    %301 = vmatprep.subr.bf16.mxu0 0
    %302 = vmatpush2.bf16.msra.mxu0 0
    %303 = vmatprep.subr.bf16.mxu0 0
    %304 = vmatpush2.bf16.msra.mxu0 0
    %305 = vmatprep.subr.bf16.mxu0 0
    %306 = vmatpush2.bf16.msra.mxu0 0
    %307 = vmatprep.mubr.bf16.mxu0 0
    %308 = vmatmul.mubr.bf16.gmra.mxu0 %v267
    %v309 = vpop.f32.mrf.mxu0
    %v310 = vadd.f32 %v253, %v309
    %v311 = vpop.f32.mrf.mxu0
    %v312 = vpop.f32.mrf.mxu0
    %v313 = vadd.f32 %v253, %v312
    %v314 = vpop.f32.mrf.mxu0
    %315 = vmatprep.mubr.bf16.mxu0 0
    %316 = vmatmul.mubr.bf16.gmra.mxu0 %v270
    %v317 = vpop.f32.mrf.mxu0
    %v318 = vadd.f32 %v253, %v317
    %v319 = vpop.f32.mrf.mxu0
    %v320 = vpop.f32.mrf.mxu0
    %v321 = vadd.f32 %v253, %v320
    %v322 = vpop.f32.mrf.mxu0
    %323 = vmatprep.mubr.bf16.mxu0 0
    %324 = vmatmul.mubr.bf16.gmra.mxu0 %v273
    %v325 = vpop.f32.mrf.mxu0
    %v326 = vadd.f32 %v253, %v325
    %v327 = vpop.f32.mrf.mxu0
    %v328 = vpop.f32.mrf.mxu0
    %v329 = vadd.f32 %v253, %v328
    %v330 = vpop.f32.mrf.mxu0
    %331 = vdwg.mxu0
    %335 = vrot.lane.b32.xlu0 %v310, 120
    %v336 = vpop.permute.xlu0 %335
    %337 = vrot.lane.b32.xlu0 %v313, 120
    %v338 = vpop.permute.xlu0 %337
    %339 = vrot.lane.b32.xlu0 %v318, 120
    %v340 = vpop.permute.xlu0 %339
    %344 = vrot.lane.b32.xlu0 %v310, 112
    %v345 = vpop.permute.xlu0 %344
    %346 = vrot.lane.b32.xlu0 %v313, 112
    %v347 = vpop.permute.xlu0 %346
    %348 = vrot.lane.b32.xlu0 %v318, 112
    %v349 = vpop.permute.xlu0 %348
    %353 = vrot.lane.b32.xlu0 %v310, 104
    %v354 = vpop.permute.xlu0 %353
    %355 = vrot.lane.b32.xlu0 %v313, 104
    %v356 = vpop.permute.xlu0 %355
    %357 = vrot.lane.b32.xlu0 %v318, 104
    %v358 = vpop.permute.xlu0 %357
    %365 = vrot.lane.b32.xlu0 %v321, 120
    %v366 = vpop.permute.xlu0 %365
    %367 = vrot.lane.b32.xlu0 %v326, 120
    %v368 = vpop.permute.xlu0 %367
    %369 = vrot.lane.b32.xlu0 %v329, 120
    %v370 = vpop.permute.xlu0 %369
    %374 = vrot.lane.b32.xlu0 %v321, 112
    %v375 = vpop.permute.xlu0 %374
    %376 = vrot.lane.b32.xlu0 %v326, 112
    %v377 = vpop.permute.xlu0 %376
    %378 = vrot.lane.b32.xlu0 %v329, 112
    %v379 = vpop.permute.xlu0 %378
    %383 = vrot.lane.b32.xlu0 %v321, 104
    %v384 = vpop.permute.xlu0 %383
    %385 = vrot.lane.b32.xlu0 %v326, 104
    %v386 = vpop.permute.xlu0 %385
    %387 = vrot.lane.b32.xlu0 %v329, 104
    %v388 = vpop.permute.xlu0 %387
    %v392 = vpack.c.bf16 %v313, %v310
    %v393 = vpack.c.bf16 %v318, %v318
    %v394 = vpack.c.bf16 %v338, %v336
    %v395 = vpack.c.bf16 %v340, %v340
    %v396 = vpack.c.bf16 %v347, %v345
    %v397 = vpack.c.bf16 %v349, %v349
    %v398 = vpack.c.bf16 %v356, %v354
    %v399 = vpack.c.bf16 %v358, %v358
    %v400 = vpack.c.bf16 %v326, %v321
    %v401 = vpack.c.bf16 %v329, %v329
    %v402 = vpack.c.bf16 %v368, %v366
    %v403 = vpack.c.bf16 %v370, %v370
    %v404 = vpack.c.bf16 %v377, %v375
    %v405 = vpack.c.bf16 %v379, %v379
    %v406 = vpack.c.bf16 %v386, %v384
    %v407 = vpack.c.bf16 %v388, %v388
    %410 = vrot.lane.b32.xlu0 %v392, 96
    %v411 = vpop.permute.xlu0 %410
    %412 = vrot.lane.b32.xlu0 %v393, 96
    %v413 = vpop.permute.xlu0 %412
    %vm414 = vcmask 64512
    %v416 = vsel %vm414, %v392, 0
    %v419 = vsel %vm414, %v393, 0
    %v422 = vsel %vm414, %v411, 0
    %v425 = vsel %vm414, %v413, 0
    %427 = vmatprep.subr.bf16.mxu0 0
    %428 = vmatpush1.bf16.xpose.msra.mxu0 0
    %429 = vmatprep.subr.bf16.mxu0 0
    %430 = vmatpush1.bf16.xpose.msra.mxu0 0
    %431 = vmatprep.subr.bf16.mxu0 0
    %432 = vmatpush1.bf16.xpose.msra.mxu0 0
    %433 = vmatprep.subr.bf16.mxu0 0
    %434 = vmatpush1.bf16.xpose.msra.mxu0 0
    %435 = vmatprep.subr.bf16.mxu0 0
    %436 = vmatpush1.bf16.xpose.msra.mxu0 0
    %437 = vmatprep.subr.bf16.mxu0 0
    %438 = vmatpush1.bf16.xpose.msra.mxu0 0
    %439 = vmatprep.subr.bf16.mxu0 0
    %440 = vmatpush1.bf16.xpose.msra.mxu0 %v425
    %441 = vmatprep.subr.bf16.mxu0 0
    %442 = vmatpush1.bf16.xpose.msra.mxu0 %v422
    %443 = vmatprep.subr.bf16.mxu0 0
    %444 = vmatpush2.bf16.xpose.msra.mxu0 0
    %445 = vmatprep.subr.bf16.mxu0 0
    %446 = vmatpush2.bf16.xpose.msra.mxu0 0
    %447 = vmatprep.subr.bf16.mxu0 0
    %448 = vmatpush2.bf16.xpose.msra.mxu0 0
    %449 = vmatprep.subr.bf16.mxu0 0
    %450 = vmatpush2.bf16.xpose.msra.mxu0 0
    %451 = vmatprep.subr.bf16.mxu0 0
    %452 = vmatpush2.bf16.xpose.msra.mxu0 0
    %453 = vmatprep.subr.bf16.mxu0 0
    %454 = vmatpush2.bf16.xpose.msra.mxu0 0
    %455 = vmatprep.subr.bf16.mxu0 0
    %456 = vmatpush2.bf16.xpose.msra.mxu0 0
    %457 = vmatprep.subr.bf16.mxu0 0
    %458 = vmatpush2.bf16.xpose.msra.mxu0 0
    %459 = vmatprep.mubr.bf16.mxu0 0
    %460 = vmatmul.mubr.bf16.gmra.mxu0 %v416
    %v461 = vpop.f32.mrf.mxu0
    %v462 = vadd.f32 0.0, %v461
    %v463 = vpop.f32.mrf.mxu0
    %v464 = vpop.f32.mrf.mxu0
    %v465 = vadd.f32 0.0, %v464
    %v466 = vpop.f32.mrf.mxu0
    %467 = vmatprep.mubr.bf16.mxu0 0
    %468 = vmatmul.mubr.bf16.gmra.mxu0 %v419
    %v469 = vpop.f32.mrf.mxu0
    %v470 = vadd.f32 0.0, %v469
    %v471 = vpop.f32.mrf.mxu0
    %v472 = vpop.f32.mrf.mxu0
    %v473 = vpop.f32.mrf.mxu0
    %474 = vdwg.mxu0
    %477 = vrot.lane.b32.xlu0 %v394, 96
    %v478 = vpop.permute.xlu0 %477
    %479 = vrot.lane.b32.xlu0 %v395, 96
    %v480 = vpop.permute.xlu0 %479
    %v482 = vsel %vm414, %v394, 0
    %v485 = vsel %vm414, %v395, 0
    %v488 = vsel %vm414, %v478, 0
    %v491 = vsel %vm414, %v480, 0
    %493 = vmatprep.subr.bf16.mxu0 0
    %494 = vmatpush1.bf16.xpose.msra.mxu0 0
    %495 = vmatprep.subr.bf16.mxu0 0
    %496 = vmatpush1.bf16.xpose.msra.mxu0 0
    %497 = vmatprep.subr.bf16.mxu0 0
    %498 = vmatpush1.bf16.xpose.msra.mxu0 0
    %499 = vmatprep.subr.bf16.mxu0 0
    %500 = vmatpush1.bf16.xpose.msra.mxu0 0
    %501 = vmatprep.subr.bf16.mxu0 0
    %502 = vmatpush1.bf16.xpose.msra.mxu0 0
    %503 = vmatprep.subr.bf16.mxu0 0
    %504 = vmatpush1.bf16.xpose.msra.mxu0 0
    %505 = vmatprep.subr.bf16.mxu0 0
    %506 = vmatpush1.bf16.xpose.msra.mxu0 %v491
    %507 = vmatprep.subr.bf16.mxu0 0
    %508 = vmatpush1.bf16.xpose.msra.mxu0 %v488
    %509 = vmatprep.subr.bf16.mxu0 0
    %510 = vmatpush2.bf16.xpose.msra.mxu0 0
    %511 = vmatprep.subr.bf16.mxu0 0
    %512 = vmatpush2.bf16.xpose.msra.mxu0 0
    %513 = vmatprep.subr.bf16.mxu0 0
    %514 = vmatpush2.bf16.xpose.msra.mxu0 0
    %515 = vmatprep.subr.bf16.mxu0 0
    %516 = vmatpush2.bf16.xpose.msra.mxu0 0
    %517 = vmatprep.subr.bf16.mxu0 0
    %518 = vmatpush2.bf16.xpose.msra.mxu0 0
    %519 = vmatprep.subr.bf16.mxu0 0
    %520 = vmatpush2.bf16.xpose.msra.mxu0 0
    %521 = vmatprep.subr.bf16.mxu0 0
    %522 = vmatpush2.bf16.xpose.msra.mxu0 0
    %523 = vmatprep.subr.bf16.mxu0 0
    %524 = vmatpush2.bf16.xpose.msra.mxu0 0
    %525 = vmatprep.mubr.bf16.mxu0 0
    %526 = vmatmul.mubr.bf16.gmra.mxu0 %v482
    %v527 = vpop.f32.mrf.mxu0
    %v528 = vadd.f32 0.0, %v527
    %v529 = vpop.f32.mrf.mxu0
    %v530 = vpop.f32.mrf.mxu0
    %v531 = vadd.f32 0.0, %v530
    %v532 = vpop.f32.mrf.mxu0
    %533 = vmatprep.mubr.bf16.mxu0 0
    %534 = vmatmul.mubr.bf16.gmra.mxu0 %v485
    %v535 = vpop.f32.mrf.mxu0
    %v536 = vadd.f32 0.0, %v535
    %v537 = vpop.f32.mrf.mxu0
    %v538 = vpop.f32.mrf.mxu0
    %v539 = vpop.f32.mrf.mxu0
    %540 = vdwg.mxu0
    %543 = vrot.lane.b32.xlu0 %v396, 96
    %v544 = vpop.permute.xlu0 %543
    %545 = vrot.lane.b32.xlu0 %v397, 96
    %v546 = vpop.permute.xlu0 %545
    %v548 = vsel %vm414, %v396, 0
    %v551 = vsel %vm414, %v397, 0
    %v554 = vsel %vm414, %v544, 0
    %v557 = vsel %vm414, %v546, 0
    %559 = vmatprep.subr.bf16.mxu0 0
    %560 = vmatpush1.bf16.xpose.msra.mxu0 0
    %561 = vmatprep.subr.bf16.mxu0 0
    %562 = vmatpush1.bf16.xpose.msra.mxu0 0
    %563 = vmatprep.subr.bf16.mxu0 0
    %564 = vmatpush1.bf16.xpose.msra.mxu0 0
    %565 = vmatprep.subr.bf16.mxu0 0
    %566 = vmatpush1.bf16.xpose.msra.mxu0 0
    %567 = vmatprep.subr.bf16.mxu0 0
    %568 = vmatpush1.bf16.xpose.msra.mxu0 0
    %569 = vmatprep.subr.bf16.mxu0 0
    %570 = vmatpush1.bf16.xpose.msra.mxu0 0
    %571 = vmatprep.subr.bf16.mxu0 0
    %572 = vmatpush1.bf16.xpose.msra.mxu0 %v557
    %573 = vmatprep.subr.bf16.mxu0 0
    %574 = vmatpush1.bf16.xpose.msra.mxu0 %v554
    %575 = vmatprep.subr.bf16.mxu0 0
    %576 = vmatpush2.bf16.xpose.msra.mxu0 0
    %577 = vmatprep.subr.bf16.mxu0 0
    %578 = vmatpush2.bf16.xpose.msra.mxu0 0
    %579 = vmatprep.subr.bf16.mxu0 0
    %580 = vmatpush2.bf16.xpose.msra.mxu0 0
    %581 = vmatprep.subr.bf16.mxu0 0
    %582 = vmatpush2.bf16.xpose.msra.mxu0 0
    %583 = vmatprep.subr.bf16.mxu0 0
    %584 = vmatpush2.bf16.xpose.msra.mxu0 0
    %585 = vmatprep.subr.bf16.mxu0 0
    %586 = vmatpush2.bf16.xpose.msra.mxu0 0
    %587 = vmatprep.subr.bf16.mxu0 0
    %588 = vmatpush2.bf16.xpose.msra.mxu0 0
    %589 = vmatprep.subr.bf16.mxu0 0
    %590 = vmatpush2.bf16.xpose.msra.mxu0 0
    %591 = vmatprep.mubr.bf16.mxu0 0
    %592 = vmatmul.mubr.bf16.gmra.mxu0 %v548
    %v593 = vpop.f32.mrf.mxu0
    %v594 = vadd.f32 0.0, %v593
    %v595 = vpop.f32.mrf.mxu0
    %v596 = vpop.f32.mrf.mxu0
    %v597 = vadd.f32 0.0, %v596
    %v598 = vpop.f32.mrf.mxu0
    %599 = vmatprep.mubr.bf16.mxu0 0
    %600 = vmatmul.mubr.bf16.gmra.mxu0 %v551
    %v601 = vpop.f32.mrf.mxu0
    %v602 = vadd.f32 0.0, %v601
    %v603 = vpop.f32.mrf.mxu0
    %v604 = vpop.f32.mrf.mxu0
    %v605 = vpop.f32.mrf.mxu0
    %606 = vdwg.mxu0
    %609 = vrot.lane.b32.xlu0 %v398, 96
    %v610 = vpop.permute.xlu0 %609
    %611 = vrot.lane.b32.xlu0 %v399, 96
    %v612 = vpop.permute.xlu0 %611
    %v614 = vsel %vm414, %v398, 0
    %v617 = vsel %vm414, %v399, 0
    %v620 = vsel %vm414, %v610, 0
    %v623 = vsel %vm414, %v612, 0
    %625 = vmatprep.subr.bf16.mxu0 0
    %626 = vmatpush1.bf16.xpose.msra.mxu0 0
    %627 = vmatprep.subr.bf16.mxu0 0
    %628 = vmatpush1.bf16.xpose.msra.mxu0 0
    %629 = vmatprep.subr.bf16.mxu0 0
    %630 = vmatpush1.bf16.xpose.msra.mxu0 0
    %631 = vmatprep.subr.bf16.mxu0 0
    %632 = vmatpush1.bf16.xpose.msra.mxu0 0
    %633 = vmatprep.subr.bf16.mxu0 0
    %634 = vmatpush1.bf16.xpose.msra.mxu0 0
    %635 = vmatprep.subr.bf16.mxu0 0
    %636 = vmatpush1.bf16.xpose.msra.mxu0 0
    %637 = vmatprep.subr.bf16.mxu0 0
    %638 = vmatpush1.bf16.xpose.msra.mxu0 %v623
    %639 = vmatprep.subr.bf16.mxu0 0
    %640 = vmatpush1.bf16.xpose.msra.mxu0 %v620
    %641 = vmatprep.subr.bf16.mxu0 0
    %642 = vmatpush2.bf16.xpose.msra.mxu0 0
    %643 = vmatprep.subr.bf16.mxu0 0
    %644 = vmatpush2.bf16.xpose.msra.mxu0 0
    %645 = vmatprep.subr.bf16.mxu0 0
    %646 = vmatpush2.bf16.xpose.msra.mxu0 0
    %647 = vmatprep.subr.bf16.mxu0 0
    %648 = vmatpush2.bf16.xpose.msra.mxu0 0
    %649 = vmatprep.subr.bf16.mxu0 0
    %650 = vmatpush2.bf16.xpose.msra.mxu0 0
    %651 = vmatprep.subr.bf16.mxu0 0
    %652 = vmatpush2.bf16.xpose.msra.mxu0 0
    %653 = vmatprep.subr.bf16.mxu0 0
    %654 = vmatpush2.bf16.xpose.msra.mxu0 0
    %655 = vmatprep.subr.bf16.mxu0 0
    %656 = vmatpush2.bf16.xpose.msra.mxu0 0
    %657 = vmatprep.mubr.bf16.mxu0 0
    %658 = vmatmul.mubr.bf16.gmra.mxu0 %v614
    %v659 = vpop.f32.mrf.mxu0
    %v660 = vadd.f32 0.0, %v659
    %v661 = vpop.f32.mrf.mxu0
    %v662 = vpop.f32.mrf.mxu0
    %v663 = vadd.f32 0.0, %v662
    %v664 = vpop.f32.mrf.mxu0
    %665 = vmatprep.mubr.bf16.mxu0 0
    %666 = vmatmul.mubr.bf16.gmra.mxu0 %v617
    %v667 = vpop.f32.mrf.mxu0
    %v668 = vadd.f32 0.0, %v667
    %v669 = vpop.f32.mrf.mxu0
    %v670 = vpop.f32.mrf.mxu0
    %v671 = vpop.f32.mrf.mxu0
    %672 = vdwg.mxu0
    %675 = vrot.lane.b32.xlu0 %v400, 96
    %v676 = vpop.permute.xlu0 %675
    %677 = vrot.lane.b32.xlu0 %v401, 96
    %v678 = vpop.permute.xlu0 %677
    %v680 = vsel %vm414, %v400, 0
    %v683 = vsel %vm414, %v401, 0
    %v686 = vsel %vm414, %v676, 0
    %v689 = vsel %vm414, %v678, 0
    %691 = vmatprep.subr.bf16.mxu0 0
    %692 = vmatpush1.bf16.xpose.msra.mxu0 0
    %693 = vmatprep.subr.bf16.mxu0 0
    %694 = vmatpush1.bf16.xpose.msra.mxu0 0
    %695 = vmatprep.subr.bf16.mxu0 0
    %696 = vmatpush1.bf16.xpose.msra.mxu0 0
    %697 = vmatprep.subr.bf16.mxu0 0
    %698 = vmatpush1.bf16.xpose.msra.mxu0 0
    %699 = vmatprep.subr.bf16.mxu0 0
    %700 = vmatpush1.bf16.xpose.msra.mxu0 0
    %701 = vmatprep.subr.bf16.mxu0 0
    %702 = vmatpush1.bf16.xpose.msra.mxu0 0
    %703 = vmatprep.subr.bf16.mxu0 0
    %704 = vmatpush1.bf16.xpose.msra.mxu0 %v689
    %705 = vmatprep.subr.bf16.mxu0 0
    %706 = vmatpush1.bf16.xpose.msra.mxu0 %v686
    %707 = vmatprep.subr.bf16.mxu0 0
    %708 = vmatpush2.bf16.xpose.msra.mxu0 0
    %709 = vmatprep.subr.bf16.mxu0 0
    %710 = vmatpush2.bf16.xpose.msra.mxu0 0
    %711 = vmatprep.subr.bf16.mxu0 0
    %712 = vmatpush2.bf16.xpose.msra.mxu0 0
    %713 = vmatprep.subr.bf16.mxu0 0
    %714 = vmatpush2.bf16.xpose.msra.mxu0 0
    %715 = vmatprep.subr.bf16.mxu0 0
    %716 = vmatpush2.bf16.xpose.msra.mxu0 0
    %717 = vmatprep.subr.bf16.mxu0 0
    %718 = vmatpush2.bf16.xpose.msra.mxu0 0
    %719 = vmatprep.subr.bf16.mxu0 0
    %720 = vmatpush2.bf16.xpose.msra.mxu0 0
    %721 = vmatprep.subr.bf16.mxu0 0
    %722 = vmatpush2.bf16.xpose.msra.mxu0 0
    %723 = vmatprep.mubr.bf16.mxu0 0
    %724 = vmatmul.mubr.bf16.gmra.mxu0 %v680
    %v725 = vpop.f32.mrf.mxu0
    %v726 = vadd.f32 0.0, %v725
    %v727 = vpop.f32.mrf.mxu0
    %v728 = vpop.f32.mrf.mxu0
    %v729 = vadd.f32 0.0, %v728
    %v730 = vpop.f32.mrf.mxu0
    %731 = vmatprep.mubr.bf16.mxu0 0
    %732 = vmatmul.mubr.bf16.gmra.mxu0 %v683
    %v733 = vpop.f32.mrf.mxu0
    %v734 = vadd.f32 0.0, %v733
    %v735 = vpop.f32.mrf.mxu0
    %v736 = vpop.f32.mrf.mxu0
    %v737 = vpop.f32.mrf.mxu0
    %738 = vdwg.mxu0
    %741 = vrot.lane.b32.xlu0 %v402, 96
    %v742 = vpop.permute.xlu0 %741
    %743 = vrot.lane.b32.xlu0 %v403, 96
    %v744 = vpop.permute.xlu0 %743
    %v746 = vsel %vm414, %v402, 0
    %v749 = vsel %vm414, %v403, 0
    %v752 = vsel %vm414, %v742, 0
    %v755 = vsel %vm414, %v744, 0
    %757 = vmatprep.subr.bf16.mxu0 0
    %758 = vmatpush1.bf16.xpose.msra.mxu0 0
    %759 = vmatprep.subr.bf16.mxu0 0
    %760 = vmatpush1.bf16.xpose.msra.mxu0 0
    %761 = vmatprep.subr.bf16.mxu0 0
    %762 = vmatpush1.bf16.xpose.msra.mxu0 0
    %763 = vmatprep.subr.bf16.mxu0 0
    %764 = vmatpush1.bf16.xpose.msra.mxu0 0
    %765 = vmatprep.subr.bf16.mxu0 0
    %766 = vmatpush1.bf16.xpose.msra.mxu0 0
    %767 = vmatprep.subr.bf16.mxu0 0
    %768 = vmatpush1.bf16.xpose.msra.mxu0 0
    %769 = vmatprep.subr.bf16.mxu0 0
    %770 = vmatpush1.bf16.xpose.msra.mxu0 %v755
    %771 = vmatprep.subr.bf16.mxu0 0
    %772 = vmatpush1.bf16.xpose.msra.mxu0 %v752
    %773 = vmatprep.subr.bf16.mxu0 0
    %774 = vmatpush2.bf16.xpose.msra.mxu0 0
    %775 = vmatprep.subr.bf16.mxu0 0
    %776 = vmatpush2.bf16.xpose.msra.mxu0 0
    %777 = vmatprep.subr.bf16.mxu0 0
    %778 = vmatpush2.bf16.xpose.msra.mxu0 0
    %779 = vmatprep.subr.bf16.mxu0 0
    %780 = vmatpush2.bf16.xpose.msra.mxu0 0
    %781 = vmatprep.subr.bf16.mxu0 0
    %782 = vmatpush2.bf16.xpose.msra.mxu0 0
    %783 = vmatprep.subr.bf16.mxu0 0
    %784 = vmatpush2.bf16.xpose.msra.mxu0 0
    %785 = vmatprep.subr.bf16.mxu0 0
    %786 = vmatpush2.bf16.xpose.msra.mxu0 0
    %787 = vmatprep.subr.bf16.mxu0 0
    %788 = vmatpush2.bf16.xpose.msra.mxu0 0
    %789 = vmatprep.mubr.bf16.mxu0 0
    %790 = vmatmul.mubr.bf16.gmra.mxu0 %v746
    %v791 = vpop.f32.mrf.mxu0
    %v792 = vadd.f32 0.0, %v791
    %v793 = vpop.f32.mrf.mxu0
    %v794 = vpop.f32.mrf.mxu0
    %v795 = vadd.f32 0.0, %v794
    %v796 = vpop.f32.mrf.mxu0
    %797 = vmatprep.mubr.bf16.mxu0 0
    %798 = vmatmul.mubr.bf16.gmra.mxu0 %v749
    %v799 = vpop.f32.mrf.mxu0
    %v800 = vadd.f32 0.0, %v799
    %v801 = vpop.f32.mrf.mxu0
    %v802 = vpop.f32.mrf.mxu0
    %v803 = vpop.f32.mrf.mxu0
    %804 = vdwg.mxu0
    %807 = vrot.lane.b32.xlu0 %v404, 96
    %v808 = vpop.permute.xlu0 %807
    %809 = vrot.lane.b32.xlu0 %v405, 96
    %v810 = vpop.permute.xlu0 %809
    %v812 = vsel %vm414, %v404, 0
    %v815 = vsel %vm414, %v405, 0
    %v818 = vsel %vm414, %v808, 0
    %v821 = vsel %vm414, %v810, 0
    %823 = vmatprep.subr.bf16.mxu0 0
    %824 = vmatpush1.bf16.xpose.msra.mxu0 0
    %825 = vmatprep.subr.bf16.mxu0 0
    %826 = vmatpush1.bf16.xpose.msra.mxu0 0
    %827 = vmatprep.subr.bf16.mxu0 0
    %828 = vmatpush1.bf16.xpose.msra.mxu0 0
    %829 = vmatprep.subr.bf16.mxu0 0
    %830 = vmatpush1.bf16.xpose.msra.mxu0 0
    %831 = vmatprep.subr.bf16.mxu0 0
    %832 = vmatpush1.bf16.xpose.msra.mxu0 0
    %833 = vmatprep.subr.bf16.mxu0 0
    %834 = vmatpush1.bf16.xpose.msra.mxu0 0
    %835 = vmatprep.subr.bf16.mxu0 0
    %836 = vmatpush1.bf16.xpose.msra.mxu0 %v821
    %837 = vmatprep.subr.bf16.mxu0 0
    %838 = vmatpush1.bf16.xpose.msra.mxu0 %v818
    %839 = vmatprep.subr.bf16.mxu0 0
    %840 = vmatpush2.bf16.xpose.msra.mxu0 0
    %841 = vmatprep.subr.bf16.mxu0 0
    %842 = vmatpush2.bf16.xpose.msra.mxu0 0
    %843 = vmatprep.subr.bf16.mxu0 0
    %844 = vmatpush2.bf16.xpose.msra.mxu0 0
    %845 = vmatprep.subr.bf16.mxu0 0
    %846 = vmatpush2.bf16.xpose.msra.mxu0 0
    %847 = vmatprep.subr.bf16.mxu0 0
    %848 = vmatpush2.bf16.xpose.msra.mxu0 0
    %849 = vmatprep.subr.bf16.mxu0 0
    %850 = vmatpush2.bf16.xpose.msra.mxu0 0
    %851 = vmatprep.subr.bf16.mxu0 0
    %852 = vmatpush2.bf16.xpose.msra.mxu0 0
    %853 = vmatprep.subr.bf16.mxu0 0
    %854 = vmatpush2.bf16.xpose.msra.mxu0 0
    %855 = vmatprep.mubr.bf16.mxu0 0
    %856 = vmatmul.mubr.bf16.gmra.mxu0 %v812
    %v857 = vpop.f32.mrf.mxu0
    %v858 = vadd.f32 0.0, %v857
    %v859 = vpop.f32.mrf.mxu0
    %v860 = vpop.f32.mrf.mxu0
    %v861 = vadd.f32 0.0, %v860
    %v862 = vpop.f32.mrf.mxu0
    %863 = vmatprep.mubr.bf16.mxu0 0
    %864 = vmatmul.mubr.bf16.gmra.mxu0 %v815
    %v865 = vpop.f32.mrf.mxu0
    %v866 = vadd.f32 0.0, %v865
    %v867 = vpop.f32.mrf.mxu0
    %v868 = vpop.f32.mrf.mxu0
    %v869 = vpop.f32.mrf.mxu0
    %870 = vdwg.mxu0
    %873 = vrot.lane.b32.xlu0 %v406, 96
    %v874 = vpop.permute.xlu0 %873
    %875 = vrot.lane.b32.xlu0 %v407, 96
    %v876 = vpop.permute.xlu0 %875
    %v878 = vsel %vm414, %v406, 0
    %v881 = vsel %vm414, %v407, 0
    %v884 = vsel %vm414, %v874, 0
    %v887 = vsel %vm414, %v876, 0
    %889 = vmatprep.subr.bf16.mxu0 0
    %890 = vmatpush1.bf16.xpose.msra.mxu0 0
    %891 = vmatprep.subr.bf16.mxu0 0
    %892 = vmatpush1.bf16.xpose.msra.mxu0 0
    %893 = vmatprep.subr.bf16.mxu0 0
    %894 = vmatpush1.bf16.xpose.msra.mxu0 0
    %895 = vmatprep.subr.bf16.mxu0 0
    %896 = vmatpush1.bf16.xpose.msra.mxu0 0
    %897 = vmatprep.subr.bf16.mxu0 0
    %898 = vmatpush1.bf16.xpose.msra.mxu0 0
    %899 = vmatprep.subr.bf16.mxu0 0
    %900 = vmatpush1.bf16.xpose.msra.mxu0 0
    %901 = vmatprep.subr.bf16.mxu0 0
    %902 = vmatpush1.bf16.xpose.msra.mxu0 %v887
    %903 = vmatprep.subr.bf16.mxu0 0
    %904 = vmatpush1.bf16.xpose.msra.mxu0 %v884
    %905 = vmatprep.subr.bf16.mxu0 0
    %906 = vmatpush2.bf16.xpose.msra.mxu0 0
    %907 = vmatprep.subr.bf16.mxu0 0
    %908 = vmatpush2.bf16.xpose.msra.mxu0 0
    %909 = vmatprep.subr.bf16.mxu0 0
    %910 = vmatpush2.bf16.xpose.msra.mxu0 0
    %911 = vmatprep.subr.bf16.mxu0 0
    %912 = vmatpush2.bf16.xpose.msra.mxu0 0
    %913 = vmatprep.subr.bf16.mxu0 0
    %914 = vmatpush2.bf16.xpose.msra.mxu0 0
    %915 = vmatprep.subr.bf16.mxu0 0
    %916 = vmatpush2.bf16.xpose.msra.mxu0 0
    %917 = vmatprep.subr.bf16.mxu0 0
    %918 = vmatpush2.bf16.xpose.msra.mxu0 0
    %919 = vmatprep.subr.bf16.mxu0 0
    %920 = vmatpush2.bf16.xpose.msra.mxu0 0
    %921 = vmatprep.mubr.bf16.mxu0 0
    %922 = vmatmul.mubr.bf16.gmra.mxu0 %v878
    %v923 = vpop.f32.mrf.mxu0
    %v924 = vadd.f32 0.0, %v923
    %v925 = vpop.f32.mrf.mxu0
    %v926 = vpop.f32.mrf.mxu0
    %v927 = vadd.f32 0.0, %v926
    %v928 = vpop.f32.mrf.mxu0
    %929 = vmatprep.mubr.bf16.mxu0 0
    %930 = vmatmul.mubr.bf16.gmra.mxu0 %v881
    %v931 = vpop.f32.mrf.mxu0
    %v932 = vadd.f32 0.0, %v931
    %v933 = vpop.f32.mrf.mxu0
    %v934 = vpop.f32.mrf.mxu0
    %v935 = vpop.f32.mrf.mxu0
    %936 = vdwg.mxu0
    %v937 = vmul.f32 %v462, 0.35355338
    %v938 = vmul.f32 %v465, 0.35355338
    %v939 = vmul.f32 %v470, 0.35355338
    %v940 = vmul.f32 %v528, 0.35355338
    %v941 = vmul.f32 %v531, 0.35355338
    %v942 = vmul.f32 %v536, 0.35355338
    %v943 = vmul.f32 %v594, 0.35355338
    %v944 = vmul.f32 %v597, 0.35355338
    %v945 = vmul.f32 %v602, 0.35355338
    %v946 = vmul.f32 %v660, 0.35355338
    %v947 = vmul.f32 %v663, 0.35355338
    %v948 = vmul.f32 %v668, 0.35355338
    %v949 = vmul.f32 %v726, 0.35355338
    %v950 = vmul.f32 %v729, 0.35355338
    %v951 = vmul.f32 %v734, 0.35355338
    %v952 = vmul.f32 %v792, 0.35355338
    %v953 = vmul.f32 %v795, 0.35355338
    %v954 = vmul.f32 %v800, 0.35355338
    %v955 = vmul.f32 %v858, 0.35355338
    %v956 = vmul.f32 %v861, 0.35355338
    %v957 = vmul.f32 %v866, 0.35355338
    %v958 = vmul.f32 %v924, 0.35355338
    %v959 = vmul.f32 %v927, 0.35355338
    %v960 = vmul.f32 %v932, 0.35355338
    %v961 = vadd.f32 %v937, %v139
    %v962 = vadd.f32 %v938, %v139
    %v963 = vadd.f32 %v939, %v139
    %v964 = vadd.f32 %v940, %v139
    %v965 = vadd.f32 %v941, %v139
    %v966 = vadd.f32 %v942, %v139
    %v967 = vadd.f32 %v943, %v139
    %v968 = vadd.f32 %v944, %v139
    %v969 = vadd.f32 %v945, %v139
    %v970 = vadd.f32 %v946, %v139
    %v971 = vadd.f32 %v947, %v139
    %v972 = vadd.f32 %v948, %v139
    %v973 = vadd.f32 %v949, %v139
    %v974 = vadd.f32 %v950, %v139
    %v975 = vadd.f32 %v951, %v139
    %v976 = vadd.f32 %v952, %v139
    %v977 = vadd.f32 %v953, %v139
    %v978 = vadd.f32 %v954, %v139
    %v979 = vadd.f32 %v955, %v139
    %v980 = vadd.f32 %v956, %v139
    %v981 = vadd.f32 %v957, %v139
    %v982 = vadd.f32 %v958, %v139
    %v983 = vadd.f32 %v959, %v139
    %v984 = vadd.f32 %v960, %v139
    %vm985 = vcmask 195584
    %v986 = vsel %vm985, %v961, -inf
    %987 = vmax.xlane.f32.xlu0 %v986
    %v988 = vpop.xlane.xlu0 %987
    %v989 = vsel %vm985, %v962, -inf
    %990 = vmax.xlane.f32.xlu0 %v989
    %v991 = vpop.xlane.xlu0 %990
    %v992 = vsel %vm985, %v963, -inf
    %993 = vmax.xlane.f32.xlu0 %v992
    %v994 = vpop.xlane.xlu0 %993
    %v995 = vsel %vm985, %v964, -inf
    %996 = vmax.xlane.f32.xlu0 %v995
    %v997 = vpop.xlane.xlu0 %996
    %v998 = vsel %vm985, %v965, -inf
    %999 = vmax.xlane.f32.xlu0 %v998
    %v1000 = vpop.xlane.xlu0 %999
    %v1001 = vsel %vm985, %v966, -inf
    %1002 = vmax.xlane.f32.xlu0 %v1001
    %v1003 = vpop.xlane.xlu0 %1002
    %v1004 = vsel %vm985, %v967, -inf
    %1005 = vmax.xlane.f32.xlu0 %v1004
    %v1006 = vpop.xlane.xlu0 %1005
    %v1007 = vsel %vm985, %v968, -inf
    %1008 = vmax.xlane.f32.xlu0 %v1007
    %v1009 = vpop.xlane.xlu0 %1008
    %v1010 = vsel %vm985, %v969, -inf
    %1011 = vmax.xlane.f32.xlu0 %v1010
    %v1012 = vpop.xlane.xlu0 %1011
    %v1013 = vsel %vm985, %v970, -inf
    %1014 = vmax.xlane.f32.xlu0 %v1013
    %v1015 = vpop.xlane.xlu0 %1014
    %v1016 = vsel %vm985, %v971, -inf
    %1017 = vmax.xlane.f32.xlu0 %v1016
    %v1018 = vpop.xlane.xlu0 %1017
    %v1019 = vsel %vm985, %v972, -inf
    %1020 = vmax.xlane.f32.xlu0 %v1019
    %v1021 = vpop.xlane.xlu0 %1020
    %v1022 = vsel %vm985, %v973, -inf
    %1023 = vmax.xlane.f32.xlu0 %v1022
    %v1024 = vpop.xlane.xlu0 %1023
    %v1025 = vsel %vm985, %v974, -inf
    %1026 = vmax.xlane.f32.xlu0 %v1025
    %v1027 = vpop.xlane.xlu0 %1026
    %v1028 = vsel %vm985, %v975, -inf
    %1029 = vmax.xlane.f32.xlu0 %v1028
    %v1030 = vpop.xlane.xlu0 %1029
    %v1031 = vsel %vm985, %v976, -inf
    %1032 = vmax.xlane.f32.xlu0 %v1031
    %v1033 = vpop.xlane.xlu0 %1032
    %v1034 = vsel %vm985, %v977, -inf
    %1035 = vmax.xlane.f32.xlu0 %v1034
    %v1036 = vpop.xlane.xlu0 %1035
    %v1037 = vsel %vm985, %v978, -inf
    %1038 = vmax.xlane.f32.xlu0 %v1037
    %v1039 = vpop.xlane.xlu0 %1038
    %v1040 = vsel %vm985, %v979, -inf
    %1041 = vmax.xlane.f32.xlu0 %v1040
    %v1042 = vpop.xlane.xlu0 %1041
    %v1043 = vsel %vm985, %v980, -inf
    %1044 = vmax.xlane.f32.xlu0 %v1043
    %v1045 = vpop.xlane.xlu0 %1044
    %v1046 = vsel %vm985, %v981, -inf
    %1047 = vmax.xlane.f32.xlu0 %v1046
    %v1048 = vpop.xlane.xlu0 %1047
    %v1049 = vsel %vm985, %v982, -inf
    %1050 = vmax.xlane.f32.xlu0 %v1049
    %v1051 = vpop.xlane.xlu0 %1050
    %v1052 = vsel %vm985, %v983, -inf
    %1053 = vmax.xlane.f32.xlu0 %v1052
    %v1054 = vpop.xlane.xlu0 %1053
    %v1055 = vsel %vm985, %v984, -inf
    %1056 = vmax.xlane.f32.xlu0 %v1055
    %v1057 = vpop.xlane.xlu0 %1056
    %v1058 = vsub.f32 %v961, %v988
    %v1059 = vsub.f32 %v962, %v991
    %v1060 = vsub.f32 %v963, %v994
    %v1061 = vsub.f32 %v964, %v997
    %v1062 = vsub.f32 %v965, %v1000
    %v1063 = vsub.f32 %v966, %v1003
    %v1064 = vsub.f32 %v967, %v1006
    %v1065 = vsub.f32 %v968, %v1009
    %v1066 = vsub.f32 %v969, %v1012
    %v1067 = vsub.f32 %v970, %v1015
    %v1068 = vsub.f32 %v971, %v1018
    %v1069 = vsub.f32 %v972, %v1021
    %v1070 = vsub.f32 %v973, %v1024
    %v1071 = vsub.f32 %v974, %v1027
    %v1072 = vsub.f32 %v975, %v1030
    %v1073 = vsub.f32 %v976, %v1033
    %v1074 = vsub.f32 %v977, %v1036
    %v1075 = vsub.f32 %v978, %v1039
    %v1076 = vsub.f32 %v979, %v1042
    %v1077 = vsub.f32 %v980, %v1045
    %v1078 = vsub.f32 %v981, %v1048
    %v1079 = vsub.f32 %v982, %v1051
    %v1080 = vsub.f32 %v983, %v1054
    %v1081 = vsub.f32 %v984, %v1057
    %v1082 = vmul.f32 %v1058, 1.442695
    %v1083 = vpow.pop %v1082
    %v1084 = vmul.f32 %v1059, 1.442695
    %v1085 = vpow.pop %v1084
    %v1086 = vmul.f32 %v1060, 1.442695
    %v1087 = vpow.pop %v1086
    %v1088 = vmul.f32 %v1061, 1.442695
    %v1089 = vpow.pop %v1088
    %v1090 = vmul.f32 %v1062, 1.442695
    %v1091 = vpow.pop %v1090
    %v1092 = vmul.f32 %v1063, 1.442695
    %v1093 = vpow.pop %v1092
    %v1094 = vmul.f32 %v1064, 1.442695
    %v1095 = vpow.pop %v1094
    %v1096 = vmul.f32 %v1065, 1.442695
    %v1097 = vpow.pop %v1096
    %v1098 = vmul.f32 %v1066, 1.442695
    %v1099 = vpow.pop %v1098
    %v1100 = vmul.f32 %v1067, 1.442695
    %v1101 = vpow.pop %v1100
    %v1102 = vmul.f32 %v1068, 1.442695
    %v1103 = vpow.pop %v1102
    %v1104 = vmul.f32 %v1069, 1.442695
    %v1105 = vpow.pop %v1104
    %v1106 = vmul.f32 %v1070, 1.442695
    %v1107 = vpow.pop %v1106
    %v1108 = vmul.f32 %v1071, 1.442695
    %v1109 = vpow.pop %v1108
    %v1110 = vmul.f32 %v1072, 1.442695
    %v1111 = vpow.pop %v1110
    %v1112 = vmul.f32 %v1073, 1.442695
    %v1113 = vpow.pop %v1112
    %v1114 = vmul.f32 %v1074, 1.442695
    %v1115 = vpow.pop %v1114
    %v1116 = vmul.f32 %v1075, 1.442695
    %v1117 = vpow.pop %v1116
    %v1118 = vmul.f32 %v1076, 1.442695
    %v1119 = vpow.pop %v1118
    %v1120 = vmul.f32 %v1077, 1.442695
    %v1121 = vpow.pop %v1120
    %v1122 = vmul.f32 %v1078, 1.442695
    %v1123 = vpow.pop %v1122
    %v1124 = vmul.f32 %v1079, 1.442695
    %v1125 = vpow.pop %v1124
    %v1126 = vmul.f32 %v1080, 1.442695
    %v1127 = vpow.pop %v1126
    %v1128 = vmul.f32 %v1081, 1.442695
    %v1129 = vpow.pop %v1128
    %v1130 = vsel %vm985, %v1083, 0.0
    %1131 = vadd.xlane.f32.xlu0 %v1130
    %v1132 = vpop.xlane.xlu0 %1131
    %v1133 = vsel %vm985, %v1085, 0.0
    %1134 = vadd.xlane.f32.xlu0 %v1133
    %v1135 = vpop.xlane.xlu0 %1134
    %v1136 = vsel %vm985, %v1087, 0.0
    %1137 = vadd.xlane.f32.xlu0 %v1136
    %v1138 = vpop.xlane.xlu0 %1137
    %v1139 = vsel %vm985, %v1089, 0.0
    %1140 = vadd.xlane.f32.xlu0 %v1139
    %v1141 = vpop.xlane.xlu0 %1140
    %v1142 = vsel %vm985, %v1091, 0.0
    %1143 = vadd.xlane.f32.xlu0 %v1142
    %v1144 = vpop.xlane.xlu0 %1143
    %v1145 = vsel %vm985, %v1093, 0.0
    %1146 = vadd.xlane.f32.xlu0 %v1145
    %v1147 = vpop.xlane.xlu0 %1146
    %v1148 = vsel %vm985, %v1095, 0.0
    %1149 = vadd.xlane.f32.xlu0 %v1148
    %v1150 = vpop.xlane.xlu0 %1149
    %v1151 = vsel %vm985, %v1097, 0.0
    %1152 = vadd.xlane.f32.xlu0 %v1151
    %v1153 = vpop.xlane.xlu0 %1152
    %v1154 = vsel %vm985, %v1099, 0.0
    %1155 = vadd.xlane.f32.xlu0 %v1154
    %v1156 = vpop.xlane.xlu0 %1155
    %v1157 = vsel %vm985, %v1101, 0.0
    %1158 = vadd.xlane.f32.xlu0 %v1157
    %v1159 = vpop.xlane.xlu0 %1158
    %v1160 = vsel %vm985, %v1103, 0.0
    %1161 = vadd.xlane.f32.xlu0 %v1160
    %v1162 = vpop.xlane.xlu0 %1161
    %v1163 = vsel %vm985, %v1105, 0.0
    %1164 = vadd.xlane.f32.xlu0 %v1163
    %v1165 = vpop.xlane.xlu0 %1164
    %v1166 = vsel %vm985, %v1107, 0.0
    %1167 = vadd.xlane.f32.xlu0 %v1166
    %v1168 = vpop.xlane.xlu0 %1167
    %v1169 = vsel %vm985, %v1109, 0.0
    %1170 = vadd.xlane.f32.xlu0 %v1169
    %v1171 = vpop.xlane.xlu0 %1170
    %v1172 = vsel %vm985, %v1111, 0.0
    %1173 = vadd.xlane.f32.xlu0 %v1172
    %v1174 = vpop.xlane.xlu0 %1173
    %v1175 = vsel %vm985, %v1113, 0.0
    %1176 = vadd.xlane.f32.xlu0 %v1175
    %v1177 = vpop.xlane.xlu0 %1176
    %v1178 = vsel %vm985, %v1115, 0.0
    %1179 = vadd.xlane.f32.xlu0 %v1178
    %v1180 = vpop.xlane.xlu0 %1179
    %v1181 = vsel %vm985, %v1117, 0.0
    %1182 = vadd.xlane.f32.xlu0 %v1181
    %v1183 = vpop.xlane.xlu0 %1182
    %v1184 = vsel %vm985, %v1119, 0.0
    %1185 = vadd.xlane.f32.xlu0 %v1184
    %v1186 = vpop.xlane.xlu0 %1185
    %v1187 = vsel %vm985, %v1121, 0.0
    %1188 = vadd.xlane.f32.xlu0 %v1187
    %v1189 = vpop.xlane.xlu0 %1188
    %v1190 = vsel %vm985, %v1123, 0.0
    %1191 = vadd.xlane.f32.xlu0 %v1190
    %v1192 = vpop.xlane.xlu0 %1191
    %v1193 = vsel %vm985, %v1125, 0.0
    %1194 = vadd.xlane.f32.xlu0 %v1193
    %v1195 = vpop.xlane.xlu0 %1194
    %v1196 = vsel %vm985, %v1127, 0.0
    %1197 = vadd.xlane.f32.xlu0 %v1196
    %v1198 = vpop.xlane.xlu0 %1197
    %v1199 = vsel %vm985, %v1129, 0.0
    %1200 = vadd.xlane.f32.xlu0 %v1199
    %v1201 = vpop.xlane.xlu0 %1200
    %v1202 = vrcp.pop %v1132
    %v1203 = vrcp.pop %v1135
    %v1204 = vrcp.pop %v1138
    %v1205 = vrcp.pop %v1141
    %v1206 = vrcp.pop %v1144
    %v1207 = vrcp.pop %v1147
    %v1208 = vrcp.pop %v1150
    %v1209 = vrcp.pop %v1153
    %v1210 = vrcp.pop %v1156
    %v1211 = vrcp.pop %v1159
    %v1212 = vrcp.pop %v1162
    %v1213 = vrcp.pop %v1165
    %v1214 = vrcp.pop %v1168
    %v1215 = vrcp.pop %v1171
    %v1216 = vrcp.pop %v1174
    %v1217 = vrcp.pop %v1177
    %v1218 = vrcp.pop %v1180
    %v1219 = vrcp.pop %v1183
    %v1220 = vrcp.pop %v1186
    %v1221 = vrcp.pop %v1189
    %v1222 = vrcp.pop %v1192
    %v1223 = vrcp.pop %v1195
    %v1224 = vrcp.pop %v1198
    %v1225 = vrcp.pop %v1201
    %v1226 = vmul.f32 %v1083, %v1202
    %v1227 = vmul.f32 %v1085, %v1203
    %v1228 = vmul.f32 %v1087, %v1204
    %v1229 = vmul.f32 %v1089, %v1205
    %v1230 = vmul.f32 %v1091, %v1206
    %v1231 = vmul.f32 %v1093, %v1207
    %v1232 = vmul.f32 %v1095, %v1208
    %v1233 = vmul.f32 %v1097, %v1209
    %v1234 = vmul.f32 %v1099, %v1210
    %v1235 = vmul.f32 %v1101, %v1211
    %v1236 = vmul.f32 %v1103, %v1212
    %v1237 = vmul.f32 %v1105, %v1213
    %v1238 = vmul.f32 %v1107, %v1214
    %v1239 = vmul.f32 %v1109, %v1215
    %v1240 = vmul.f32 %v1111, %v1216
    %v1241 = vmul.f32 %v1113, %v1217
    %v1242 = vmul.f32 %v1115, %v1218
    %v1243 = vmul.f32 %v1117, %v1219
    %v1244 = vmul.f32 %v1119, %v1220
    %v1245 = vmul.f32 %v1121, %v1221
    %v1246 = vmul.f32 %v1123, %v1222
    %v1247 = vmul.f32 %v1125, %v1223
    %v1248 = vmul.f32 %v1127, %v1224
    %v1249 = vmul.f32 %v1129, %v1225
    %v1250 = vpack.c.bf16 %v1227, %v1226
    %v1251 = vpack.c.bf16 %v1228, %v1228
    %v1252 = vpack.c.bf16 %v1230, %v1229
    %v1253 = vpack.c.bf16 %v1231, %v1231
    %v1254 = vpack.c.bf16 %v1233, %v1232
    %v1255 = vpack.c.bf16 %v1234, %v1234
    %v1256 = vpack.c.bf16 %v1236, %v1235
    %v1257 = vpack.c.bf16 %v1237, %v1237
    %v1258 = vpack.c.bf16 %v1239, %v1238
    %v1259 = vpack.c.bf16 %v1240, %v1240
    %v1260 = vpack.c.bf16 %v1242, %v1241
    %v1261 = vpack.c.bf16 %v1243, %v1243
    %v1262 = vpack.c.bf16 %v1245, %v1244
    %v1263 = vpack.c.bf16 %v1246, %v1246
    %v1264 = vpack.c.bf16 %v1248, %v1247
    %v1265 = vpack.c.bf16 %v1249, %v1249
    %1266 = vrot.lane.b32.xlu0 %v392, 64
    %v1267 = vpop.permute.xlu0 %1266
    %1268 = vrot.lane.b32.xlu0 %v393, 64
    %v1269 = vpop.permute.xlu0 %1268
    %v1272 = vsel %vm985, %v1250, 0
    %v1275 = vsel %vm985, %v1251, 0
    %vm1277 = vcmask 1043456
    %v1279 = vsel %vm1277, %v1269, 0
    %1281 = vmatprep.subr.bf16.mxu0 0
    %1282 = vmatpush1.bf16.msra.mxu0 0
    %1283 = vmatprep.subr.bf16.mxu0 0
    %1284 = vmatpush1.bf16.msra.mxu0 0
    %1285 = vmatprep.subr.bf16.mxu0 0
    %1286 = vmatpush1.bf16.msra.mxu0 0
    %1287 = vmatprep.subr.bf16.mxu0 0
    %1288 = vmatpush1.bf16.msra.mxu0 0
    %1289 = vmatprep.subr.bf16.mxu0 0
    %1290 = vmatpush1.bf16.msra.mxu0 0
    %1291 = vmatprep.subr.bf16.mxu0 0
    %1292 = vmatpush1.bf16.msra.mxu0 0
    %1293 = vmatprep.subr.bf16.mxu0 0
    %1294 = vmatpush1.bf16.msra.mxu0 %v1279
    %1295 = vmatprep.subr.bf16.mxu0 0
    %1296 = vmatpush1.bf16.msra.mxu0 %v1267
    %1297 = vmatprep.subr.bf16.mxu0 0
    %1298 = vmatpush2.bf16.msra.mxu0 0
    %1299 = vmatprep.subr.bf16.mxu0 0
    %1300 = vmatpush2.bf16.msra.mxu0 0
    %1301 = vmatprep.subr.bf16.mxu0 0
    %1302 = vmatpush2.bf16.msra.mxu0 0
    %1303 = vmatprep.subr.bf16.mxu0 0
    %1304 = vmatpush2.bf16.msra.mxu0 0
    %1305 = vmatprep.subr.bf16.mxu0 0
    %1306 = vmatpush2.bf16.msra.mxu0 0
    %1307 = vmatprep.subr.bf16.mxu0 0
    %1308 = vmatpush2.bf16.msra.mxu0 0
    %1309 = vmatprep.subr.bf16.mxu0 0
    %1310 = vmatpush2.bf16.msra.mxu0 0
    %1311 = vmatprep.subr.bf16.mxu0 0
    %1312 = vmatpush2.bf16.msra.mxu0 0
    %1313 = vmatprep.mubr.bf16.mxu0 0
    %1314 = vmatmul.mubr.bf16.gmra.mxu0 %v1272
    %v1315 = vpop.f32.mrf.mxu0
    %v1316 = vadd.f32 0.0, %v1315
    %v1317 = vpop.f32.mrf.mxu0
    %v1318 = vpop.f32.mrf.mxu0
    %v1319 = vadd.f32 0.0, %v1318
    %v1320 = vpop.f32.mrf.mxu0
    %1321 = vmatprep.mubr.bf16.mxu0 0
    %1322 = vmatmul.mubr.bf16.gmra.mxu0 %v1275
    %v1323 = vpop.f32.mrf.mxu0
    %v1324 = vadd.f32 0.0, %v1323
    %v1325 = vpop.f32.mrf.mxu0
    %v1326 = vpop.f32.mrf.mxu0
    %v1327 = vpop.f32.mrf.mxu0
    %1328 = vdwg.mxu0
    %1329 = vrot.lane.b32.xlu0 %v394, 64
    %v1330 = vpop.permute.xlu0 %1329
    %1331 = vrot.lane.b32.xlu0 %v395, 64
    %v1332 = vpop.permute.xlu0 %1331
    %v1335 = vsel %vm985, %v1252, 0
    %v1338 = vsel %vm985, %v1253, 0
    %v1341 = vsel %vm1277, %v1332, 0
    %1343 = vmatprep.subr.bf16.mxu0 0
    %1344 = vmatpush1.bf16.msra.mxu0 0
    %1345 = vmatprep.subr.bf16.mxu0 0
    %1346 = vmatpush1.bf16.msra.mxu0 0
    %1347 = vmatprep.subr.bf16.mxu0 0
    %1348 = vmatpush1.bf16.msra.mxu0 0
    %1349 = vmatprep.subr.bf16.mxu0 0
    %1350 = vmatpush1.bf16.msra.mxu0 0
    %1351 = vmatprep.subr.bf16.mxu0 0
    %1352 = vmatpush1.bf16.msra.mxu0 0
    %1353 = vmatprep.subr.bf16.mxu0 0
    %1354 = vmatpush1.bf16.msra.mxu0 0
    %1355 = vmatprep.subr.bf16.mxu0 0
    %1356 = vmatpush1.bf16.msra.mxu0 %v1341
    %1357 = vmatprep.subr.bf16.mxu0 0
    %1358 = vmatpush1.bf16.msra.mxu0 %v1330
    %1359 = vmatprep.subr.bf16.mxu0 0
    %1360 = vmatpush2.bf16.msra.mxu0 0
    %1361 = vmatprep.subr.bf16.mxu0 0
    %1362 = vmatpush2.bf16.msra.mxu0 0
    %1363 = vmatprep.subr.bf16.mxu0 0
    %1364 = vmatpush2.bf16.msra.mxu0 0
    %1365 = vmatprep.subr.bf16.mxu0 0
    %1366 = vmatpush2.bf16.msra.mxu0 0
    %1367 = vmatprep.subr.bf16.mxu0 0
    %1368 = vmatpush2.bf16.msra.mxu0 0
    %1369 = vmatprep.subr.bf16.mxu0 0
    %1370 = vmatpush2.bf16.msra.mxu0 0
    %1371 = vmatprep.subr.bf16.mxu0 0
    %1372 = vmatpush2.bf16.msra.mxu0 0
    %1373 = vmatprep.subr.bf16.mxu0 0
    %1374 = vmatpush2.bf16.msra.mxu0 0
    %1375 = vmatprep.mubr.bf16.mxu0 0
    %1376 = vmatmul.mubr.bf16.gmra.mxu0 %v1335
    %v1377 = vpop.f32.mrf.mxu0
    %v1378 = vadd.f32 0.0, %v1377
    %v1379 = vpop.f32.mrf.mxu0
    %v1380 = vpop.f32.mrf.mxu0
    %v1381 = vadd.f32 0.0, %v1380
    %v1382 = vpop.f32.mrf.mxu0
    %1383 = vmatprep.mubr.bf16.mxu0 0
    %1384 = vmatmul.mubr.bf16.gmra.mxu0 %v1338
    %v1385 = vpop.f32.mrf.mxu0
    %v1386 = vadd.f32 0.0, %v1385
    %v1387 = vpop.f32.mrf.mxu0
    %v1388 = vpop.f32.mrf.mxu0
    %v1389 = vpop.f32.mrf.mxu0
    %1390 = vdwg.mxu0
    %1391 = vrot.lane.b32.xlu0 %v396, 64
    %v1392 = vpop.permute.xlu0 %1391
    %1393 = vrot.lane.b32.xlu0 %v397, 64
    %v1394 = vpop.permute.xlu0 %1393
    %v1397 = vsel %vm985, %v1254, 0
    %v1400 = vsel %vm985, %v1255, 0
    %v1403 = vsel %vm1277, %v1394, 0
    %1405 = vmatprep.subr.bf16.mxu0 0
    %1406 = vmatpush1.bf16.msra.mxu0 0
    %1407 = vmatprep.subr.bf16.mxu0 0
    %1408 = vmatpush1.bf16.msra.mxu0 0
    %1409 = vmatprep.subr.bf16.mxu0 0
    %1410 = vmatpush1.bf16.msra.mxu0 0
    %1411 = vmatprep.subr.bf16.mxu0 0
    %1412 = vmatpush1.bf16.msra.mxu0 0
    %1413 = vmatprep.subr.bf16.mxu0 0
    %1414 = vmatpush1.bf16.msra.mxu0 0
    %1415 = vmatprep.subr.bf16.mxu0 0
    %1416 = vmatpush1.bf16.msra.mxu0 0
    %1417 = vmatprep.subr.bf16.mxu0 0
    %1418 = vmatpush1.bf16.msra.mxu0 %v1403
    %1419 = vmatprep.subr.bf16.mxu0 0
    %1420 = vmatpush1.bf16.msra.mxu0 %v1392
    %1421 = vmatprep.subr.bf16.mxu0 0
    %1422 = vmatpush2.bf16.msra.mxu0 0
    %1423 = vmatprep.subr.bf16.mxu0 0
    %1424 = vmatpush2.bf16.msra.mxu0 0
    %1425 = vmatprep.subr.bf16.mxu0 0
    %1426 = vmatpush2.bf16.msra.mxu0 0
    %1427 = vmatprep.subr.bf16.mxu0 0
    %1428 = vmatpush2.bf16.msra.mxu0 0
    %1429 = vmatprep.subr.bf16.mxu0 0
    %1430 = vmatpush2.bf16.msra.mxu0 0
    %1431 = vmatprep.subr.bf16.mxu0 0
    %1432 = vmatpush2.bf16.msra.mxu0 0
    %1433 = vmatprep.subr.bf16.mxu0 0
    %1434 = vmatpush2.bf16.msra.mxu0 0
    %1435 = vmatprep.subr.bf16.mxu0 0
    %1436 = vmatpush2.bf16.msra.mxu0 0
    %1437 = vmatprep.mubr.bf16.mxu0 0
    %1438 = vmatmul.mubr.bf16.gmra.mxu0 %v1397
    %v1439 = vpop.f32.mrf.mxu0
    %v1440 = vadd.f32 0.0, %v1439
    %v1441 = vpop.f32.mrf.mxu0
    %v1442 = vpop.f32.mrf.mxu0
    %v1443 = vadd.f32 0.0, %v1442
    %v1444 = vpop.f32.mrf.mxu0
    %1445 = vmatprep.mubr.bf16.mxu0 0
    %1446 = vmatmul.mubr.bf16.gmra.mxu0 %v1400
    %v1447 = vpop.f32.mrf.mxu0
    %v1448 = vadd.f32 0.0, %v1447
    %v1449 = vpop.f32.mrf.mxu0
    %v1450 = vpop.f32.mrf.mxu0
    %v1451 = vpop.f32.mrf.mxu0
    %1452 = vdwg.mxu0
    %1453 = vrot.lane.b32.xlu0 %v398, 64
    %v1454 = vpop.permute.xlu0 %1453
    %1455 = vrot.lane.b32.xlu0 %v399, 64
    %v1456 = vpop.permute.xlu0 %1455
    %v1459 = vsel %vm985, %v1256, 0
    %v1462 = vsel %vm985, %v1257, 0
    %v1465 = vsel %vm1277, %v1456, 0
    %1467 = vmatprep.subr.bf16.mxu0 0
    %1468 = vmatpush1.bf16.msra.mxu0 0
    %1469 = vmatprep.subr.bf16.mxu0 0
    %1470 = vmatpush1.bf16.msra.mxu0 0
    %1471 = vmatprep.subr.bf16.mxu0 0
    %1472 = vmatpush1.bf16.msra.mxu0 0
    %1473 = vmatprep.subr.bf16.mxu0 0
    %1474 = vmatpush1.bf16.msra.mxu0 0
    %1475 = vmatprep.subr.bf16.mxu0 0
    %1476 = vmatpush1.bf16.msra.mxu0 0
    %1477 = vmatprep.subr.bf16.mxu0 0
    %1478 = vmatpush1.bf16.msra.mxu0 0
    %1479 = vmatprep.subr.bf16.mxu0 0
    %1480 = vmatpush1.bf16.msra.mxu0 %v1465
    %1481 = vmatprep.subr.bf16.mxu0 0
    %1482 = vmatpush1.bf16.msra.mxu0 %v1454
    %1483 = vmatprep.subr.bf16.mxu0 0
    %1484 = vmatpush2.bf16.msra.mxu0 0
    %1485 = vmatprep.subr.bf16.mxu0 0
    %1486 = vmatpush2.bf16.msra.mxu0 0
    %1487 = vmatprep.subr.bf16.mxu0 0
    %1488 = vmatpush2.bf16.msra.mxu0 0
    %1489 = vmatprep.subr.bf16.mxu0 0
    %1490 = vmatpush2.bf16.msra.mxu0 0
    %1491 = vmatprep.subr.bf16.mxu0 0
    %1492 = vmatpush2.bf16.msra.mxu0 0
    %1493 = vmatprep.subr.bf16.mxu0 0
    %1494 = vmatpush2.bf16.msra.mxu0 0
    %1495 = vmatprep.subr.bf16.mxu0 0
    %1496 = vmatpush2.bf16.msra.mxu0 0
    %1497 = vmatprep.subr.bf16.mxu0 0
    %1498 = vmatpush2.bf16.msra.mxu0 0
    %1499 = vmatprep.mubr.bf16.mxu0 0
    %1500 = vmatmul.mubr.bf16.gmra.mxu0 %v1459
    %v1501 = vpop.f32.mrf.mxu0
    %v1502 = vadd.f32 0.0, %v1501
    %v1503 = vpop.f32.mrf.mxu0
    %v1504 = vpop.f32.mrf.mxu0
    %v1505 = vadd.f32 0.0, %v1504
    %v1506 = vpop.f32.mrf.mxu0
    %1507 = vmatprep.mubr.bf16.mxu0 0
    %1508 = vmatmul.mubr.bf16.gmra.mxu0 %v1462
    %v1509 = vpop.f32.mrf.mxu0
    %v1510 = vadd.f32 0.0, %v1509
    %v1511 = vpop.f32.mrf.mxu0
    %v1512 = vpop.f32.mrf.mxu0
    %v1513 = vpop.f32.mrf.mxu0
    %1514 = vdwg.mxu0
    %1515 = vrot.lane.b32.xlu0 %v400, 64
    %v1516 = vpop.permute.xlu0 %1515
    %1517 = vrot.lane.b32.xlu0 %v401, 64
    %v1518 = vpop.permute.xlu0 %1517
    %v1521 = vsel %vm985, %v1258, 0
    %v1524 = vsel %vm985, %v1259, 0
    %v1527 = vsel %vm1277, %v1518, 0
    %1529 = vmatprep.subr.bf16.mxu0 0
    %1530 = vmatpush1.bf16.msra.mxu0 0
    %1531 = vmatprep.subr.bf16.mxu0 0
    %1532 = vmatpush1.bf16.msra.mxu0 0
    %1533 = vmatprep.subr.bf16.mxu0 0
    %1534 = vmatpush1.bf16.msra.mxu0 0
    %1535 = vmatprep.subr.bf16.mxu0 0
    %1536 = vmatpush1.bf16.msra.mxu0 0
    %1537 = vmatprep.subr.bf16.mxu0 0
    %1538 = vmatpush1.bf16.msra.mxu0 0
    %1539 = vmatprep.subr.bf16.mxu0 0
    %1540 = vmatpush1.bf16.msra.mxu0 0
    %1541 = vmatprep.subr.bf16.mxu0 0
    %1542 = vmatpush1.bf16.msra.mxu0 %v1527
    %1543 = vmatprep.subr.bf16.mxu0 0
    %1544 = vmatpush1.bf16.msra.mxu0 %v1516
    %1545 = vmatprep.subr.bf16.mxu0 0
    %1546 = vmatpush2.bf16.msra.mxu0 0
    %1547 = vmatprep.subr.bf16.mxu0 0
    %1548 = vmatpush2.bf16.msra.mxu0 0
    %1549 = vmatprep.subr.bf16.mxu0 0
    %1550 = vmatpush2.bf16.msra.mxu0 0
    %1551 = vmatprep.subr.bf16.mxu0 0
    %1552 = vmatpush2.bf16.msra.mxu0 0
    %1553 = vmatprep.subr.bf16.mxu0 0
    %1554 = vmatpush2.bf16.msra.mxu0 0
    %1555 = vmatprep.subr.bf16.mxu0 0
    %1556 = vmatpush2.bf16.msra.mxu0 0
    %1557 = vmatprep.subr.bf16.mxu0 0
    %1558 = vmatpush2.bf16.msra.mxu0 0
    %1559 = vmatprep.subr.bf16.mxu0 0
    %1560 = vmatpush2.bf16.msra.mxu0 0
    %1561 = vmatprep.mubr.bf16.mxu0 0
    %1562 = vmatmul.mubr.bf16.gmra.mxu0 %v1521
    %v1563 = vpop.f32.mrf.mxu0
    %v1564 = vadd.f32 0.0, %v1563
    %v1565 = vpop.f32.mrf.mxu0
    %v1566 = vpop.f32.mrf.mxu0
    %v1567 = vadd.f32 0.0, %v1566
    %v1568 = vpop.f32.mrf.mxu0
    %1569 = vmatprep.mubr.bf16.mxu0 0
    %1570 = vmatmul.mubr.bf16.gmra.mxu0 %v1524
    %v1571 = vpop.f32.mrf.mxu0
    %v1572 = vadd.f32 0.0, %v1571
    %v1573 = vpop.f32.mrf.mxu0
    %v1574 = vpop.f32.mrf.mxu0
    %v1575 = vpop.f32.mrf.mxu0
    %1576 = vdwg.mxu0
    %1577 = vrot.lane.b32.xlu0 %v402, 64
    %v1578 = vpop.permute.xlu0 %1577
    %1579 = vrot.lane.b32.xlu0 %v403, 64
    %v1580 = vpop.permute.xlu0 %1579
    %v1583 = vsel %vm985, %v1260, 0
    %v1586 = vsel %vm985, %v1261, 0
    %v1589 = vsel %vm1277, %v1580, 0
    %1591 = vmatprep.subr.bf16.mxu0 0
    %1592 = vmatpush1.bf16.msra.mxu0 0
    %1593 = vmatprep.subr.bf16.mxu0 0
    %1594 = vmatpush1.bf16.msra.mxu0 0
    %1595 = vmatprep.subr.bf16.mxu0 0
    %1596 = vmatpush1.bf16.msra.mxu0 0
    %1597 = vmatprep.subr.bf16.mxu0 0
    %1598 = vmatpush1.bf16.msra.mxu0 0
    %1599 = vmatprep.subr.bf16.mxu0 0
    %1600 = vmatpush1.bf16.msra.mxu0 0
    %1601 = vmatprep.subr.bf16.mxu0 0
    %1602 = vmatpush1.bf16.msra.mxu0 0
    %1603 = vmatprep.subr.bf16.mxu0 0
    %1604 = vmatpush1.bf16.msra.mxu0 %v1589
    %1605 = vmatprep.subr.bf16.mxu0 0
    %1606 = vmatpush1.bf16.msra.mxu0 %v1578
    %1607 = vmatprep.subr.bf16.mxu0 0
    %1608 = vmatpush2.bf16.msra.mxu0 0
    %1609 = vmatprep.subr.bf16.mxu0 0
    %1610 = vmatpush2.bf16.msra.mxu0 0
    %1611 = vmatprep.subr.bf16.mxu0 0
    %1612 = vmatpush2.bf16.msra.mxu0 0
    %1613 = vmatprep.subr.bf16.mxu0 0
    %1614 = vmatpush2.bf16.msra.mxu0 0
    %1615 = vmatprep.subr.bf16.mxu0 0
    %1616 = vmatpush2.bf16.msra.mxu0 0
    %1617 = vmatprep.subr.bf16.mxu0 0
    %1618 = vmatpush2.bf16.msra.mxu0 0
    %1619 = vmatprep.subr.bf16.mxu0 0
    %1620 = vmatpush2.bf16.msra.mxu0 0
    %1621 = vmatprep.subr.bf16.mxu0 0
    %1622 = vmatpush2.bf16.msra.mxu0 0
    %1623 = vmatprep.mubr.bf16.mxu0 0
    %1624 = vmatmul.mubr.bf16.gmra.mxu0 %v1583
    %v1625 = vpop.f32.mrf.mxu0
    %v1626 = vadd.f32 0.0, %v1625
    %v1627 = vpop.f32.mrf.mxu0
    %v1628 = vpop.f32.mrf.mxu0
    %v1629 = vadd.f32 0.0, %v1628
    %v1630 = vpop.f32.mrf.mxu0
    %1631 = vmatprep.mubr.bf16.mxu0 0
    %1632 = vmatmul.mubr.bf16.gmra.mxu0 %v1586
    %v1633 = vpop.f32.mrf.mxu0
    %v1634 = vadd.f32 0.0, %v1633
    %v1635 = vpop.f32.mrf.mxu0
    %v1636 = vpop.f32.mrf.mxu0
    %v1637 = vpop.f32.mrf.mxu0
    %1638 = vdwg.mxu0
    %1639 = vrot.lane.b32.xlu0 %v404, 64
    %v1640 = vpop.permute.xlu0 %1639
    %1641 = vrot.lane.b32.xlu0 %v405, 64
    %v1642 = vpop.permute.xlu0 %1641
    %v1645 = vsel %vm985, %v1262, 0
    %v1648 = vsel %vm985, %v1263, 0
    %v1651 = vsel %vm1277, %v1642, 0
    %1653 = vmatprep.subr.bf16.mxu0 0
    %1654 = vmatpush1.bf16.msra.mxu0 0
    %1655 = vmatprep.subr.bf16.mxu0 0
    %1656 = vmatpush1.bf16.msra.mxu0 0
    %1657 = vmatprep.subr.bf16.mxu0 0
    %1658 = vmatpush1.bf16.msra.mxu0 0
    %1659 = vmatprep.subr.bf16.mxu0 0
    %1660 = vmatpush1.bf16.msra.mxu0 0
    %1661 = vmatprep.subr.bf16.mxu0 0
    %1662 = vmatpush1.bf16.msra.mxu0 0
    %1663 = vmatprep.subr.bf16.mxu0 0
    %1664 = vmatpush1.bf16.msra.mxu0 0
    %1665 = vmatprep.subr.bf16.mxu0 0
    %1666 = vmatpush1.bf16.msra.mxu0 %v1651
    %1667 = vmatprep.subr.bf16.mxu0 0
    %1668 = vmatpush1.bf16.msra.mxu0 %v1640
    %1669 = vmatprep.subr.bf16.mxu0 0
    %1670 = vmatpush2.bf16.msra.mxu0 0
    %1671 = vmatprep.subr.bf16.mxu0 0
    %1672 = vmatpush2.bf16.msra.mxu0 0
    %1673 = vmatprep.subr.bf16.mxu0 0
    %1674 = vmatpush2.bf16.msra.mxu0 0
    %1675 = vmatprep.subr.bf16.mxu0 0
    %1676 = vmatpush2.bf16.msra.mxu0 0
    %1677 = vmatprep.subr.bf16.mxu0 0
    %1678 = vmatpush2.bf16.msra.mxu0 0
    %1679 = vmatprep.subr.bf16.mxu0 0
    %1680 = vmatpush2.bf16.msra.mxu0 0
    %1681 = vmatprep.subr.bf16.mxu0 0
    %1682 = vmatpush2.bf16.msra.mxu0 0
    %1683 = vmatprep.subr.bf16.mxu0 0
    %1684 = vmatpush2.bf16.msra.mxu0 0
    %1685 = vmatprep.mubr.bf16.mxu0 0
    %1686 = vmatmul.mubr.bf16.gmra.mxu0 %v1645
    %v1687 = vpop.f32.mrf.mxu0
    %v1688 = vadd.f32 0.0, %v1687
    %v1689 = vpop.f32.mrf.mxu0
    %v1690 = vpop.f32.mrf.mxu0
    %v1691 = vadd.f32 0.0, %v1690
    %v1692 = vpop.f32.mrf.mxu0
    %1693 = vmatprep.mubr.bf16.mxu0 0
    %1694 = vmatmul.mubr.bf16.gmra.mxu0 %v1648
    %v1695 = vpop.f32.mrf.mxu0
    %v1696 = vadd.f32 0.0, %v1695
    %v1697 = vpop.f32.mrf.mxu0
    %v1698 = vpop.f32.mrf.mxu0
    %v1699 = vpop.f32.mrf.mxu0
    %1700 = vdwg.mxu0
    %1701 = vrot.lane.b32.xlu0 %v406, 64
    %v1702 = vpop.permute.xlu0 %1701
    %1703 = vrot.lane.b32.xlu0 %v407, 64
    %v1704 = vpop.permute.xlu0 %1703
    %v1707 = vsel %vm985, %v1264, 0
    %v1710 = vsel %vm985, %v1265, 0
    %v1713 = vsel %vm1277, %v1704, 0
    %1715 = vmatprep.subr.bf16.mxu0 0
    %1716 = vmatpush1.bf16.msra.mxu0 0
    %1717 = vmatprep.subr.bf16.mxu0 0
    %1718 = vmatpush1.bf16.msra.mxu0 0
    %1719 = vmatprep.subr.bf16.mxu0 0
    %1720 = vmatpush1.bf16.msra.mxu0 0
    %1721 = vmatprep.subr.bf16.mxu0 0
    %1722 = vmatpush1.bf16.msra.mxu0 0
    %1723 = vmatprep.subr.bf16.mxu0 0
    %1724 = vmatpush1.bf16.msra.mxu0 0
    %1725 = vmatprep.subr.bf16.mxu0 0
    %1726 = vmatpush1.bf16.msra.mxu0 0
    %1727 = vmatprep.subr.bf16.mxu0 0
    %1728 = vmatpush1.bf16.msra.mxu0 %v1713
    %1729 = vmatprep.subr.bf16.mxu0 0
    %1730 = vmatpush1.bf16.msra.mxu0 %v1702
    %1731 = vmatprep.subr.bf16.mxu0 0
    %1732 = vmatpush2.bf16.msra.mxu0 0
    %1733 = vmatprep.subr.bf16.mxu0 0
    %1734 = vmatpush2.bf16.msra.mxu0 0
    %1735 = vmatprep.subr.bf16.mxu0 0
    %1736 = vmatpush2.bf16.msra.mxu0 0
    %1737 = vmatprep.subr.bf16.mxu0 0
    %1738 = vmatpush2.bf16.msra.mxu0 0
    %1739 = vmatprep.subr.bf16.mxu0 0
    %1740 = vmatpush2.bf16.msra.mxu0 0
    %1741 = vmatprep.subr.bf16.mxu0 0
    %1742 = vmatpush2.bf16.msra.mxu0 0
    %1743 = vmatprep.subr.bf16.mxu0 0
    %1744 = vmatpush2.bf16.msra.mxu0 0
    %1745 = vmatprep.subr.bf16.mxu0 0
    %1746 = vmatpush2.bf16.msra.mxu0 0
    %1747 = vmatprep.mubr.bf16.mxu0 0
    %1748 = vmatmul.mubr.bf16.gmra.mxu0 %v1707
    %v1749 = vpop.f32.mrf.mxu0
    %v1750 = vadd.f32 0.0, %v1749
    %v1751 = vpop.f32.mrf.mxu0
    %v1752 = vpop.f32.mrf.mxu0
    %v1753 = vadd.f32 0.0, %v1752
    %v1754 = vpop.f32.mrf.mxu0
    %1755 = vmatprep.mubr.bf16.mxu0 0
    %1756 = vmatmul.mubr.bf16.gmra.mxu0 %v1710
    %v1757 = vpop.f32.mrf.mxu0
    %v1758 = vadd.f32 0.0, %v1757
    %v1759 = vpop.f32.mrf.mxu0
    %v1760 = vpop.f32.mrf.mxu0
    %v1761 = vpop.f32.mrf.mxu0
    %1762 = vdwg.mxu0
    %1766 = vrot.lane.b32.xlu0 %v1378, 8
    %v1767 = vpop.permute.xlu0 %1766
    %1768 = vrot.lane.b32.xlu0 %v1381, 8
    %v1769 = vpop.permute.xlu0 %1768
    %1770 = vrot.lane.b32.xlu0 %v1386, 8
    %v1771 = vpop.permute.xlu0 %1770
    %1778 = vrot.lane.b32.xlu0 %v1440, 16
    %v1779 = vpop.permute.xlu0 %1778
    %1780 = vrot.lane.b32.xlu0 %v1443, 16
    %v1781 = vpop.permute.xlu0 %1780
    %1782 = vrot.lane.b32.xlu0 %v1448, 16
    %v1783 = vpop.permute.xlu0 %1782
    %1790 = vrot.lane.b32.xlu0 %v1502, 24
    %v1791 = vpop.permute.xlu0 %1790
    %1792 = vrot.lane.b32.xlu0 %v1505, 24
    %v1793 = vpop.permute.xlu0 %1792
    %1794 = vrot.lane.b32.xlu0 %v1510, 24
    %v1795 = vpop.permute.xlu0 %1794
    %v1799 = vsel %vm414, %v1316, %v1767
    %v1800 = vsel %vm414, %v1319, %v1769
    %v1801 = vsel %vm414, %v1324, %v1771
    %vm1802 = vcmask 130048
    %v1803 = vsel %vm1802, %v1799, %v1779
    %v1804 = vsel %vm1802, %v1800, %v1781
    %v1805 = vsel %vm1802, %v1801, %v1783
    %v1806 = vsel %vm985, %v1803, %v1791
    %v1807 = vsel %vm985, %v1804, %v1793
    %v1808 = vsel %vm985, %v1805, %v1795
    %1812 = vrot.lane.b32.xlu0 %v1626, 8
    %v1813 = vpop.permute.xlu0 %1812
    %1814 = vrot.lane.b32.xlu0 %v1629, 8
    %v1815 = vpop.permute.xlu0 %1814
    %1816 = vrot.lane.b32.xlu0 %v1634, 8
    %v1817 = vpop.permute.xlu0 %1816
    %1824 = vrot.lane.b32.xlu0 %v1688, 16
    %v1825 = vpop.permute.xlu0 %1824
    %1826 = vrot.lane.b32.xlu0 %v1691, 16
    %v1827 = vpop.permute.xlu0 %1826
    %1828 = vrot.lane.b32.xlu0 %v1696, 16
    %v1829 = vpop.permute.xlu0 %1828
    %1836 = vrot.lane.b32.xlu0 %v1750, 24
    %v1837 = vpop.permute.xlu0 %1836
    %1838 = vrot.lane.b32.xlu0 %v1753, 24
    %v1839 = vpop.permute.xlu0 %1838
    %1840 = vrot.lane.b32.xlu0 %v1758, 24
    %v1841 = vpop.permute.xlu0 %1840
    %v1845 = vsel %vm414, %v1564, %v1813
    %v1846 = vsel %vm414, %v1567, %v1815
    %v1847 = vsel %vm414, %v1572, %v1817
    %v1848 = vsel %vm1802, %v1845, %v1825
    %v1849 = vsel %vm1802, %v1846, %v1827
    %v1850 = vsel %vm1802, %v1847, %v1829
    %v1851 = vsel %vm985, %v1848, %v1837
    %v1852 = vsel %vm985, %v1849, %v1839
    %v1853 = vsel %vm985, %v1850, %v1841
    %v1854 = vpack.c.bf16 %v1807, %v1806
    %v1855 = vpack.c.bf16 %v1851, %v1808
    %v1856 = vpack.c.bf16 %v1853, %v1852
    %v1857 = vld [vmem:[#allocation2 + $0x28] sm:$0xf]
    %v1858 = vld [vmem:[#allocation2 + $0x2c] sm:$0xf]
    %v1859 = vld [vmem:[#allocation2 + $0x30] sm:$0xf]
    %v1860 = vld [vmem:[#allocation2 + $0x34] sm:$0xf]
    %v1861 = vld [vmem:[%s2 + $0x33] sm:$0x1]
    %v1862 = vlaneseq
    %v1863 = vshrl.u32 %v1862, 7
    %v1864 = vsub.s32 0, %v1863
    %v1865 = vrot.slane %v1861, %v1864
    %v1870 = vunpack.c.l.b16 %v1857
    %v1871 = vunpack.c.l.b16 %v1858
    %v1872 = vunpack.c.l.b16 %v1859
    %v1873 = vunpack.c.l.b16 %v1860
    %v1874 = vpack.c.b16 %v1871, %v1870
    %v1875 = vpack.c.b16 %v1873, %v1872
    %v1879 = vsel %vm142, %v1854, 0
    %v1882 = vsel %vm142, %v1855, 0
    %v1885 = vsel %vm142, %v1856, 0
    %1887 = vmatprep.subr.bf16.mxu0 0
    %1888 = vmatpush1.bf16.msra.mxu0 0
    %1889 = vmatprep.subr.bf16.mxu0 0
    %1890 = vmatpush1.bf16.msra.mxu0 0
    %1891 = vmatprep.subr.bf16.mxu0 0
    %1892 = vmatpush1.bf16.msra.mxu0 0
    %1893 = vmatprep.subr.bf16.mxu0 0
    %1894 = vmatpush1.bf16.msra.mxu0 0
    %1895 = vmatprep.subr.bf16.mxu0 0
    %1896 = vmatpush1.bf16.msra.mxu0 0
    %1897 = vmatprep.subr.bf16.mxu0 0
    %1898 = vmatpush1.bf16.msra.mxu0 0
    %1899 = vmatprep.subr.bf16.mxu0 0
    %1900 = vmatpush1.bf16.msra.mxu0 %v1875
    %1901 = vmatprep.subr.bf16.mxu0 0
    %1902 = vmatpush1.bf16.msra.mxu0 %v1874
    %1903 = vmatprep.subr.bf16.mxu0 0
    %1904 = vmatpush2.bf16.msra.mxu0 0
    %1905 = vmatprep.subr.bf16.mxu0 0
    %1906 = vmatpush2.bf16.msra.mxu0 0
    %1907 = vmatprep.subr.bf16.mxu0 0
    %1908 = vmatpush2.bf16.msra.mxu0 0
    %1909 = vmatprep.subr.bf16.mxu0 0
    %1910 = vmatpush2.bf16.msra.mxu0 0
    %1911 = vmatprep.subr.bf16.mxu0 0
    %1912 = vmatpush2.bf16.msra.mxu0 0
    %1913 = vmatprep.subr.bf16.mxu0 0
    %1914 = vmatpush2.bf16.msra.mxu0 0
    %1915 = vmatprep.subr.bf16.mxu0 0
    %1916 = vmatpush2.bf16.msra.mxu0 0
    %1917 = vmatprep.subr.bf16.mxu0 0
    %1918 = vmatpush2.bf16.msra.mxu0 0
    %1919 = vmatprep.mubr.bf16.mxu0 0
    %1920 = vmatmul.mubr.bf16.gmra.mxu0 %v1879
    %v1921 = vpop.f32.mrf.mxu0
    %v1922 = vadd.f32 %v1865, %v1921
    %v1923 = vpop.f32.mrf.mxu0
    %v1924 = vpop.f32.mrf.mxu0
    %v1925 = vadd.f32 %v1865, %v1924
    %v1926 = vpop.f32.mrf.mxu0
    %1927 = vmatprep.mubr.bf16.mxu0 0
    %1928 = vmatmul.mubr.bf16.gmra.mxu0 %v1882
    %v1929 = vpop.f32.mrf.mxu0
    %v1930 = vadd.f32 %v1865, %v1929
    %v1931 = vpop.f32.mrf.mxu0
    %v1932 = vpop.f32.mrf.mxu0
    %v1933 = vadd.f32 %v1865, %v1932
    %v1934 = vpop.f32.mrf.mxu0
    %1935 = vmatprep.mubr.bf16.mxu0 0
    %1936 = vmatmul.mubr.bf16.gmra.mxu0 %v1885
    %v1937 = vpop.f32.mrf.mxu0
    %v1938 = vadd.f32 %v1865, %v1937
    %v1939 = vpop.f32.mrf.mxu0
    %v1940 = vpop.f32.mrf.mxu0
    %v1941 = vadd.f32 %v1865, %v1940
    %v1942 = vpop.f32.mrf.mxu0
    %1943 = vdwg.mxu0
    %v1944 = vadd.f32 %v114, %v1922
    %v1945 = vadd.f32 %v117, %v1925
    %v1946 = vadd.f32 %v122, %v1930
    %v1947 = vadd.f32 %v125, %v1933
    %v1948 = vadd.f32 %v130, %v1938
    %v1949 = vadd.f32 %v133, %v1941
    %v1950 = vld [vmem:[%s2 + $0x34] sm:$0x1]
    %v1951 = vld [vmem:[%s2 + $0x35] sm:$0x1]
    %v1952 = vsel %vm142, %v1944, 0.0
    %1953 = vadd.xlane.f32.xlu0 %v1952
    %v1954 = vpop.xlane.xlu0 %1953
    %v1955 = vsel %vm142, %v1945, 0.0
    %1956 = vadd.xlane.f32.xlu0 %v1955
    %v1957 = vpop.xlane.xlu0 %1956
    %v1958 = vsel %vm142, %v1946, 0.0
    %1959 = vadd.xlane.f32.xlu0 %v1958
    %v1960 = vpop.xlane.xlu0 %1959
    %v1961 = vsel %vm142, %v1947, 0.0
    %1962 = vadd.xlane.f32.xlu0 %v1961
    %v1963 = vpop.xlane.xlu0 %1962
    %v1964 = vsel %vm142, %v1948, 0.0
    %1965 = vadd.xlane.f32.xlu0 %v1964
    %v1966 = vpop.xlane.xlu0 %1965
    %v1967 = vsel %vm142, %v1949, 0.0
    %1968 = vadd.xlane.f32.xlu0 %v1967
    %v1969 = vpop.xlane.xlu0 %1968
    %v1970 = vmul.f32 %v1954, %v161
    %v1971 = vmul.f32 %v1957, %v161
    %v1972 = vmul.f32 %v1960, %v161
    %v1973 = vmul.f32 %v1963, %v161
    %v1974 = vmul.f32 %v1966, %v161
    %v1975 = vmul.f32 %v1969, %v161
    %v1976 = vsub.f32 %v1944, %v1970
    %v1977 = vsub.f32 %v1945, %v1971
    %v1978 = vsub.f32 %v1946, %v1972
    %v1979 = vsub.f32 %v1947, %v1973
    %v1980 = vsub.f32 %v1948, %v1974
    %v1981 = vsub.f32 %v1949, %v1975
    %v1982 = vmul.f32 %v1976, %v1976
    %v1983 = vmul.f32 %v1977, %v1977
    %v1984 = vmul.f32 %v1978, %v1978
    %v1985 = vmul.f32 %v1979, %v1979
    %v1986 = vmul.f32 %v1980, %v1980
    %v1987 = vmul.f32 %v1981, %v1981
    %v1988 = vsel %vm142, %v1982, 0.0
    %1989 = vadd.xlane.f32.xlu0 %v1988
    %v1990 = vpop.xlane.xlu0 %1989
    %v1991 = vsel %vm142, %v1983, 0.0
    %1992 = vadd.xlane.f32.xlu0 %v1991
    %v1993 = vpop.xlane.xlu0 %1992
    %v1994 = vsel %vm142, %v1984, 0.0
    %1995 = vadd.xlane.f32.xlu0 %v1994
    %v1996 = vpop.xlane.xlu0 %1995
    %v1997 = vsel %vm142, %v1985, 0.0
    %1998 = vadd.xlane.f32.xlu0 %v1997
    %v1999 = vpop.xlane.xlu0 %1998
    %v2000 = vsel %vm142, %v1986, 0.0
    %2001 = vadd.xlane.f32.xlu0 %v2000
    %v2002 = vpop.xlane.xlu0 %2001
    %v2003 = vsel %vm142, %v1987, 0.0
    %2004 = vadd.xlane.f32.xlu0 %v2003
    %v2005 = vpop.xlane.xlu0 %2004
    %v2006 = vmul.f32 %v1990, %v161
    %v2007 = vmul.f32 %v1993, %v161
    %v2008 = vmul.f32 %v1996, %v161
    %v2009 = vmul.f32 %v1999, %v161
    %v2010 = vmul.f32 %v2002, %v161
    %v2011 = vmul.f32 %v2005, %v161
    %v2012 = vadd.f32 %v2006, 1e-05
    %v2013 = vadd.f32 %v2007, 1e-05
    %v2014 = vadd.f32 %v2008, 1e-05
    %v2015 = vadd.f32 %v2009, 1e-05
    %v2016 = vadd.f32 %v2010, 1e-05
    %v2017 = vadd.f32 %v2011, 1e-05
    %v2018 = vrsqrt.pop %v2012
    %v2019 = vrsqrt.pop %v2013
    %v2020 = vrsqrt.pop %v2014
    %v2021 = vrsqrt.pop %v2015
    %v2022 = vrsqrt.pop %v2016
    %v2023 = vrsqrt.pop %v2017
    %v2024 = vmul.f32 %v1976, %v2018
    %v2025 = vmul.f32 %v1977, %v2019
    %v2026 = vmul.f32 %v1978, %v2020
    %v2027 = vmul.f32 %v1979, %v2021
    %v2028 = vmul.f32 %v1980, %v2022
    %v2029 = vmul.f32 %v1981, %v2023
    %v2030 = vlaneseq
    %v2031 = vshrl.u32 %v2030, 7
    %v2032 = vsub.s32 0, %v2031
    %v2033 = vrot.slane %v1950, %v2032
    %v2034 = vmul.f32 %v2024, %v2033
    %v2035 = vmul.f32 %v2025, %v2033
    %v2036 = vmul.f32 %v2026, %v2033
    %v2037 = vmul.f32 %v2027, %v2033
    %v2038 = vmul.f32 %v2028, %v2033
    %v2039 = vmul.f32 %v2029, %v2033
    %v2040 = vlaneseq
    %v2041 = vshrl.u32 %v2040, 7
    %v2042 = vsub.s32 0, %v2041
    %v2043 = vrot.slane %v1951, %v2042
    %v2044 = vadd.f32 %v2034, %v2043
    %v2045 = vadd.f32 %v2035, %v2043
    %v2046 = vadd.f32 %v2036, %v2043
    %v2047 = vadd.f32 %v2037, %v2043
    %v2048 = vadd.f32 %v2038, %v2043
    %v2049 = vadd.f32 %v2039, %v2043
    %v2050 = vpack.c.bf16 %v2045, %v2044
    %v2051 = vpack.c.bf16 %v2047, %v2046
    %v2052 = vpack.c.bf16 %v2049, %v2048
    %v2053 = vld [vmem:[#allocation2 + $0x38] sm:$0xf]
    %v2054 = vld [vmem:[#allocation2 + $0x3c] sm:$0xf]
    %v2055 = vld [vmem:[#allocation2 + $0x40] sm:$0xf]
    %v2056 = vld [vmem:[#allocation2 + $0x44] sm:$0xf]
    %v2057 = vld [vmem:[%s2 + $0x36] sm:$0x1]
    %v2058 = vlaneseq
    %v2059 = vshrl.u32 %v2058, 7
    %v2060 = vsub.s32 0, %v2059
    %v2061 = vrot.slane %v2057, %v2060
    %v2066 = vunpack.c.l.b16 %v2053
    %v2067 = vunpack.c.l.b16 %v2054
    %v2068 = vunpack.c.l.b16 %v2055
    %v2069 = vunpack.c.l.b16 %v2056
    %v2070 = vpack.c.b16 %v2067, %v2066
    %v2071 = vpack.c.b16 %v2069, %v2068
    %v2075 = vsel %vm142, %v2050, 0
    %v2078 = vsel %vm142, %v2051, 0
    %v2081 = vsel %vm142, %v2052, 0
    %2083 = vmatprep.subr.bf16.mxu0 0
    %2084 = vmatpush1.bf16.msra.mxu0 0
    %2085 = vmatprep.subr.bf16.mxu0 0
    %2086 = vmatpush1.bf16.msra.mxu0 0
    %2087 = vmatprep.subr.bf16.mxu0 0
    %2088 = vmatpush1.bf16.msra.mxu0 0
    %2089 = vmatprep.subr.bf16.mxu0 0
    %2090 = vmatpush1.bf16.msra.mxu0 0
    %2091 = vmatprep.subr.bf16.mxu0 0
    %2092 = vmatpush1.bf16.msra.mxu0 0
    %2093 = vmatprep.subr.bf16.mxu0 0
    %2094 = vmatpush1.bf16.msra.mxu0 0
    %2095 = vmatprep.subr.bf16.mxu0 0
    %2096 = vmatpush1.bf16.msra.mxu0 %v2071
    %2097 = vmatprep.subr.bf16.mxu0 0
    %2098 = vmatpush1.bf16.msra.mxu0 %v2070
    %2099 = vmatprep.subr.bf16.mxu0 0
    %2100 = vmatpush2.bf16.msra.mxu0 0
    %2101 = vmatprep.subr.bf16.mxu0 0
    %2102 = vmatpush2.bf16.msra.mxu0 0
    %2103 = vmatprep.subr.bf16.mxu0 0
    %2104 = vmatpush2.bf16.msra.mxu0 0
    %2105 = vmatprep.subr.bf16.mxu0 0
    %2106 = vmatpush2.bf16.msra.mxu0 0
    %2107 = vmatprep.subr.bf16.mxu0 0
    %2108 = vmatpush2.bf16.msra.mxu0 0
    %2109 = vmatprep.subr.bf16.mxu0 0
    %2110 = vmatpush2.bf16.msra.mxu0 0
    %2111 = vmatprep.subr.bf16.mxu0 0
    %2112 = vmatpush2.bf16.msra.mxu0 0
    %2113 = vmatprep.subr.bf16.mxu0 0
    %2114 = vmatpush2.bf16.msra.mxu0 0
    %2115 = vmatprep.mubr.bf16.mxu0 0
    %2116 = vmatmul.mubr.bf16.gmra.mxu0 %v2075
    %v2117 = vpop.f32.mrf.mxu0
    %v2118 = vadd.f32 %v2061, %v2117
    %v2119 = vpop.f32.mrf.mxu0
    %v2120 = vpop.f32.mrf.mxu0
    %v2121 = vadd.f32 %v2061, %v2120
    %v2122 = vpop.f32.mrf.mxu0
    %2123 = vmatprep.mubr.bf16.mxu0 0
    %2124 = vmatmul.mubr.bf16.gmra.mxu0 %v2078
    %v2125 = vpop.f32.mrf.mxu0
    %v2126 = vadd.f32 %v2061, %v2125
    %v2127 = vpop.f32.mrf.mxu0
    %v2128 = vpop.f32.mrf.mxu0
    %v2129 = vadd.f32 %v2061, %v2128
    %v2130 = vpop.f32.mrf.mxu0
    %2131 = vmatprep.mubr.bf16.mxu0 0
    %2132 = vmatmul.mubr.bf16.gmra.mxu0 %v2081
    %v2133 = vpop.f32.mrf.mxu0
    %v2134 = vadd.f32 %v2061, %v2133
    %v2135 = vpop.f32.mrf.mxu0
    %v2136 = vpop.f32.mrf.mxu0
    %v2137 = vadd.f32 %v2061, %v2136
    %v2138 = vpop.f32.mrf.mxu0
    %2139 = vdwg.mxu0
    %v2140 = vmul.f32 %v2118, %v2118
    %v2141 = vmul.f32 %v2121, %v2121
    %v2142 = vmul.f32 %v2126, %v2126
    %v2143 = vmul.f32 %v2129, %v2129
    %v2144 = vmul.f32 %v2134, %v2134
    %v2145 = vmul.f32 %v2137, %v2137
    %v2146 = vmul.f32 %v2118, %v2140
    %v2147 = vmul.f32 %v2121, %v2141
    %v2148 = vmul.f32 %v2126, %v2142
    %v2149 = vmul.f32 %v2129, %v2143
    %v2150 = vmul.f32 %v2134, %v2144
    %v2151 = vmul.f32 %v2137, %v2145
    %v2152 = vmul.f32 %v2146, 0.044715
    %v2153 = vmul.f32 %v2147, 0.044715
    %v2154 = vmul.f32 %v2148, 0.044715
    %v2155 = vmul.f32 %v2149, 0.044715
    %v2156 = vmul.f32 %v2150, 0.044715
    %v2157 = vmul.f32 %v2151, 0.044715
    %v2158 = vadd.f32 %v2118, %v2152
    %v2159 = vadd.f32 %v2121, %v2153
    %v2160 = vadd.f32 %v2126, %v2154
    %v2161 = vadd.f32 %v2129, %v2155
    %v2162 = vadd.f32 %v2134, %v2156
    %v2163 = vadd.f32 %v2137, %v2157
    %v2164 = vmul.f32 %v2158, 0.7978846
    %v2165 = vmul.f32 %v2159, 0.7978846
    %v2166 = vmul.f32 %v2160, 0.7978846
    %v2167 = vmul.f32 %v2161, 0.7978846
    %v2168 = vmul.f32 %v2162, 0.7978846
    %v2169 = vmul.f32 %v2163, 0.7978846
    %v2170 = vtanh.pop %v2164
    %v2171 = vtanh.pop %v2165
    %v2172 = vtanh.pop %v2166
    %v2173 = vtanh.pop %v2167
    %v2174 = vtanh.pop %v2168
    %v2175 = vtanh.pop %v2169
    %v2176 = vadd.f32 %v2170, 1.0
    %v2177 = vadd.f32 %v2171, 1.0
    %v2178 = vadd.f32 %v2172, 1.0
    %v2179 = vadd.f32 %v2173, 1.0
    %v2180 = vadd.f32 %v2174, 1.0
    %v2181 = vadd.f32 %v2175, 1.0
    %v2182 = vmul.f32 %v2176, 0.5
    %v2183 = vmul.f32 %v2177, 0.5
    %v2184 = vmul.f32 %v2178, 0.5
    %v2185 = vmul.f32 %v2179, 0.5
    %v2186 = vmul.f32 %v2180, 0.5
    %v2187 = vmul.f32 %v2181, 0.5
    %v2188 = vmul.f32 %v2118, %v2182
    %v2189 = vmul.f32 %v2121, %v2183
    %v2190 = vmul.f32 %v2126, %v2184
    %v2191 = vmul.f32 %v2129, %v2185
    %v2192 = vmul.f32 %v2134, %v2186
    %v2193 = vmul.f32 %v2137, %v2187
    %v2194 = vpack.c.bf16 %v2189, %v2188
    %v2195 = vpack.c.bf16 %v2191, %v2190
    %v2196 = vpack.c.bf16 %v2193, %v2192
    %v2197 = vld [vmem:[#allocation2 + $0x48] sm:$0xf]
    %v2198 = vld [vmem:[#allocation2 + $0x4c] sm:$0xf]
    %v2199 = vld [vmem:[#allocation2 + $0x50] sm:$0xf]
    %v2200 = vld [vmem:[#allocation2 + $0x54] sm:$0xf]
    %v2201 = vld [vmem:[#allocation2 + $0x58] sm:$0xf]
    %v2202 = vld [vmem:[#allocation2 + $0x5c] sm:$0xf]
    %v2203 = vld [vmem:[#allocation2 + $0x60] sm:$0xf]
    %v2204 = vld [vmem:[#allocation2 + $0x64] sm:$0xf]
    %v2213 = vunpack.c.l.b16 %v2197
    %v2214 = vunpack.c.l.b16 %v2198
    %v2215 = vunpack.c.l.b16 %v2199
    %v2216 = vunpack.c.l.b16 %v2200
    %v2217 = vunpack.c.l.b16 %v2201
    %v2218 = vunpack.c.l.b16 %v2202
    %v2219 = vunpack.c.l.b16 %v2203
    %v2220 = vunpack.c.l.b16 %v2204
    %v2221 = vpack.c.b16 %v2214, %v2213
    %v2222 = vpack.c.b16 %v2216, %v2215
    %v2223 = vpack.c.b16 %v2218, %v2217
    %v2224 = vpack.c.b16 %v2220, %v2219
    %vm2229 = vcmask 523264
    %v2231 = vsel %vm2229, %v2194, 0
    %v2234 = vsel %vm2229, %v2195, 0
    %v2237 = vsel %vm2229, %v2196, 0
    %2239 = vmatprep.subr.bf16.mxu0 0
    %2240 = vmatpush1.bf16.msra.mxu0 0
    %2241 = vmatprep.subr.bf16.mxu0 0
    %2242 = vmatpush1.bf16.msra.mxu0 0
    %2243 = vmatprep.subr.bf16.mxu0 0
    %2244 = vmatpush1.bf16.msra.mxu0 0
    %2245 = vmatprep.subr.bf16.mxu0 0
    %2246 = vmatpush1.bf16.msra.mxu0 0
    %2247 = vmatprep.subr.bf16.mxu0 0
    %2248 = vmatpush1.bf16.msra.mxu0 %v2224
    %2249 = vmatprep.subr.bf16.mxu0 0
    %2250 = vmatpush1.bf16.msra.mxu0 %v2223
    %2251 = vmatprep.subr.bf16.mxu0 0
    %2252 = vmatpush1.bf16.msra.mxu0 %v2222
    %2253 = vmatprep.subr.bf16.mxu0 0
    %2254 = vmatpush1.bf16.msra.mxu0 %v2221
    %2255 = vmatprep.subr.bf16.mxu0 0
    %2256 = vmatpush2.bf16.msra.mxu0 0
    %2257 = vmatprep.subr.bf16.mxu0 0
    %2258 = vmatpush2.bf16.msra.mxu0 0
    %2259 = vmatprep.subr.bf16.mxu0 0
    %2260 = vmatpush2.bf16.msra.mxu0 0
    %2261 = vmatprep.subr.bf16.mxu0 0
    %2262 = vmatpush2.bf16.msra.mxu0 0
    %2263 = vmatprep.subr.bf16.mxu0 0
    %2264 = vmatpush2.bf16.msra.mxu0 0
    %2265 = vmatprep.subr.bf16.mxu0 0
    %2266 = vmatpush2.bf16.msra.mxu0 0
    %2267 = vmatprep.subr.bf16.mxu0 0
    %2268 = vmatpush2.bf16.msra.mxu0 0
    %2269 = vmatprep.subr.bf16.mxu0 0
    %2270 = vmatpush2.bf16.msra.mxu0 0
    %2271 = vmatprep.mubr.bf16.mxu0 0
    %2272 = vmatmul.mubr.bf16.gmra.mxu0 %v2231
    %v2273 = vpop.f32.mrf.mxu0
    %v2274 = vadd.f32 0.0, %v2273
    %v2275 = vpop.f32.mrf.mxu0
    %v2276 = vpop.f32.mrf.mxu0
    %v2277 = vadd.f32 0.0, %v2276
    %v2278 = vpop.f32.mrf.mxu0
    %2279 = vmatprep.mubr.bf16.mxu0 0
    %2280 = vmatmul.mubr.bf16.gmra.mxu0 %v2234
    %v2281 = vpop.f32.mrf.mxu0
    %v2282 = vadd.f32 0.0, %v2281
    %v2283 = vpop.f32.mrf.mxu0
    %v2284 = vpop.f32.mrf.mxu0
    %v2285 = vadd.f32 0.0, %v2284
    %v2286 = vpop.f32.mrf.mxu0
    %2287 = vmatprep.mubr.bf16.mxu0 0
    %2288 = vmatmul.mubr.bf16.gmra.mxu0 %v2237
    %v2289 = vpop.f32.mrf.mxu0
    %v2290 = vadd.f32 0.0, %v2289
    %v2291 = vpop.f32.mrf.mxu0
    %v2292 = vpop.f32.mrf.mxu0
    %v2293 = vadd.f32 0.0, %v2292
    %v2294 = vpop.f32.mrf.mxu0
    %2295 = vdwg.mxu0
    %v2296 = vadd.f32 %v1944, %v2274
    %v2297 = vadd.f32 %v1945, %v2277
    %v2298 = vadd.f32 %v1946, %v2282
    %v2299 = vadd.f32 %v1947, %v2285
    %v2300 = vadd.f32 %v1948, %v2290
    %v2301 = vadd.f32 %v1949, %v2293
    %v2302 = vld [vmem:[%s2 + $0x37] sm:$0x1]
    %v2303 = vlaneseq
    %v2304 = vshrl.u32 %v2303, 7
    %v2305 = vsub.s32 0, %v2304
    %v2306 = vrot.slane %v2302, %v2305
    %v2307 = vadd.f32 %v2296, %v2306
    %v2308 = vadd.f32 %v2297, %v2306
    %v2309 = vadd.f32 %v2298, %v2306
    %v2310 = vadd.f32 %v2299, %v2306
    %v2311 = vadd.f32 %v2300, %v2306
    %v2312 = vadd.f32 %v2301, %v2306
    %v2313 = vld [vmem:[%s2 + $0x38] sm:$0x1]
    %v2314 = vld [vmem:[%s2 + $0x39] sm:$0x1]
    %v2315 = vsel %vm142, %v2307, 0.0
    %2316 = vadd.xlane.f32.xlu0 %v2315
    %v2317 = vpop.xlane.xlu0 %2316
    %v2318 = vsel %vm142, %v2308, 0.0
    %2319 = vadd.xlane.f32.xlu0 %v2318
    %v2320 = vpop.xlane.xlu0 %2319
    %v2321 = vsel %vm142, %v2309, 0.0
    %2322 = vadd.xlane.f32.xlu0 %v2321
    %v2323 = vpop.xlane.xlu0 %2322
    %v2324 = vsel %vm142, %v2310, 0.0
    %2325 = vadd.xlane.f32.xlu0 %v2324
    %v2326 = vpop.xlane.xlu0 %2325
    %v2327 = vsel %vm142, %v2311, 0.0
    %2328 = vadd.xlane.f32.xlu0 %v2327
    %v2329 = vpop.xlane.xlu0 %2328
    %v2330 = vsel %vm142, %v2312, 0.0
    %2331 = vadd.xlane.f32.xlu0 %v2330
    %v2332 = vpop.xlane.xlu0 %2331
    %v2333 = vmul.f32 %v2317, %v161
    %v2334 = vmul.f32 %v2320, %v161
    %v2335 = vmul.f32 %v2323, %v161
    %v2336 = vmul.f32 %v2326, %v161
    %v2337 = vmul.f32 %v2329, %v161
    %v2338 = vmul.f32 %v2332, %v161
    %v2339 = vsub.f32 %v2307, %v2333
    %v2340 = vsub.f32 %v2308, %v2334
    %v2341 = vsub.f32 %v2309, %v2335
    %v2342 = vsub.f32 %v2310, %v2336
    %v2343 = vsub.f32 %v2311, %v2337
    %v2344 = vsub.f32 %v2312, %v2338
    %v2345 = vmul.f32 %v2339, %v2339
    %v2346 = vmul.f32 %v2340, %v2340
    %v2347 = vmul.f32 %v2341, %v2341
    %v2348 = vmul.f32 %v2342, %v2342
    %v2349 = vmul.f32 %v2343, %v2343
    %v2350 = vmul.f32 %v2344, %v2344
    %v2351 = vsel %vm142, %v2345, 0.0
    %2352 = vadd.xlane.f32.xlu0 %v2351
    %v2353 = vpop.xlane.xlu0 %2352
    %v2354 = vsel %vm142, %v2346, 0.0
    %2355 = vadd.xlane.f32.xlu0 %v2354
    %v2356 = vpop.xlane.xlu0 %2355
    %v2357 = vsel %vm142, %v2347, 0.0
    %2358 = vadd.xlane.f32.xlu0 %v2357
    %v2359 = vpop.xlane.xlu0 %2358
    %v2360 = vsel %vm142, %v2348, 0.0
    %2361 = vadd.xlane.f32.xlu0 %v2360
    %v2362 = vpop.xlane.xlu0 %2361
    %v2363 = vsel %vm142, %v2349, 0.0
    %2364 = vadd.xlane.f32.xlu0 %v2363
    %v2365 = vpop.xlane.xlu0 %2364
    %v2366 = vsel %vm142, %v2350, 0.0
    %2367 = vadd.xlane.f32.xlu0 %v2366
    %v2368 = vpop.xlane.xlu0 %2367
    %v2369 = vmul.f32 %v2353, %v161
    %v2370 = vmul.f32 %v2356, %v161
    %v2371 = vmul.f32 %v2359, %v161
    %v2372 = vmul.f32 %v2362, %v161
    %v2373 = vmul.f32 %v2365, %v161
    %v2374 = vmul.f32 %v2368, %v161
    %v2375 = vadd.f32 %v2369, 1e-05
    %v2376 = vadd.f32 %v2370, 1e-05
    %v2377 = vadd.f32 %v2371, 1e-05
    %v2378 = vadd.f32 %v2372, 1e-05
    %v2379 = vadd.f32 %v2373, 1e-05
    %v2380 = vadd.f32 %v2374, 1e-05
    %v2381 = vrsqrt.pop %v2375
    %v2382 = vrsqrt.pop %v2376
    %v2383 = vrsqrt.pop %v2377
    %v2384 = vrsqrt.pop %v2378
    %v2385 = vrsqrt.pop %v2379
    %v2386 = vrsqrt.pop %v2380
    %v2387 = vmul.f32 %v2339, %v2381
    %v2388 = vmul.f32 %v2340, %v2382
    %v2389 = vmul.f32 %v2341, %v2383
    %v2390 = vmul.f32 %v2342, %v2384
    %v2391 = vmul.f32 %v2343, %v2385
    %v2392 = vmul.f32 %v2344, %v2386
    %v2393 = vlaneseq
    %v2394 = vshrl.u32 %v2393, 7
    %v2395 = vsub.s32 0, %v2394
    %v2396 = vrot.slane %v2313, %v2395
    %v2397 = vmul.f32 %v2387, %v2396
    %v2398 = vmul.f32 %v2388, %v2396
    %v2399 = vmul.f32 %v2389, %v2396
    %v2400 = vmul.f32 %v2390, %v2396
    %v2401 = vmul.f32 %v2391, %v2396
    %v2402 = vmul.f32 %v2392, %v2396
    %v2403 = vlaneseq
    %v2404 = vshrl.u32 %v2403, 7
    %v2405 = vsub.s32 0, %v2404
    %v2406 = vrot.slane %v2314, %v2405
    %v2407 = vadd.f32 %v2397, %v2406
    %v2408 = vadd.f32 %v2398, %v2406
    %v2409 = vadd.f32 %v2399, %v2406
    %v2410 = vadd.f32 %v2400, %v2406
    %v2411 = vadd.f32 %v2401, %v2406
    %v2412 = vadd.f32 %v2402, %v2406
    %v2413 = vpack.c.bf16 %v2408, %v2407
    %v2414 = vpack.c.bf16 %v2410, %v2409
    %v2415 = vpack.c.bf16 %v2412, %v2411
    %v2416 = vld [vmem:[#allocation2 + $0x68] sm:$0xf]
    %v2417 = vld [vmem:[#allocation2 + $0x6c] sm:$0xf]
    %v2418 = vld [vmem:[#allocation2 + $0x70] sm:$0xf]
    %v2419 = vld [vmem:[#allocation2 + $0x74] sm:$0xf]
    %v2420 = vld [vmem:[%s2 + $0x3a] sm:$0x1]
    %v2421 = vlaneseq
    %v2422 = vshrl.u32 %v2421, 7
    %v2423 = vsub.s32 0, %v2422
    %v2424 = vrot.slane %v2420, %v2423
    %v2429 = vunpack.c.l.b16 %v2416
    %v2430 = vunpack.c.l.b16 %v2417
    %v2431 = vunpack.c.l.b16 %v2418
    %v2432 = vunpack.c.l.b16 %v2419
    %v2433 = vpack.c.b16 %v2430, %v2429
    %v2434 = vpack.c.b16 %v2432, %v2431
    %v2438 = vsel %vm142, %v2413, 0
    %v2441 = vsel %vm142, %v2414, 0
    %v2444 = vsel %vm142, %v2415, 0
    %2446 = vmatprep.subr.bf16.mxu0 0
    %2447 = vmatpush1.bf16.msra.mxu0 0
    %2448 = vmatprep.subr.bf16.mxu0 0
    %2449 = vmatpush1.bf16.msra.mxu0 0
    %2450 = vmatprep.subr.bf16.mxu0 0
    %2451 = vmatpush1.bf16.msra.mxu0 0
    %2452 = vmatprep.subr.bf16.mxu0 0
    %2453 = vmatpush1.bf16.msra.mxu0 0
    %2454 = vmatprep.subr.bf16.mxu0 0
    %2455 = vmatpush1.bf16.msra.mxu0 0
    %2456 = vmatprep.subr.bf16.mxu0 0
    %2457 = vmatpush1.bf16.msra.mxu0 0
    %2458 = vmatprep.subr.bf16.mxu0 0
    %2459 = vmatpush1.bf16.msra.mxu0 %v2434
    %2460 = vmatprep.subr.bf16.mxu0 0
    %2461 = vmatpush1.bf16.msra.mxu0 %v2433
    %2462 = vmatprep.subr.bf16.mxu0 0
    %2463 = vmatpush2.bf16.msra.mxu0 0
    %2464 = vmatprep.subr.bf16.mxu0 0
    %2465 = vmatpush2.bf16.msra.mxu0 0
    %2466 = vmatprep.subr.bf16.mxu0 0
    %2467 = vmatpush2.bf16.msra.mxu0 0
    %2468 = vmatprep.subr.bf16.mxu0 0
    %2469 = vmatpush2.bf16.msra.mxu0 0
    %2470 = vmatprep.subr.bf16.mxu0 0
    %2471 = vmatpush2.bf16.msra.mxu0 0
    %2472 = vmatprep.subr.bf16.mxu0 0
    %2473 = vmatpush2.bf16.msra.mxu0 0
    %2474 = vmatprep.subr.bf16.mxu0 0
    %2475 = vmatpush2.bf16.msra.mxu0 0
    %2476 = vmatprep.subr.bf16.mxu0 0
    %2477 = vmatpush2.bf16.msra.mxu0 0
    %2478 = vmatprep.mubr.bf16.mxu0 0
    %2479 = vmatmul.mubr.bf16.gmra.mxu0 %v2438
    %v2480 = vpop.f32.mrf.mxu0
    %v2481 = vadd.f32 %v2424, %v2480
    %v2482 = vpop.f32.mrf.mxu0
    %v2483 = vpop.f32.mrf.mxu0
    %v2484 = vadd.f32 %v2424, %v2483
    %v2485 = vpop.f32.mrf.mxu0
    %2486 = vmatprep.mubr.bf16.mxu0 0
    %2487 = vmatmul.mubr.bf16.gmra.mxu0 %v2441
    %v2488 = vpop.f32.mrf.mxu0
    %v2489 = vadd.f32 %v2424, %v2488
    %v2490 = vpop.f32.mrf.mxu0
    %v2491 = vpop.f32.mrf.mxu0
    %v2492 = vadd.f32 %v2424, %v2491
    %v2493 = vpop.f32.mrf.mxu0
    %2494 = vmatprep.mubr.bf16.mxu0 0
    %2495 = vmatmul.mubr.bf16.gmra.mxu0 %v2444
    %v2496 = vpop.f32.mrf.mxu0
    %v2497 = vadd.f32 %v2424, %v2496
    %v2498 = vpop.f32.mrf.mxu0
    %v2499 = vpop.f32.mrf.mxu0
    %v2500 = vadd.f32 %v2424, %v2499
    %v2501 = vpop.f32.mrf.mxu0
    %2502 = vdwg.mxu0
    %2506 = vrot.lane.b32.xlu0 %v2481, 120
    %v2507 = vpop.permute.xlu0 %2506
    %2508 = vrot.lane.b32.xlu0 %v2484, 120
    %v2509 = vpop.permute.xlu0 %2508
    %2510 = vrot.lane.b32.xlu0 %v2489, 120
    %v2511 = vpop.permute.xlu0 %2510
    %2515 = vrot.lane.b32.xlu0 %v2481, 112
    %v2516 = vpop.permute.xlu0 %2515
    %2517 = vrot.lane.b32.xlu0 %v2484, 112
    %v2518 = vpop.permute.xlu0 %2517
    %2519 = vrot.lane.b32.xlu0 %v2489, 112
    %v2520 = vpop.permute.xlu0 %2519
    %2524 = vrot.lane.b32.xlu0 %v2481, 104
    %v2525 = vpop.permute.xlu0 %2524
    %2526 = vrot.lane.b32.xlu0 %v2484, 104
    %v2527 = vpop.permute.xlu0 %2526
    %2528 = vrot.lane.b32.xlu0 %v2489, 104
    %v2529 = vpop.permute.xlu0 %2528
    %2536 = vrot.lane.b32.xlu0 %v2492, 120
    %v2537 = vpop.permute.xlu0 %2536
    %2538 = vrot.lane.b32.xlu0 %v2497, 120
    %v2539 = vpop.permute.xlu0 %2538
    %2540 = vrot.lane.b32.xlu0 %v2500, 120
    %v2541 = vpop.permute.xlu0 %2540
    %2545 = vrot.lane.b32.xlu0 %v2492, 112
    %v2546 = vpop.permute.xlu0 %2545
    %2547 = vrot.lane.b32.xlu0 %v2497, 112
    %v2548 = vpop.permute.xlu0 %2547
    %2549 = vrot.lane.b32.xlu0 %v2500, 112
    %v2550 = vpop.permute.xlu0 %2549
    %2554 = vrot.lane.b32.xlu0 %v2492, 104
    %v2555 = vpop.permute.xlu0 %2554
    %2556 = vrot.lane.b32.xlu0 %v2497, 104
    %v2557 = vpop.permute.xlu0 %2556
    %2558 = vrot.lane.b32.xlu0 %v2500, 104
    %v2559 = vpop.permute.xlu0 %2558
    %v2563 = vpack.c.bf16 %v2484, %v2481
    %v2564 = vpack.c.bf16 %v2489, %v2489
    %v2565 = vpack.c.bf16 %v2509, %v2507
    %v2566 = vpack.c.bf16 %v2511, %v2511
    %v2567 = vpack.c.bf16 %v2518, %v2516
    %v2568 = vpack.c.bf16 %v2520, %v2520
    %v2569 = vpack.c.bf16 %v2527, %v2525
    %v2570 = vpack.c.bf16 %v2529, %v2529
    %v2571 = vpack.c.bf16 %v2497, %v2492
    %v2572 = vpack.c.bf16 %v2500, %v2500
    %v2573 = vpack.c.bf16 %v2539, %v2537
    %v2574 = vpack.c.bf16 %v2541, %v2541
    %v2575 = vpack.c.bf16 %v2548, %v2546
    %v2576 = vpack.c.bf16 %v2550, %v2550
    %v2577 = vpack.c.bf16 %v2557, %v2555
    %v2578 = vpack.c.bf16 %v2559, %v2559
    %2581 = vrot.lane.b32.xlu0 %v2563, 96
    %v2582 = vpop.permute.xlu0 %2581
    %2583 = vrot.lane.b32.xlu0 %v2564, 96
    %v2584 = vpop.permute.xlu0 %2583
    %v2586 = vsel %vm414, %v2563, 0
    %v2589 = vsel %vm414, %v2564, 0
    %v2592 = vsel %vm414, %v2582, 0
    %v2595 = vsel %vm414, %v2584, 0
    %2597 = vmatprep.subr.bf16.mxu0 0
    %2598 = vmatpush1.bf16.xpose.msra.mxu0 0
    %2599 = vmatprep.subr.bf16.mxu0 0
    %2600 = vmatpush1.bf16.xpose.msra.mxu0 0
    %2601 = vmatprep.subr.bf16.mxu0 0
    %2602 = vmatpush1.bf16.xpose.msra.mxu0 0
    %2603 = vmatprep.subr.bf16.mxu0 0
    %2604 = vmatpush1.bf16.xpose.msra.mxu0 0
    %2605 = vmatprep.subr.bf16.mxu0 0
    %2606 = vmatpush1.bf16.xpose.msra.mxu0 0
    %2607 = vmatprep.subr.bf16.mxu0 0
    %2608 = vmatpush1.bf16.xpose.msra.mxu0 0
    %2609 = vmatprep.subr.bf16.mxu0 0
    %2610 = vmatpush1.bf16.xpose.msra.mxu0 %v2595
    %2611 = vmatprep.subr.bf16.mxu0 0
    %2612 = vmatpush1.bf16.xpose.msra.mxu0 %v2592
    %2613 = vmatprep.subr.bf16.mxu0 0
    %2614 = vmatpush2.bf16.xpose.msra.mxu0 0
    %2615 = vmatprep.subr.bf16.mxu0 0
    %2616 = vmatpush2.bf16.xpose.msra.mxu0 0
    %2617 = vmatprep.subr.bf16.mxu0 0
    %2618 = vmatpush2.bf16.xpose.msra.mxu0 0
    %2619 = vmatprep.subr.bf16.mxu0 0
    %2620 = vmatpush2.bf16.xpose.msra.mxu0 0
    %2621 = vmatprep.subr.bf16.mxu0 0
    %2622 = vmatpush2.bf16.xpose.msra.mxu0 0
    %2623 = vmatprep.subr.bf16.mxu0 0
    %2624 = vmatpush2.bf16.xpose.msra.mxu0 0
    %2625 = vmatprep.subr.bf16.mxu0 0
    %2626 = vmatpush2.bf16.xpose.msra.mxu0 0
    %2627 = vmatprep.subr.bf16.mxu0 0
    %2628 = vmatpush2.bf16.xpose.msra.mxu0 0
    %2629 = vmatprep.mubr.bf16.mxu0 0
    %2630 = vmatmul.mubr.bf16.gmra.mxu0 %v2586
    %v2631 = vpop.f32.mrf.mxu0
    %v2632 = vadd.f32 0.0, %v2631
    %v2633 = vpop.f32.mrf.mxu0
    %v2634 = vpop.f32.mrf.mxu0
    %v2635 = vadd.f32 0.0, %v2634
    %v2636 = vpop.f32.mrf.mxu0
    %2637 = vmatprep.mubr.bf16.mxu0 0
    %2638 = vmatmul.mubr.bf16.gmra.mxu0 %v2589
    %v2639 = vpop.f32.mrf.mxu0
    %v2640 = vadd.f32 0.0, %v2639
    %v2641 = vpop.f32.mrf.mxu0
    %v2642 = vpop.f32.mrf.mxu0
    %v2643 = vpop.f32.mrf.mxu0
    %2644 = vdwg.mxu0
    %2647 = vrot.lane.b32.xlu0 %v2565, 96
    %v2648 = vpop.permute.xlu0 %2647
    %2649 = vrot.lane.b32.xlu0 %v2566, 96
    %v2650 = vpop.permute.xlu0 %2649
    %v2652 = vsel %vm414, %v2565, 0
    %v2655 = vsel %vm414, %v2566, 0
    %v2658 = vsel %vm414, %v2648, 0
    %v2661 = vsel %vm414, %v2650, 0
    %2663 = vmatprep.subr.bf16.mxu0 0
    %2664 = vmatpush1.bf16.xpose.msra.mxu0 0
    %2665 = vmatprep.subr.bf16.mxu0 0
    %2666 = vmatpush1.bf16.xpose.msra.mxu0 0
    %2667 = vmatprep.subr.bf16.mxu0 0
    %2668 = vmatpush1.bf16.xpose.msra.mxu0 0
    %2669 = vmatprep.subr.bf16.mxu0 0
    %2670 = vmatpush1.bf16.xpose.msra.mxu0 0
    %2671 = vmatprep.subr.bf16.mxu0 0
    %2672 = vmatpush1.bf16.xpose.msra.mxu0 0
    %2673 = vmatprep.subr.bf16.mxu0 0
    %2674 = vmatpush1.bf16.xpose.msra.mxu0 0
    %2675 = vmatprep.subr.bf16.mxu0 0
    %2676 = vmatpush1.bf16.xpose.msra.mxu0 %v2661
    %2677 = vmatprep.subr.bf16.mxu0 0
    %2678 = vmatpush1.bf16.xpose.msra.mxu0 %v2658
    %2679 = vmatprep.subr.bf16.mxu0 0
    %2680 = vmatpush2.bf16.xpose.msra.mxu0 0
    %2681 = vmatprep.subr.bf16.mxu0 0
    %2682 = vmatpush2.bf16.xpose.msra.mxu0 0
    %2683 = vmatprep.subr.bf16.mxu0 0
    %2684 = vmatpush2.bf16.xpose.msra.mxu0 0
    %2685 = vmatprep.subr.bf16.mxu0 0
    %2686 = vmatpush2.bf16.xpose.msra.mxu0 0
    %2687 = vmatprep.subr.bf16.mxu0 0
    %2688 = vmatpush2.bf16.xpose.msra.mxu0 0
    %2689 = vmatprep.subr.bf16.mxu0 0
    %2690 = vmatpush2.bf16.xpose.msra.mxu0 0
    %2691 = vmatprep.subr.bf16.mxu0 0
    %2692 = vmatpush2.bf16.xpose.msra.mxu0 0
    %2693 = vmatprep.subr.bf16.mxu0 0
    %2694 = vmatpush2.bf16.xpose.msra.mxu0 0
    %2695 = vmatprep.mubr.bf16.mxu0 0
    %2696 = vmatmul.mubr.bf16.gmra.mxu0 %v2652
    %v2697 = vpop.f32.mrf.mxu0
    %v2698 = vadd.f32 0.0, %v2697
    %v2699 = vpop.f32.mrf.mxu0
    %v2700 = vpop.f32.mrf.mxu0
    %v2701 = vadd.f32 0.0, %v2700
    %v2702 = vpop.f32.mrf.mxu0
    %2703 = vmatprep.mubr.bf16.mxu0 0
    %2704 = vmatmul.mubr.bf16.gmra.mxu0 %v2655
    %v2705 = vpop.f32.mrf.mxu0
    %v2706 = vadd.f32 0.0, %v2705
    %v2707 = vpop.f32.mrf.mxu0
    %v2708 = vpop.f32.mrf.mxu0
    %v2709 = vpop.f32.mrf.mxu0
    %2710 = vdwg.mxu0
    %2713 = vrot.lane.b32.xlu0 %v2567, 96
    %v2714 = vpop.permute.xlu0 %2713
    %2715 = vrot.lane.b32.xlu0 %v2568, 96
    %v2716 = vpop.permute.xlu0 %2715
    %v2718 = vsel %vm414, %v2567, 0
    %v2721 = vsel %vm414, %v2568, 0
    %v2724 = vsel %vm414, %v2714, 0
    %v2727 = vsel %vm414, %v2716, 0
    %2729 = vmatprep.subr.bf16.mxu0 0
    %2730 = vmatpush1.bf16.xpose.msra.mxu0 0
    %2731 = vmatprep.subr.bf16.mxu0 0
    %2732 = vmatpush1.bf16.xpose.msra.mxu0 0
    %2733 = vmatprep.subr.bf16.mxu0 0
    %2734 = vmatpush1.bf16.xpose.msra.mxu0 0
    %2735 = vmatprep.subr.bf16.mxu0 0
    %2736 = vmatpush1.bf16.xpose.msra.mxu0 0
    %2737 = vmatprep.subr.bf16.mxu0 0
    %2738 = vmatpush1.bf16.xpose.msra.mxu0 0
    %2739 = vmatprep.subr.bf16.mxu0 0
    %2740 = vmatpush1.bf16.xpose.msra.mxu0 0
    %2741 = vmatprep.subr.bf16.mxu0 0
    %2742 = vmatpush1.bf16.xpose.msra.mxu0 %v2727
    %2743 = vmatprep.subr.bf16.mxu0 0
    %2744 = vmatpush1.bf16.xpose.msra.mxu0 %v2724
    %2745 = vmatprep.subr.bf16.mxu0 0
    %2746 = vmatpush2.bf16.xpose.msra.mxu0 0
    %2747 = vmatprep.subr.bf16.mxu0 0
    %2748 = vmatpush2.bf16.xpose.msra.mxu0 0
    %2749 = vmatprep.subr.bf16.mxu0 0
    %2750 = vmatpush2.bf16.xpose.msra.mxu0 0
    %2751 = vmatprep.subr.bf16.mxu0 0
    %2752 = vmatpush2.bf16.xpose.msra.mxu0 0
    %2753 = vmatprep.subr.bf16.mxu0 0
    %2754 = vmatpush2.bf16.xpose.msra.mxu0 0
    %2755 = vmatprep.subr.bf16.mxu0 0
    %2756 = vmatpush2.bf16.xpose.msra.mxu0 0
    %2757 = vmatprep.subr.bf16.mxu0 0
    %2758 = vmatpush2.bf16.xpose.msra.mxu0 0
    %2759 = vmatprep.subr.bf16.mxu0 0
    %2760 = vmatpush2.bf16.xpose.msra.mxu0 0
    %2761 = vmatprep.mubr.bf16.mxu0 0
    %2762 = vmatmul.mubr.bf16.gmra.mxu0 %v2718
    %v2763 = vpop.f32.mrf.mxu0
    %v2764 = vadd.f32 0.0, %v2763
    %v2765 = vpop.f32.mrf.mxu0
    %v2766 = vpop.f32.mrf.mxu0
    %v2767 = vadd.f32 0.0, %v2766
    %v2768 = vpop.f32.mrf.mxu0
    %2769 = vmatprep.mubr.bf16.mxu0 0
    %2770 = vmatmul.mubr.bf16.gmra.mxu0 %v2721
    %v2771 = vpop.f32.mrf.mxu0
    %v2772 = vadd.f32 0.0, %v2771
    %v2773 = vpop.f32.mrf.mxu0
    %v2774 = vpop.f32.mrf.mxu0
    %v2775 = vpop.f32.mrf.mxu0
    %2776 = vdwg.mxu0
    %2779 = vrot.lane.b32.xlu0 %v2569, 96
    %v2780 = vpop.permute.xlu0 %2779
    %2781 = vrot.lane.b32.xlu0 %v2570, 96
    %v2782 = vpop.permute.xlu0 %2781
    %v2784 = vsel %vm414, %v2569, 0
    %v2787 = vsel %vm414, %v2570, 0
    %v2790 = vsel %vm414, %v2780, 0
    %v2793 = vsel %vm414, %v2782, 0
    %2795 = vmatprep.subr.bf16.mxu0 0
    %2796 = vmatpush1.bf16.xpose.msra.mxu0 0
    %2797 = vmatprep.subr.bf16.mxu0 0
    %2798 = vmatpush1.bf16.xpose.msra.mxu0 0
    %2799 = vmatprep.subr.bf16.mxu0 0
    %2800 = vmatpush1.bf16.xpose.msra.mxu0 0
    %2801 = vmatprep.subr.bf16.mxu0 0
    %2802 = vmatpush1.bf16.xpose.msra.mxu0 0
    %2803 = vmatprep.subr.bf16.mxu0 0
    %2804 = vmatpush1.bf16.xpose.msra.mxu0 0
    %2805 = vmatprep.subr.bf16.mxu0 0
    %2806 = vmatpush1.bf16.xpose.msra.mxu0 0
    %2807 = vmatprep.subr.bf16.mxu0 0
    %2808 = vmatpush1.bf16.xpose.msra.mxu0 %v2793
    %2809 = vmatprep.subr.bf16.mxu0 0
    %2810 = vmatpush1.bf16.xpose.msra.mxu0 %v2790
    %2811 = vmatprep.subr.bf16.mxu0 0
    %2812 = vmatpush2.bf16.xpose.msra.mxu0 0
    %2813 = vmatprep.subr.bf16.mxu0 0
    %2814 = vmatpush2.bf16.xpose.msra.mxu0 0
    %2815 = vmatprep.subr.bf16.mxu0 0
    %2816 = vmatpush2.bf16.xpose.msra.mxu0 0
    %2817 = vmatprep.subr.bf16.mxu0 0
    %2818 = vmatpush2.bf16.xpose.msra.mxu0 0
    %2819 = vmatprep.subr.bf16.mxu0 0
    %2820 = vmatpush2.bf16.xpose.msra.mxu0 0
    %2821 = vmatprep.subr.bf16.mxu0 0
    %2822 = vmatpush2.bf16.xpose.msra.mxu0 0
    %2823 = vmatprep.subr.bf16.mxu0 0
    %2824 = vmatpush2.bf16.xpose.msra.mxu0 0
    %2825 = vmatprep.subr.bf16.mxu0 0
    %2826 = vmatpush2.bf16.xpose.msra.mxu0 0
    %2827 = vmatprep.mubr.bf16.mxu0 0
    %2828 = vmatmul.mubr.bf16.gmra.mxu0 %v2784
    %v2829 = vpop.f32.mrf.mxu0
    %v2830 = vadd.f32 0.0, %v2829
    %v2831 = vpop.f32.mrf.mxu0
    %v2832 = vpop.f32.mrf.mxu0
    %v2833 = vadd.f32 0.0, %v2832
    %v2834 = vpop.f32.mrf.mxu0
    %2835 = vmatprep.mubr.bf16.mxu0 0
    %2836 = vmatmul.mubr.bf16.gmra.mxu0 %v2787
    %v2837 = vpop.f32.mrf.mxu0
    %v2838 = vadd.f32 0.0, %v2837
    %v2839 = vpop.f32.mrf.mxu0
    %v2840 = vpop.f32.mrf.mxu0
    %v2841 = vpop.f32.mrf.mxu0
    %2842 = vdwg.mxu0
    %2845 = vrot.lane.b32.xlu0 %v2571, 96
    %v2846 = vpop.permute.xlu0 %2845
    %2847 = vrot.lane.b32.xlu0 %v2572, 96
    %v2848 = vpop.permute.xlu0 %2847
    %v2850 = vsel %vm414, %v2571, 0
    %v2853 = vsel %vm414, %v2572, 0
    %v2856 = vsel %vm414, %v2846, 0
    %v2859 = vsel %vm414, %v2848, 0
    %2861 = vmatprep.subr.bf16.mxu0 0
    %2862 = vmatpush1.bf16.xpose.msra.mxu0 0
    %2863 = vmatprep.subr.bf16.mxu0 0
    %2864 = vmatpush1.bf16.xpose.msra.mxu0 0
    %2865 = vmatprep.subr.bf16.mxu0 0
    %2866 = vmatpush1.bf16.xpose.msra.mxu0 0
    %2867 = vmatprep.subr.bf16.mxu0 0
    %2868 = vmatpush1.bf16.xpose.msra.mxu0 0
    %2869 = vmatprep.subr.bf16.mxu0 0
    %2870 = vmatpush1.bf16.xpose.msra.mxu0 0
    %2871 = vmatprep.subr.bf16.mxu0 0
    %2872 = vmatpush1.bf16.xpose.msra.mxu0 0
    %2873 = vmatprep.subr.bf16.mxu0 0
    %2874 = vmatpush1.bf16.xpose.msra.mxu0 %v2859
    %2875 = vmatprep.subr.bf16.mxu0 0
    %2876 = vmatpush1.bf16.xpose.msra.mxu0 %v2856
    %2877 = vmatprep.subr.bf16.mxu0 0
    %2878 = vmatpush2.bf16.xpose.msra.mxu0 0
    %2879 = vmatprep.subr.bf16.mxu0 0
    %2880 = vmatpush2.bf16.xpose.msra.mxu0 0
    %2881 = vmatprep.subr.bf16.mxu0 0
    %2882 = vmatpush2.bf16.xpose.msra.mxu0 0
    %2883 = vmatprep.subr.bf16.mxu0 0
    %2884 = vmatpush2.bf16.xpose.msra.mxu0 0
    %2885 = vmatprep.subr.bf16.mxu0 0
    %2886 = vmatpush2.bf16.xpose.msra.mxu0 0
    %2887 = vmatprep.subr.bf16.mxu0 0
    %2888 = vmatpush2.bf16.xpose.msra.mxu0 0
    %2889 = vmatprep.subr.bf16.mxu0 0
    %2890 = vmatpush2.bf16.xpose.msra.mxu0 0
    %2891 = vmatprep.subr.bf16.mxu0 0
    %2892 = vmatpush2.bf16.xpose.msra.mxu0 0
    %2893 = vmatprep.mubr.bf16.mxu0 0
    %2894 = vmatmul.mubr.bf16.gmra.mxu0 %v2850
    %v2895 = vpop.f32.mrf.mxu0
    %v2896 = vadd.f32 0.0, %v2895
    %v2897 = vpop.f32.mrf.mxu0
    %v2898 = vpop.f32.mrf.mxu0
    %v2899 = vadd.f32 0.0, %v2898
    %v2900 = vpop.f32.mrf.mxu0
    %2901 = vmatprep.mubr.bf16.mxu0 0
    %2902 = vmatmul.mubr.bf16.gmra.mxu0 %v2853
    %v2903 = vpop.f32.mrf.mxu0
    %v2904 = vadd.f32 0.0, %v2903
    %v2905 = vpop.f32.mrf.mxu0
    %v2906 = vpop.f32.mrf.mxu0
    %v2907 = vpop.f32.mrf.mxu0
    %2908 = vdwg.mxu0
    %2911 = vrot.lane.b32.xlu0 %v2573, 96
    %v2912 = vpop.permute.xlu0 %2911
    %2913 = vrot.lane.b32.xlu0 %v2574, 96
    %v2914 = vpop.permute.xlu0 %2913
    %v2916 = vsel %vm414, %v2573, 0
    %v2919 = vsel %vm414, %v2574, 0
    %v2922 = vsel %vm414, %v2912, 0
    %v2925 = vsel %vm414, %v2914, 0
    %2927 = vmatprep.subr.bf16.mxu0 0
    %2928 = vmatpush1.bf16.xpose.msra.mxu0 0
    %2929 = vmatprep.subr.bf16.mxu0 0
    %2930 = vmatpush1.bf16.xpose.msra.mxu0 0
    %2931 = vmatprep.subr.bf16.mxu0 0
    %2932 = vmatpush1.bf16.xpose.msra.mxu0 0
    %2933 = vmatprep.subr.bf16.mxu0 0
    %2934 = vmatpush1.bf16.xpose.msra.mxu0 0
    %2935 = vmatprep.subr.bf16.mxu0 0
    %2936 = vmatpush1.bf16.xpose.msra.mxu0 0
    %2937 = vmatprep.subr.bf16.mxu0 0
    %2938 = vmatpush1.bf16.xpose.msra.mxu0 0
    %2939 = vmatprep.subr.bf16.mxu0 0
    %2940 = vmatpush1.bf16.xpose.msra.mxu0 %v2925
    %2941 = vmatprep.subr.bf16.mxu0 0
    %2942 = vmatpush1.bf16.xpose.msra.mxu0 %v2922
    %2943 = vmatprep.subr.bf16.mxu0 0
    %2944 = vmatpush2.bf16.xpose.msra.mxu0 0
    %2945 = vmatprep.subr.bf16.mxu0 0
    %2946 = vmatpush2.bf16.xpose.msra.mxu0 0
    %2947 = vmatprep.subr.bf16.mxu0 0
    %2948 = vmatpush2.bf16.xpose.msra.mxu0 0
    %2949 = vmatprep.subr.bf16.mxu0 0
    %2950 = vmatpush2.bf16.xpose.msra.mxu0 0
    %2951 = vmatprep.subr.bf16.mxu0 0
    %2952 = vmatpush2.bf16.xpose.msra.mxu0 0
    %2953 = vmatprep.subr.bf16.mxu0 0
    %2954 = vmatpush2.bf16.xpose.msra.mxu0 0
    %2955 = vmatprep.subr.bf16.mxu0 0
    %2956 = vmatpush2.bf16.xpose.msra.mxu0 0
    %2957 = vmatprep.subr.bf16.mxu0 0
    %2958 = vmatpush2.bf16.xpose.msra.mxu0 0
    %2959 = vmatprep.mubr.bf16.mxu0 0
    %2960 = vmatmul.mubr.bf16.gmra.mxu0 %v2916
    %v2961 = vpop.f32.mrf.mxu0
    %v2962 = vadd.f32 0.0, %v2961
    %v2963 = vpop.f32.mrf.mxu0
    %v2964 = vpop.f32.mrf.mxu0
    %v2965 = vadd.f32 0.0, %v2964
    %v2966 = vpop.f32.mrf.mxu0
    %2967 = vmatprep.mubr.bf16.mxu0 0
    %2968 = vmatmul.mubr.bf16.gmra.mxu0 %v2919
    %v2969 = vpop.f32.mrf.mxu0
    %v2970 = vadd.f32 0.0, %v2969
    %v2971 = vpop.f32.mrf.mxu0
    %v2972 = vpop.f32.mrf.mxu0
    %v2973 = vpop.f32.mrf.mxu0
    %2974 = vdwg.mxu0
    %2977 = vrot.lane.b32.xlu0 %v2575, 96
    %v2978 = vpop.permute.xlu0 %2977
    %2979 = vrot.lane.b32.xlu0 %v2576, 96
    %v2980 = vpop.permute.xlu0 %2979
    %v2982 = vsel %vm414, %v2575, 0
    %v2985 = vsel %vm414, %v2576, 0
    %v2988 = vsel %vm414, %v2978, 0
    %v2991 = vsel %vm414, %v2980, 0
    %2993 = vmatprep.subr.bf16.mxu0 0
    %2994 = vmatpush1.bf16.xpose.msra.mxu0 0
    %2995 = vmatprep.subr.bf16.mxu0 0
    %2996 = vmatpush1.bf16.xpose.msra.mxu0 0
    %2997 = vmatprep.subr.bf16.mxu0 0
    %2998 = vmatpush1.bf16.xpose.msra.mxu0 0
    %2999 = vmatprep.subr.bf16.mxu0 0
    %3000 = vmatpush1.bf16.xpose.msra.mxu0 0
    %3001 = vmatprep.subr.bf16.mxu0 0
    %3002 = vmatpush1.bf16.xpose.msra.mxu0 0
    %3003 = vmatprep.subr.bf16.mxu0 0
    %3004 = vmatpush1.bf16.xpose.msra.mxu0 0
    %3005 = vmatprep.subr.bf16.mxu0 0
    %3006 = vmatpush1.bf16.xpose.msra.mxu0 %v2991
    %3007 = vmatprep.subr.bf16.mxu0 0
    %3008 = vmatpush1.bf16.xpose.msra.mxu0 %v2988
    %3009 = vmatprep.subr.bf16.mxu0 0
    %3010 = vmatpush2.bf16.xpose.msra.mxu0 0
    %3011 = vmatprep.subr.bf16.mxu0 0
    %3012 = vmatpush2.bf16.xpose.msra.mxu0 0
    %3013 = vmatprep.subr.bf16.mxu0 0
    %3014 = vmatpush2.bf16.xpose.msra.mxu0 0
    %3015 = vmatprep.subr.bf16.mxu0 0
    %3016 = vmatpush2.bf16.xpose.msra.mxu0 0
    %3017 = vmatprep.subr.bf16.mxu0 0
    %3018 = vmatpush2.bf16.xpose.msra.mxu0 0
    %3019 = vmatprep.subr.bf16.mxu0 0
    %3020 = vmatpush2.bf16.xpose.msra.mxu0 0
    %3021 = vmatprep.subr.bf16.mxu0 0
    %3022 = vmatpush2.bf16.xpose.msra.mxu0 0
    %3023 = vmatprep.subr.bf16.mxu0 0
    %3024 = vmatpush2.bf16.xpose.msra.mxu0 0
    %3025 = vmatprep.mubr.bf16.mxu0 0
    %3026 = vmatmul.mubr.bf16.gmra.mxu0 %v2982
    %v3027 = vpop.f32.mrf.mxu0
    %v3028 = vadd.f32 0.0, %v3027
    %v3029 = vpop.f32.mrf.mxu0
    %v3030 = vpop.f32.mrf.mxu0
    %v3031 = vadd.f32 0.0, %v3030
    %v3032 = vpop.f32.mrf.mxu0
    %3033 = vmatprep.mubr.bf16.mxu0 0
    %3034 = vmatmul.mubr.bf16.gmra.mxu0 %v2985
    %v3035 = vpop.f32.mrf.mxu0
    %v3036 = vadd.f32 0.0, %v3035
    %v3037 = vpop.f32.mrf.mxu0
    %v3038 = vpop.f32.mrf.mxu0
    %v3039 = vpop.f32.mrf.mxu0
    %3040 = vdwg.mxu0
    %3043 = vrot.lane.b32.xlu0 %v2577, 96
    %v3044 = vpop.permute.xlu0 %3043
    %3045 = vrot.lane.b32.xlu0 %v2578, 96
    %v3046 = vpop.permute.xlu0 %3045
    %v3048 = vsel %vm414, %v2577, 0
    %v3051 = vsel %vm414, %v2578, 0
    %v3054 = vsel %vm414, %v3044, 0
    %v3057 = vsel %vm414, %v3046, 0
    %3059 = vmatprep.subr.bf16.mxu0 0
    %3060 = vmatpush1.bf16.xpose.msra.mxu0 0
    %3061 = vmatprep.subr.bf16.mxu0 0
    %3062 = vmatpush1.bf16.xpose.msra.mxu0 0
    %3063 = vmatprep.subr.bf16.mxu0 0
    %3064 = vmatpush1.bf16.xpose.msra.mxu0 0
    %3065 = vmatprep.subr.bf16.mxu0 0
    %3066 = vmatpush1.bf16.xpose.msra.mxu0 0
    %3067 = vmatprep.subr.bf16.mxu0 0
    %3068 = vmatpush1.bf16.xpose.msra.mxu0 0
    %3069 = vmatprep.subr.bf16.mxu0 0
    %3070 = vmatpush1.bf16.xpose.msra.mxu0 0
    %3071 = vmatprep.subr.bf16.mxu0 0
    %3072 = vmatpush1.bf16.xpose.msra.mxu0 %v3057
    %3073 = vmatprep.subr.bf16.mxu0 0
    %3074 = vmatpush1.bf16.xpose.msra.mxu0 %v3054
    %3075 = vmatprep.subr.bf16.mxu0 0
    %3076 = vmatpush2.bf16.xpose.msra.mxu0 0
    %3077 = vmatprep.subr.bf16.mxu0 0
    %3078 = vmatpush2.bf16.xpose.msra.mxu0 0
    %3079 = vmatprep.subr.bf16.mxu0 0
    %3080 = vmatpush2.bf16.xpose.msra.mxu0 0
    %3081 = vmatprep.subr.bf16.mxu0 0
    %3082 = vmatpush2.bf16.xpose.msra.mxu0 0
    %3083 = vmatprep.subr.bf16.mxu0 0
    %3084 = vmatpush2.bf16.xpose.msra.mxu0 0
    %3085 = vmatprep.subr.bf16.mxu0 0
    %3086 = vmatpush2.bf16.xpose.msra.mxu0 0
    %3087 = vmatprep.subr.bf16.mxu0 0
    %3088 = vmatpush2.bf16.xpose.msra.mxu0 0
    %3089 = vmatprep.subr.bf16.mxu0 0
    %3090 = vmatpush2.bf16.xpose.msra.mxu0 0
    %3091 = vmatprep.mubr.bf16.mxu0 0
    %3092 = vmatmul.mubr.bf16.gmra.mxu0 %v3048
    %v3093 = vpop.f32.mrf.mxu0
    %v3094 = vadd.f32 0.0, %v3093
    %v3095 = vpop.f32.mrf.mxu0
    %v3096 = vpop.f32.mrf.mxu0
    %v3097 = vadd.f32 0.0, %v3096
    %v3098 = vpop.f32.mrf.mxu0
    %3099 = vmatprep.mubr.bf16.mxu0 0
    %3100 = vmatmul.mubr.bf16.gmra.mxu0 %v3051
    %v3101 = vpop.f32.mrf.mxu0
    %v3102 = vadd.f32 0.0, %v3101
    %v3103 = vpop.f32.mrf.mxu0
    %v3104 = vpop.f32.mrf.mxu0
    %v3105 = vpop.f32.mrf.mxu0
    %3106 = vdwg.mxu0
    %v3107 = vmul.f32 %v2632, 0.35355338
    %v3108 = vmul.f32 %v2635, 0.35355338
    %v3109 = vmul.f32 %v2640, 0.35355338
    %v3110 = vmul.f32 %v2698, 0.35355338
    %v3111 = vmul.f32 %v2701, 0.35355338
    %v3112 = vmul.f32 %v2706, 0.35355338
    %v3113 = vmul.f32 %v2764, 0.35355338
    %v3114 = vmul.f32 %v2767, 0.35355338
    %v3115 = vmul.f32 %v2772, 0.35355338
    %v3116 = vmul.f32 %v2830, 0.35355338
    %v3117 = vmul.f32 %v2833, 0.35355338
    %v3118 = vmul.f32 %v2838, 0.35355338
    %v3119 = vmul.f32 %v2896, 0.35355338
    %v3120 = vmul.f32 %v2899, 0.35355338
    %v3121 = vmul.f32 %v2904, 0.35355338
    %v3122 = vmul.f32 %v2962, 0.35355338
    %v3123 = vmul.f32 %v2965, 0.35355338
    %v3124 = vmul.f32 %v2970, 0.35355338
    %v3125 = vmul.f32 %v3028, 0.35355338
    %v3126 = vmul.f32 %v3031, 0.35355338
    %v3127 = vmul.f32 %v3036, 0.35355338
    %v3128 = vmul.f32 %v3094, 0.35355338
    %v3129 = vmul.f32 %v3097, 0.35355338
    %v3130 = vmul.f32 %v3102, 0.35355338
    %v3131 = vadd.f32 %v3107, %v139
    %v3132 = vadd.f32 %v3108, %v139
    %v3133 = vadd.f32 %v3109, %v139
    %v3134 = vadd.f32 %v3110, %v139
    %v3135 = vadd.f32 %v3111, %v139
    %v3136 = vadd.f32 %v3112, %v139
    %v3137 = vadd.f32 %v3113, %v139
    %v3138 = vadd.f32 %v3114, %v139
    %v3139 = vadd.f32 %v3115, %v139
    %v3140 = vadd.f32 %v3116, %v139
    %v3141 = vadd.f32 %v3117, %v139
    %v3142 = vadd.f32 %v3118, %v139
    %v3143 = vadd.f32 %v3119, %v139
    %v3144 = vadd.f32 %v3120, %v139
    %v3145 = vadd.f32 %v3121, %v139
    %v3146 = vadd.f32 %v3122, %v139
    %v3147 = vadd.f32 %v3123, %v139
    %v3148 = vadd.f32 %v3124, %v139
    %v3149 = vadd.f32 %v3125, %v139
    %v3150 = vadd.f32 %v3126, %v139
    %v3151 = vadd.f32 %v3127, %v139
    %v3152 = vadd.f32 %v3128, %v139
    %v3153 = vadd.f32 %v3129, %v139
    %v3154 = vadd.f32 %v3130, %v139
    %v3155 = vsel %vm985, %v3131, -inf
    %3156 = vmax.xlane.f32.xlu0 %v3155
    %v3157 = vpop.xlane.xlu0 %3156
    %v3158 = vsel %vm985, %v3132, -inf
    %3159 = vmax.xlane.f32.xlu0 %v3158
    %v3160 = vpop.xlane.xlu0 %3159
    %v3161 = vsel %vm985, %v3133, -inf
    %3162 = vmax.xlane.f32.xlu0 %v3161
    %v3163 = vpop.xlane.xlu0 %3162
    %v3164 = vsel %vm985, %v3134, -inf
    %3165 = vmax.xlane.f32.xlu0 %v3164
    %v3166 = vpop.xlane.xlu0 %3165
    %v3167 = vsel %vm985, %v3135, -inf
    %3168 = vmax.xlane.f32.xlu0 %v3167
    %v3169 = vpop.xlane.xlu0 %3168
    %v3170 = vsel %vm985, %v3136, -inf
    %3171 = vmax.xlane.f32.xlu0 %v3170
    %v3172 = vpop.xlane.xlu0 %3171
    %v3173 = vsel %vm985, %v3137, -inf
    %3174 = vmax.xlane.f32.xlu0 %v3173
    %v3175 = vpop.xlane.xlu0 %3174
    %v3176 = vsel %vm985, %v3138, -inf
    %3177 = vmax.xlane.f32.xlu0 %v3176
    %v3178 = vpop.xlane.xlu0 %3177
    %v3179 = vsel %vm985, %v3139, -inf
    %3180 = vmax.xlane.f32.xlu0 %v3179
    %v3181 = vpop.xlane.xlu0 %3180
    %v3182 = vsel %vm985, %v3140, -inf
    %3183 = vmax.xlane.f32.xlu0 %v3182
    %v3184 = vpop.xlane.xlu0 %3183
    %v3185 = vsel %vm985, %v3141, -inf
    %3186 = vmax.xlane.f32.xlu0 %v3185
    %v3187 = vpop.xlane.xlu0 %3186
    %v3188 = vsel %vm985, %v3142, -inf
    %3189 = vmax.xlane.f32.xlu0 %v3188
    %v3190 = vpop.xlane.xlu0 %3189
    %v3191 = vsel %vm985, %v3143, -inf
    %3192 = vmax.xlane.f32.xlu0 %v3191
    %v3193 = vpop.xlane.xlu0 %3192
    %v3194 = vsel %vm985, %v3144, -inf
    %3195 = vmax.xlane.f32.xlu0 %v3194
    %v3196 = vpop.xlane.xlu0 %3195
    %v3197 = vsel %vm985, %v3145, -inf
    %3198 = vmax.xlane.f32.xlu0 %v3197
    %v3199 = vpop.xlane.xlu0 %3198
    %v3200 = vsel %vm985, %v3146, -inf
    %3201 = vmax.xlane.f32.xlu0 %v3200
    %v3202 = vpop.xlane.xlu0 %3201
    %v3203 = vsel %vm985, %v3147, -inf
    %3204 = vmax.xlane.f32.xlu0 %v3203
    %v3205 = vpop.xlane.xlu0 %3204
    %v3206 = vsel %vm985, %v3148, -inf
    %3207 = vmax.xlane.f32.xlu0 %v3206
    %v3208 = vpop.xlane.xlu0 %3207
    %v3209 = vsel %vm985, %v3149, -inf
    %3210 = vmax.xlane.f32.xlu0 %v3209
    %v3211 = vpop.xlane.xlu0 %3210
    %v3212 = vsel %vm985, %v3150, -inf
    %3213 = vmax.xlane.f32.xlu0 %v3212
    %v3214 = vpop.xlane.xlu0 %3213
    %v3215 = vsel %vm985, %v3151, -inf
    %3216 = vmax.xlane.f32.xlu0 %v3215
    %v3217 = vpop.xlane.xlu0 %3216
    %v3218 = vsel %vm985, %v3152, -inf
    %3219 = vmax.xlane.f32.xlu0 %v3218
    %v3220 = vpop.xlane.xlu0 %3219
    %v3221 = vsel %vm985, %v3153, -inf
    %3222 = vmax.xlane.f32.xlu0 %v3221
    %v3223 = vpop.xlane.xlu0 %3222
    %v3224 = vsel %vm985, %v3154, -inf
    %3225 = vmax.xlane.f32.xlu0 %v3224
    %v3226 = vpop.xlane.xlu0 %3225
    %v3227 = vsub.f32 %v3131, %v3157
    %v3228 = vsub.f32 %v3132, %v3160
    %v3229 = vsub.f32 %v3133, %v3163
    %v3230 = vsub.f32 %v3134, %v3166
    %v3231 = vsub.f32 %v3135, %v3169
    %v3232 = vsub.f32 %v3136, %v3172
    %v3233 = vsub.f32 %v3137, %v3175
    %v3234 = vsub.f32 %v3138, %v3178
    %v3235 = vsub.f32 %v3139, %v3181
    %v3236 = vsub.f32 %v3140, %v3184
    %v3237 = vsub.f32 %v3141, %v3187
    %v3238 = vsub.f32 %v3142, %v3190
    %v3239 = vsub.f32 %v3143, %v3193
    %v3240 = vsub.f32 %v3144, %v3196
    %v3241 = vsub.f32 %v3145, %v3199
    %v3242 = vsub.f32 %v3146, %v3202
    %v3243 = vsub.f32 %v3147, %v3205
    %v3244 = vsub.f32 %v3148, %v3208
    %v3245 = vsub.f32 %v3149, %v3211
    %v3246 = vsub.f32 %v3150, %v3214
    %v3247 = vsub.f32 %v3151, %v3217
    %v3248 = vsub.f32 %v3152, %v3220
    %v3249 = vsub.f32 %v3153, %v3223
    %v3250 = vsub.f32 %v3154, %v3226
    %v3251 = vmul.f32 %v3227, 1.442695
    %v3252 = vpow.pop %v3251
    %v3253 = vmul.f32 %v3228, 1.442695
    %v3254 = vpow.pop %v3253
    %v3255 = vmul.f32 %v3229, 1.442695
    %v3256 = vpow.pop %v3255
    %v3257 = vmul.f32 %v3230, 1.442695
    %v3258 = vpow.pop %v3257
    %v3259 = vmul.f32 %v3231, 1.442695
    %v3260 = vpow.pop %v3259
    %v3261 = vmul.f32 %v3232, 1.442695
    %v3262 = vpow.pop %v3261
    %v3263 = vmul.f32 %v3233, 1.442695
    %v3264 = vpow.pop %v3263
    %v3265 = vmul.f32 %v3234, 1.442695
    %v3266 = vpow.pop %v3265
    %v3267 = vmul.f32 %v3235, 1.442695
    %v3268 = vpow.pop %v3267
    %v3269 = vmul.f32 %v3236, 1.442695
    %v3270 = vpow.pop %v3269
    %v3271 = vmul.f32 %v3237, 1.442695
    %v3272 = vpow.pop %v3271
    %v3273 = vmul.f32 %v3238, 1.442695
    %v3274 = vpow.pop %v3273
    %v3275 = vmul.f32 %v3239, 1.442695
    %v3276 = vpow.pop %v3275
    %v3277 = vmul.f32 %v3240, 1.442695
    %v3278 = vpow.pop %v3277
    %v3279 = vmul.f32 %v3241, 1.442695
    %v3280 = vpow.pop %v3279
    %v3281 = vmul.f32 %v3242, 1.442695
    %v3282 = vpow.pop %v3281
    %v3283 = vmul.f32 %v3243, 1.442695
    %v3284 = vpow.pop %v3283
    %v3285 = vmul.f32 %v3244, 1.442695
    %v3286 = vpow.pop %v3285
    %v3287 = vmul.f32 %v3245, 1.442695
    %v3288 = vpow.pop %v3287
    %v3289 = vmul.f32 %v3246, 1.442695
    %v3290 = vpow.pop %v3289
    %v3291 = vmul.f32 %v3247, 1.442695
    %v3292 = vpow.pop %v3291
    %v3293 = vmul.f32 %v3248, 1.442695
    %v3294 = vpow.pop %v3293
    %v3295 = vmul.f32 %v3249, 1.442695
    %v3296 = vpow.pop %v3295
    %v3297 = vmul.f32 %v3250, 1.442695
    %v3298 = vpow.pop %v3297
    %v3299 = vsel %vm985, %v3252, 0.0
    %3300 = vadd.xlane.f32.xlu0 %v3299
    %v3301 = vpop.xlane.xlu0 %3300
    %v3302 = vsel %vm985, %v3254, 0.0
    %3303 = vadd.xlane.f32.xlu0 %v3302
    %v3304 = vpop.xlane.xlu0 %3303
    %v3305 = vsel %vm985, %v3256, 0.0
    %3306 = vadd.xlane.f32.xlu0 %v3305
    %v3307 = vpop.xlane.xlu0 %3306
    %v3308 = vsel %vm985, %v3258, 0.0
    %3309 = vadd.xlane.f32.xlu0 %v3308
    %v3310 = vpop.xlane.xlu0 %3309
    %v3311 = vsel %vm985, %v3260, 0.0
    %3312 = vadd.xlane.f32.xlu0 %v3311
    %v3313 = vpop.xlane.xlu0 %3312
    %v3314 = vsel %vm985, %v3262, 0.0
    %3315 = vadd.xlane.f32.xlu0 %v3314
    %v3316 = vpop.xlane.xlu0 %3315
    %v3317 = vsel %vm985, %v3264, 0.0
    %3318 = vadd.xlane.f32.xlu0 %v3317
    %v3319 = vpop.xlane.xlu0 %3318
    %v3320 = vsel %vm985, %v3266, 0.0
    %3321 = vadd.xlane.f32.xlu0 %v3320
    %v3322 = vpop.xlane.xlu0 %3321
    %v3323 = vsel %vm985, %v3268, 0.0
    %3324 = vadd.xlane.f32.xlu0 %v3323
    %v3325 = vpop.xlane.xlu0 %3324
    %v3326 = vsel %vm985, %v3270, 0.0
    %3327 = vadd.xlane.f32.xlu0 %v3326
    %v3328 = vpop.xlane.xlu0 %3327
    %v3329 = vsel %vm985, %v3272, 0.0
    %3330 = vadd.xlane.f32.xlu0 %v3329
    %v3331 = vpop.xlane.xlu0 %3330
    %v3332 = vsel %vm985, %v3274, 0.0
    %3333 = vadd.xlane.f32.xlu0 %v3332
    %v3334 = vpop.xlane.xlu0 %3333
    %v3335 = vsel %vm985, %v3276, 0.0
    %3336 = vadd.xlane.f32.xlu0 %v3335
    %v3337 = vpop.xlane.xlu0 %3336
    %v3338 = vsel %vm985, %v3278, 0.0
    %3339 = vadd.xlane.f32.xlu0 %v3338
    %v3340 = vpop.xlane.xlu0 %3339
    %v3341 = vsel %vm985, %v3280, 0.0
    %3342 = vadd.xlane.f32.xlu0 %v3341
    %v3343 = vpop.xlane.xlu0 %3342
    %v3344 = vsel %vm985, %v3282, 0.0
    %3345 = vadd.xlane.f32.xlu0 %v3344
    %v3346 = vpop.xlane.xlu0 %3345
    %v3347 = vsel %vm985, %v3284, 0.0
    %3348 = vadd.xlane.f32.xlu0 %v3347
    %v3349 = vpop.xlane.xlu0 %3348
    %v3350 = vsel %vm985, %v3286, 0.0
    %3351 = vadd.xlane.f32.xlu0 %v3350
    %v3352 = vpop.xlane.xlu0 %3351
    %v3353 = vsel %vm985, %v3288, 0.0
    %3354 = vadd.xlane.f32.xlu0 %v3353
    %v3355 = vpop.xlane.xlu0 %3354
    %v3356 = vsel %vm985, %v3290, 0.0
    %3357 = vadd.xlane.f32.xlu0 %v3356
    %v3358 = vpop.xlane.xlu0 %3357
    %v3359 = vsel %vm985, %v3292, 0.0
    %3360 = vadd.xlane.f32.xlu0 %v3359
    %v3361 = vpop.xlane.xlu0 %3360
    %v3362 = vsel %vm985, %v3294, 0.0
    %3363 = vadd.xlane.f32.xlu0 %v3362
    %v3364 = vpop.xlane.xlu0 %3363
    %v3365 = vsel %vm985, %v3296, 0.0
    %3366 = vadd.xlane.f32.xlu0 %v3365
    %v3367 = vpop.xlane.xlu0 %3366
    %v3368 = vsel %vm985, %v3298, 0.0
    %3369 = vadd.xlane.f32.xlu0 %v3368
    %v3370 = vpop.xlane.xlu0 %3369
    %v3371 = vrcp.pop %v3301
    %v3372 = vrcp.pop %v3304
    %v3373 = vrcp.pop %v3307
    %v3374 = vrcp.pop %v3310
    %v3375 = vrcp.pop %v3313
    %v3376 = vrcp.pop %v3316
    %v3377 = vrcp.pop %v3319
    %v3378 = vrcp.pop %v3322
    %v3379 = vrcp.pop %v3325
    %v3380 = vrcp.pop %v3328
    %v3381 = vrcp.pop %v3331
    %v3382 = vrcp.pop %v3334
    %v3383 = vrcp.pop %v3337
    %v3384 = vrcp.pop %v3340
    %v3385 = vrcp.pop %v3343
    %v3386 = vrcp.pop %v3346
    %v3387 = vrcp.pop %v3349
    %v3388 = vrcp.pop %v3352
    %v3389 = vrcp.pop %v3355
    %v3390 = vrcp.pop %v3358
    %v3391 = vrcp.pop %v3361
    %v3392 = vrcp.pop %v3364
    %v3393 = vrcp.pop %v3367
    %v3394 = vrcp.pop %v3370
    %v3395 = vmul.f32 %v3252, %v3371
    %v3396 = vmul.f32 %v3254, %v3372
    %v3397 = vmul.f32 %v3256, %v3373
    %v3398 = vmul.f32 %v3258, %v3374
    %v3399 = vmul.f32 %v3260, %v3375
    %v3400 = vmul.f32 %v3262, %v3376
    %v3401 = vmul.f32 %v3264, %v3377
    %v3402 = vmul.f32 %v3266, %v3378
    %v3403 = vmul.f32 %v3268, %v3379
    %v3404 = vmul.f32 %v3270, %v3380
    %v3405 = vmul.f32 %v3272, %v3381
    %v3406 = vmul.f32 %v3274, %v3382
    %v3407 = vmul.f32 %v3276, %v3383
    %v3408 = vmul.f32 %v3278, %v3384
    %v3409 = vmul.f32 %v3280, %v3385
    %v3410 = vmul.f32 %v3282, %v3386
    %v3411 = vmul.f32 %v3284, %v3387
    %v3412 = vmul.f32 %v3286, %v3388
    %v3413 = vmul.f32 %v3288, %v3389
    %v3414 = vmul.f32 %v3290, %v3390
    %v3415 = vmul.f32 %v3292, %v3391
    %v3416 = vmul.f32 %v3294, %v3392
    %v3417 = vmul.f32 %v3296, %v3393
    %v3418 = vmul.f32 %v3298, %v3394
    %v3419 = vpack.c.bf16 %v3396, %v3395
    %v3420 = vpack.c.bf16 %v3397, %v3397
    %v3421 = vpack.c.bf16 %v3399, %v3398
    %v3422 = vpack.c.bf16 %v3400, %v3400
    %v3423 = vpack.c.bf16 %v3402, %v3401
    %v3424 = vpack.c.bf16 %v3403, %v3403
    %v3425 = vpack.c.bf16 %v3405, %v3404
    %v3426 = vpack.c.bf16 %v3406, %v3406
    %v3427 = vpack.c.bf16 %v3408, %v3407
    %v3428 = vpack.c.bf16 %v3409, %v3409
    %v3429 = vpack.c.bf16 %v3411, %v3410
    %v3430 = vpack.c.bf16 %v3412, %v3412
    %v3431 = vpack.c.bf16 %v3414, %v3413
    %v3432 = vpack.c.bf16 %v3415, %v3415
    %v3433 = vpack.c.bf16 %v3417, %v3416
    %v3434 = vpack.c.bf16 %v3418, %v3418
    %3435 = vrot.lane.b32.xlu0 %v2563, 64
    %v3436 = vpop.permute.xlu0 %3435
    %3437 = vrot.lane.b32.xlu0 %v2564, 64
    %v3438 = vpop.permute.xlu0 %3437
    %v3441 = vsel %vm985, %v3419, 0
    %v3444 = vsel %vm985, %v3420, 0
    %v3447 = vsel %vm1277, %v3438, 0
    %3449 = vmatprep.subr.bf16.mxu0 0
    %3450 = vmatpush1.bf16.msra.mxu0 0
    %3451 = vmatprep.subr.bf16.mxu0 0
    %3452 = vmatpush1.bf16.msra.mxu0 0
    %3453 = vmatprep.subr.bf16.mxu0 0
    %3454 = vmatpush1.bf16.msra.mxu0 0
    %3455 = vmatprep.subr.bf16.mxu0 0
    %3456 = vmatpush1.bf16.msra.mxu0 0
    %3457 = vmatprep.subr.bf16.mxu0 0
    %3458 = vmatpush1.bf16.msra.mxu0 0
    %3459 = vmatprep.subr.bf16.mxu0 0
    %3460 = vmatpush1.bf16.msra.mxu0 0
    %3461 = vmatprep.subr.bf16.mxu0 0
    %3462 = vmatpush1.bf16.msra.mxu0 %v3447
    %3463 = vmatprep.subr.bf16.mxu0 0
    %3464 = vmatpush1.bf16.msra.mxu0 %v3436
    %3465 = vmatprep.subr.bf16.mxu0 0
    %3466 = vmatpush2.bf16.msra.mxu0 0
    %3467 = vmatprep.subr.bf16.mxu0 0
    %3468 = vmatpush2.bf16.msra.mxu0 0
    %3469 = vmatprep.subr.bf16.mxu0 0
    %3470 = vmatpush2.bf16.msra.mxu0 0
    %3471 = vmatprep.subr.bf16.mxu0 0
    %3472 = vmatpush2.bf16.msra.mxu0 0
    %3473 = vmatprep.subr.bf16.mxu0 0
    %3474 = vmatpush2.bf16.msra.mxu0 0
    %3475 = vmatprep.subr.bf16.mxu0 0
    %3476 = vmatpush2.bf16.msra.mxu0 0
    %3477 = vmatprep.subr.bf16.mxu0 0
    %3478 = vmatpush2.bf16.msra.mxu0 0
    %3479 = vmatprep.subr.bf16.mxu0 0
    %3480 = vmatpush2.bf16.msra.mxu0 0
    %3481 = vmatprep.mubr.bf16.mxu0 0
    %3482 = vmatmul.mubr.bf16.gmra.mxu0 %v3441
    %v3483 = vpop.f32.mrf.mxu0
    %v3484 = vadd.f32 0.0, %v3483
    %v3485 = vpop.f32.mrf.mxu0
    %v3486 = vpop.f32.mrf.mxu0
    %v3487 = vadd.f32 0.0, %v3486
    %v3488 = vpop.f32.mrf.mxu0
    %3489 = vmatprep.mubr.bf16.mxu0 0
    %3490 = vmatmul.mubr.bf16.gmra.mxu0 %v3444
    %v3491 = vpop.f32.mrf.mxu0
    %v3492 = vadd.f32 0.0, %v3491
    %v3493 = vpop.f32.mrf.mxu0
    %v3494 = vpop.f32.mrf.mxu0
    %v3495 = vpop.f32.mrf.mxu0
    %3496 = vdwg.mxu0
    %3497 = vrot.lane.b32.xlu0 %v2565, 64
    %v3498 = vpop.permute.xlu0 %3497
    %3499 = vrot.lane.b32.xlu0 %v2566, 64
    %v3500 = vpop.permute.xlu0 %3499
    %v3503 = vsel %vm985, %v3421, 0
    %v3506 = vsel %vm985, %v3422, 0
    %v3509 = vsel %vm1277, %v3500, 0
    %3511 = vmatprep.subr.bf16.mxu0 0
    %3512 = vmatpush1.bf16.msra.mxu0 0
    %3513 = vmatprep.subr.bf16.mxu0 0
    %3514 = vmatpush1.bf16.msra.mxu0 0
    %3515 = vmatprep.subr.bf16.mxu0 0
    %3516 = vmatpush1.bf16.msra.mxu0 0
    %3517 = vmatprep.subr.bf16.mxu0 0
    %3518 = vmatpush1.bf16.msra.mxu0 0
    %3519 = vmatprep.subr.bf16.mxu0 0
    %3520 = vmatpush1.bf16.msra.mxu0 0
    %3521 = vmatprep.subr.bf16.mxu0 0
    %3522 = vmatpush1.bf16.msra.mxu0 0
    %3523 = vmatprep.subr.bf16.mxu0 0
    %3524 = vmatpush1.bf16.msra.mxu0 %v3509
    %3525 = vmatprep.subr.bf16.mxu0 0
    %3526 = vmatpush1.bf16.msra.mxu0 %v3498
    %3527 = vmatprep.subr.bf16.mxu0 0
    %3528 = vmatpush2.bf16.msra.mxu0 0
    %3529 = vmatprep.subr.bf16.mxu0 0
    %3530 = vmatpush2.bf16.msra.mxu0 0
    %3531 = vmatprep.subr.bf16.mxu0 0
    %3532 = vmatpush2.bf16.msra.mxu0 0
    %3533 = vmatprep.subr.bf16.mxu0 0
    %3534 = vmatpush2.bf16.msra.mxu0 0
    %3535 = vmatprep.subr.bf16.mxu0 0
    %3536 = vmatpush2.bf16.msra.mxu0 0
    %3537 = vmatprep.subr.bf16.mxu0 0
    %3538 = vmatpush2.bf16.msra.mxu0 0
    %3539 = vmatprep.subr.bf16.mxu0 0
    %3540 = vmatpush2.bf16.msra.mxu0 0
    %3541 = vmatprep.subr.bf16.mxu0 0
    %3542 = vmatpush2.bf16.msra.mxu0 0
    %3543 = vmatprep.mubr.bf16.mxu0 0
    %3544 = vmatmul.mubr.bf16.gmra.mxu0 %v3503
    %v3545 = vpop.f32.mrf.mxu0
    %v3546 = vadd.f32 0.0, %v3545
    %v3547 = vpop.f32.mrf.mxu0
    %v3548 = vpop.f32.mrf.mxu0
    %v3549 = vadd.f32 0.0, %v3548
    %v3550 = vpop.f32.mrf.mxu0
    %3551 = vmatprep.mubr.bf16.mxu0 0
    %3552 = vmatmul.mubr.bf16.gmra.mxu0 %v3506
    %v3553 = vpop.f32.mrf.mxu0
    %v3554 = vadd.f32 0.0, %v3553
    %v3555 = vpop.f32.mrf.mxu0
    %v3556 = vpop.f32.mrf.mxu0
    %v3557 = vpop.f32.mrf.mxu0
    %3558 = vdwg.mxu0
    %3559 = vrot.lane.b32.xlu0 %v2567, 64
    %v3560 = vpop.permute.xlu0 %3559
    %3561 = vrot.lane.b32.xlu0 %v2568, 64
    %v3562 = vpop.permute.xlu0 %3561
    %v3565 = vsel %vm985, %v3423, 0
    %v3568 = vsel %vm985, %v3424, 0
    %v3571 = vsel %vm1277, %v3562, 0
    %3573 = vmatprep.subr.bf16.mxu0 0
    %3574 = vmatpush1.bf16.msra.mxu0 0
    %3575 = vmatprep.subr.bf16.mxu0 0
    %3576 = vmatpush1.bf16.msra.mxu0 0
    %3577 = vmatprep.subr.bf16.mxu0 0
    %3578 = vmatpush1.bf16.msra.mxu0 0
    %3579 = vmatprep.subr.bf16.mxu0 0
    %3580 = vmatpush1.bf16.msra.mxu0 0
    %3581 = vmatprep.subr.bf16.mxu0 0
    %3582 = vmatpush1.bf16.msra.mxu0 0
    %3583 = vmatprep.subr.bf16.mxu0 0
    %3584 = vmatpush1.bf16.msra.mxu0 0
    %3585 = vmatprep.subr.bf16.mxu0 0
    %3586 = vmatpush1.bf16.msra.mxu0 %v3571
    %3587 = vmatprep.subr.bf16.mxu0 0
    %3588 = vmatpush1.bf16.msra.mxu0 %v3560
    %3589 = vmatprep.subr.bf16.mxu0 0
    %3590 = vmatpush2.bf16.msra.mxu0 0
    %3591 = vmatprep.subr.bf16.mxu0 0
    %3592 = vmatpush2.bf16.msra.mxu0 0
    %3593 = vmatprep.subr.bf16.mxu0 0
    %3594 = vmatpush2.bf16.msra.mxu0 0
    %3595 = vmatprep.subr.bf16.mxu0 0
    %3596 = vmatpush2.bf16.msra.mxu0 0
    %3597 = vmatprep.subr.bf16.mxu0 0
    %3598 = vmatpush2.bf16.msra.mxu0 0
    %3599 = vmatprep.subr.bf16.mxu0 0
    %3600 = vmatpush2.bf16.msra.mxu0 0
    %3601 = vmatprep.subr.bf16.mxu0 0
    %3602 = vmatpush2.bf16.msra.mxu0 0
    %3603 = vmatprep.subr.bf16.mxu0 0
    %3604 = vmatpush2.bf16.msra.mxu0 0
    %3605 = vmatprep.mubr.bf16.mxu0 0
    %3606 = vmatmul.mubr.bf16.gmra.mxu0 %v3565
    %v3607 = vpop.f32.mrf.mxu0
    %v3608 = vadd.f32 0.0, %v3607
    %v3609 = vpop.f32.mrf.mxu0
    %v3610 = vpop.f32.mrf.mxu0
    %v3611 = vadd.f32 0.0, %v3610
    %v3612 = vpop.f32.mrf.mxu0
    %3613 = vmatprep.mubr.bf16.mxu0 0
    %3614 = vmatmul.mubr.bf16.gmra.mxu0 %v3568
    %v3615 = vpop.f32.mrf.mxu0
    %v3616 = vadd.f32 0.0, %v3615
    %v3617 = vpop.f32.mrf.mxu0
    %v3618 = vpop.f32.mrf.mxu0
    %v3619 = vpop.f32.mrf.mxu0
    %3620 = vdwg.mxu0
    %3621 = vrot.lane.b32.xlu0 %v2569, 64
    %v3622 = vpop.permute.xlu0 %3621
    %3623 = vrot.lane.b32.xlu0 %v2570, 64
    %v3624 = vpop.permute.xlu0 %3623
    %v3627 = vsel %vm985, %v3425, 0
    %v3630 = vsel %vm985, %v3426, 0
    %v3633 = vsel %vm1277, %v3624, 0
    %3635 = vmatprep.subr.bf16.mxu0 0
    %3636 = vmatpush1.bf16.msra.mxu0 0
    %3637 = vmatprep.subr.bf16.mxu0 0
    %3638 = vmatpush1.bf16.msra.mxu0 0
    %3639 = vmatprep.subr.bf16.mxu0 0
    %3640 = vmatpush1.bf16.msra.mxu0 0
    %3641 = vmatprep.subr.bf16.mxu0 0
    %3642 = vmatpush1.bf16.msra.mxu0 0
    %3643 = vmatprep.subr.bf16.mxu0 0
    %3644 = vmatpush1.bf16.msra.mxu0 0
    %3645 = vmatprep.subr.bf16.mxu0 0
    %3646 = vmatpush1.bf16.msra.mxu0 0
    %3647 = vmatprep.subr.bf16.mxu0 0
    %3648 = vmatpush1.bf16.msra.mxu0 %v3633
    %3649 = vmatprep.subr.bf16.mxu0 0
    %3650 = vmatpush1.bf16.msra.mxu0 %v3622
    %3651 = vmatprep.subr.bf16.mxu0 0
    %3652 = vmatpush2.bf16.msra.mxu0 0
    %3653 = vmatprep.subr.bf16.mxu0 0
    %3654 = vmatpush2.bf16.msra.mxu0 0
    %3655 = vmatprep.subr.bf16.mxu0 0
    %3656 = vmatpush2.bf16.msra.mxu0 0
    %3657 = vmatprep.subr.bf16.mxu0 0
    %3658 = vmatpush2.bf16.msra.mxu0 0
    %3659 = vmatprep.subr.bf16.mxu0 0
    %3660 = vmatpush2.bf16.msra.mxu0 0
    %3661 = vmatprep.subr.bf16.mxu0 0
    %3662 = vmatpush2.bf16.msra.mxu0 0
    %3663 = vmatprep.subr.bf16.mxu0 0
    %3664 = vmatpush2.bf16.msra.mxu0 0
    %3665 = vmatprep.subr.bf16.mxu0 0
    %3666 = vmatpush2.bf16.msra.mxu0 0
    %3667 = vmatprep.mubr.bf16.mxu0 0
    %3668 = vmatmul.mubr.bf16.gmra.mxu0 %v3627
    %v3669 = vpop.f32.mrf.mxu0
    %v3670 = vadd.f32 0.0, %v3669
    %v3671 = vpop.f32.mrf.mxu0
    %v3672 = vpop.f32.mrf.mxu0
    %v3673 = vadd.f32 0.0, %v3672
    %v3674 = vpop.f32.mrf.mxu0
    %3675 = vmatprep.mubr.bf16.mxu0 0
    %3676 = vmatmul.mubr.bf16.gmra.mxu0 %v3630
    %v3677 = vpop.f32.mrf.mxu0
    %v3678 = vadd.f32 0.0, %v3677
    %v3679 = vpop.f32.mrf.mxu0
    %v3680 = vpop.f32.mrf.mxu0
    %v3681 = vpop.f32.mrf.mxu0
    %3682 = vdwg.mxu0
    %3683 = vrot.lane.b32.xlu0 %v2571, 64
    %v3684 = vpop.permute.xlu0 %3683
    %3685 = vrot.lane.b32.xlu0 %v2572, 64
    %v3686 = vpop.permute.xlu0 %3685
    %v3689 = vsel %vm985, %v3427, 0
    %v3692 = vsel %vm985, %v3428, 0
    %v3695 = vsel %vm1277, %v3686, 0
    %3697 = vmatprep.subr.bf16.mxu0 0
    %3698 = vmatpush1.bf16.msra.mxu0 0
    %3699 = vmatprep.subr.bf16.mxu0 0
    %3700 = vmatpush1.bf16.msra.mxu0 0
    %3701 = vmatprep.subr.bf16.mxu0 0
    %3702 = vmatpush1.bf16.msra.mxu0 0
    %3703 = vmatprep.subr.bf16.mxu0 0
    %3704 = vmatpush1.bf16.msra.mxu0 0
    %3705 = vmatprep.subr.bf16.mxu0 0
    %3706 = vmatpush1.bf16.msra.mxu0 0
    %3707 = vmatprep.subr.bf16.mxu0 0
    %3708 = vmatpush1.bf16.msra.mxu0 0
    %3709 = vmatprep.subr.bf16.mxu0 0
    %3710 = vmatpush1.bf16.msra.mxu0 %v3695
    %3711 = vmatprep.subr.bf16.mxu0 0
    %3712 = vmatpush1.bf16.msra.mxu0 %v3684
    %3713 = vmatprep.subr.bf16.mxu0 0
    %3714 = vmatpush2.bf16.msra.mxu0 0
    %3715 = vmatprep.subr.bf16.mxu0 0
    %3716 = vmatpush2.bf16.msra.mxu0 0
    %3717 = vmatprep.subr.bf16.mxu0 0
    %3718 = vmatpush2.bf16.msra.mxu0 0
    %3719 = vmatprep.subr.bf16.mxu0 0
    %3720 = vmatpush2.bf16.msra.mxu0 0
    %3721 = vmatprep.subr.bf16.mxu0 0
    %3722 = vmatpush2.bf16.msra.mxu0 0
    %3723 = vmatprep.subr.bf16.mxu0 0
    %3724 = vmatpush2.bf16.msra.mxu0 0
    %3725 = vmatprep.subr.bf16.mxu0 0
    %3726 = vmatpush2.bf16.msra.mxu0 0
    %3727 = vmatprep.subr.bf16.mxu0 0
    %3728 = vmatpush2.bf16.msra.mxu0 0
    %3729 = vmatprep.mubr.bf16.mxu0 0
    %3730 = vmatmul.mubr.bf16.gmra.mxu0 %v3689
    %v3731 = vpop.f32.mrf.mxu0
    %v3732 = vadd.f32 0.0, %v3731
    %v3733 = vpop.f32.mrf.mxu0
    %v3734 = vpop.f32.mrf.mxu0
    %v3735 = vadd.f32 0.0, %v3734
    %v3736 = vpop.f32.mrf.mxu0
    %3737 = vmatprep.mubr.bf16.mxu0 0
    %3738 = vmatmul.mubr.bf16.gmra.mxu0 %v3692
    %v3739 = vpop.f32.mrf.mxu0
    %v3740 = vadd.f32 0.0, %v3739
    %v3741 = vpop.f32.mrf.mxu0
    %v3742 = vpop.f32.mrf.mxu0
    %v3743 = vpop.f32.mrf.mxu0
    %3744 = vdwg.mxu0
    %3745 = vrot.lane.b32.xlu0 %v2573, 64
    %v3746 = vpop.permute.xlu0 %3745
    %3747 = vrot.lane.b32.xlu0 %v2574, 64
    %v3748 = vpop.permute.xlu0 %3747
    %v3751 = vsel %vm985, %v3429, 0
    %v3754 = vsel %vm985, %v3430, 0
    %v3757 = vsel %vm1277, %v3748, 0
    %3759 = vmatprep.subr.bf16.mxu0 0
    %3760 = vmatpush1.bf16.msra.mxu0 0
    %3761 = vmatprep.subr.bf16.mxu0 0
    %3762 = vmatpush1.bf16.msra.mxu0 0
    %3763 = vmatprep.subr.bf16.mxu0 0
    %3764 = vmatpush1.bf16.msra.mxu0 0
    %3765 = vmatprep.subr.bf16.mxu0 0
    %3766 = vmatpush1.bf16.msra.mxu0 0
    %3767 = vmatprep.subr.bf16.mxu0 0
    %3768 = vmatpush1.bf16.msra.mxu0 0
    %3769 = vmatprep.subr.bf16.mxu0 0
    %3770 = vmatpush1.bf16.msra.mxu0 0
    %3771 = vmatprep.subr.bf16.mxu0 0
    %3772 = vmatpush1.bf16.msra.mxu0 %v3757
    %3773 = vmatprep.subr.bf16.mxu0 0
    %3774 = vmatpush1.bf16.msra.mxu0 %v3746
    %3775 = vmatprep.subr.bf16.mxu0 0
    %3776 = vmatpush2.bf16.msra.mxu0 0
    %3777 = vmatprep.subr.bf16.mxu0 0
    %3778 = vmatpush2.bf16.msra.mxu0 0
    %3779 = vmatprep.subr.bf16.mxu0 0
    %3780 = vmatpush2.bf16.msra.mxu0 0
    %3781 = vmatprep.subr.bf16.mxu0 0
    %3782 = vmatpush2.bf16.msra.mxu0 0
    %3783 = vmatprep.subr.bf16.mxu0 0
    %3784 = vmatpush2.bf16.msra.mxu0 0
    %3785 = vmatprep.subr.bf16.mxu0 0
    %3786 = vmatpush2.bf16.msra.mxu0 0
    %3787 = vmatprep.subr.bf16.mxu0 0
    %3788 = vmatpush2.bf16.msra.mxu0 0
    %3789 = vmatprep.subr.bf16.mxu0 0
    %3790 = vmatpush2.bf16.msra.mxu0 0
    %3791 = vmatprep.mubr.bf16.mxu0 0
    %3792 = vmatmul.mubr.bf16.gmra.mxu0 %v3751
    %v3793 = vpop.f32.mrf.mxu0
    %v3794 = vadd.f32 0.0, %v3793
    %v3795 = vpop.f32.mrf.mxu0
    %v3796 = vpop.f32.mrf.mxu0
    %v3797 = vadd.f32 0.0, %v3796
    %v3798 = vpop.f32.mrf.mxu0
    %3799 = vmatprep.mubr.bf16.mxu0 0
    %3800 = vmatmul.mubr.bf16.gmra.mxu0 %v3754
    %v3801 = vpop.f32.mrf.mxu0
    %v3802 = vadd.f32 0.0, %v3801
    %v3803 = vpop.f32.mrf.mxu0
    %v3804 = vpop.f32.mrf.mxu0
    %v3805 = vpop.f32.mrf.mxu0
    %3806 = vdwg.mxu0
    %3807 = vrot.lane.b32.xlu0 %v2575, 64
    %v3808 = vpop.permute.xlu0 %3807
    %3809 = vrot.lane.b32.xlu0 %v2576, 64
    %v3810 = vpop.permute.xlu0 %3809
    %v3813 = vsel %vm985, %v3431, 0
    %v3816 = vsel %vm985, %v3432, 0
    %v3819 = vsel %vm1277, %v3810, 0
    %3821 = vmatprep.subr.bf16.mxu0 0
    %3822 = vmatpush1.bf16.msra.mxu0 0
    %3823 = vmatprep.subr.bf16.mxu0 0
    %3824 = vmatpush1.bf16.msra.mxu0 0
    %3825 = vmatprep.subr.bf16.mxu0 0
    %3826 = vmatpush1.bf16.msra.mxu0 0
    %3827 = vmatprep.subr.bf16.mxu0 0
    %3828 = vmatpush1.bf16.msra.mxu0 0
    %3829 = vmatprep.subr.bf16.mxu0 0
    %3830 = vmatpush1.bf16.msra.mxu0 0
    %3831 = vmatprep.subr.bf16.mxu0 0
    %3832 = vmatpush1.bf16.msra.mxu0 0
    %3833 = vmatprep.subr.bf16.mxu0 0
    %3834 = vmatpush1.bf16.msra.mxu0 %v3819
    %3835 = vmatprep.subr.bf16.mxu0 0
    %3836 = vmatpush1.bf16.msra.mxu0 %v3808
    %3837 = vmatprep.subr.bf16.mxu0 0
    %3838 = vmatpush2.bf16.msra.mxu0 0
    %3839 = vmatprep.subr.bf16.mxu0 0
    %3840 = vmatpush2.bf16.msra.mxu0 0
    %3841 = vmatprep.subr.bf16.mxu0 0
    %3842 = vmatpush2.bf16.msra.mxu0 0
    %3843 = vmatprep.subr.bf16.mxu0 0
    %3844 = vmatpush2.bf16.msra.mxu0 0
    %3845 = vmatprep.subr.bf16.mxu0 0
    %3846 = vmatpush2.bf16.msra.mxu0 0
    %3847 = vmatprep.subr.bf16.mxu0 0
    %3848 = vmatpush2.bf16.msra.mxu0 0
    %3849 = vmatprep.subr.bf16.mxu0 0
    %3850 = vmatpush2.bf16.msra.mxu0 0
    %3851 = vmatprep.subr.bf16.mxu0 0
    %3852 = vmatpush2.bf16.msra.mxu0 0
    %3853 = vmatprep.mubr.bf16.mxu0 0
    %3854 = vmatmul.mubr.bf16.gmra.mxu0 %v3813
    %v3855 = vpop.f32.mrf.mxu0
    %v3856 = vadd.f32 0.0, %v3855
    %v3857 = vpop.f32.mrf.mxu0
    %v3858 = vpop.f32.mrf.mxu0
    %v3859 = vadd.f32 0.0, %v3858
    %v3860 = vpop.f32.mrf.mxu0
    %3861 = vmatprep.mubr.bf16.mxu0 0
    %3862 = vmatmul.mubr.bf16.gmra.mxu0 %v3816
    %v3863 = vpop.f32.mrf.mxu0
    %v3864 = vadd.f32 0.0, %v3863
    %v3865 = vpop.f32.mrf.mxu0
    %v3866 = vpop.f32.mrf.mxu0
    %v3867 = vpop.f32.mrf.mxu0
    %3868 = vdwg.mxu0
    %3869 = vrot.lane.b32.xlu0 %v2577, 64
    %v3870 = vpop.permute.xlu0 %3869
    %3871 = vrot.lane.b32.xlu0 %v2578, 64
    %v3872 = vpop.permute.xlu0 %3871
    %v3875 = vsel %vm985, %v3433, 0
    %v3878 = vsel %vm985, %v3434, 0
    %v3881 = vsel %vm1277, %v3872, 0
    %3883 = vmatprep.subr.bf16.mxu0 0
    %3884 = vmatpush1.bf16.msra.mxu0 0
    %3885 = vmatprep.subr.bf16.mxu0 0
    %3886 = vmatpush1.bf16.msra.mxu0 0
    %3887 = vmatprep.subr.bf16.mxu0 0
    %3888 = vmatpush1.bf16.msra.mxu0 0
    %3889 = vmatprep.subr.bf16.mxu0 0
    %3890 = vmatpush1.bf16.msra.mxu0 0
    %3891 = vmatprep.subr.bf16.mxu0 0
    %3892 = vmatpush1.bf16.msra.mxu0 0
    %3893 = vmatprep.subr.bf16.mxu0 0
    %3894 = vmatpush1.bf16.msra.mxu0 0
    %3895 = vmatprep.subr.bf16.mxu0 0
    %3896 = vmatpush1.bf16.msra.mxu0 %v3881
    %3897 = vmatprep.subr.bf16.mxu0 0
    %3898 = vmatpush1.bf16.msra.mxu0 %v3870
    %3899 = vmatprep.subr.bf16.mxu0 0
    %3900 = vmatpush2.bf16.msra.mxu0 0
    %3901 = vmatprep.subr.bf16.mxu0 0
    %3902 = vmatpush2.bf16.msra.mxu0 0
    %3903 = vmatprep.subr.bf16.mxu0 0
    %3904 = vmatpush2.bf16.msra.mxu0 0
    %3905 = vmatprep.subr.bf16.mxu0 0
    %3906 = vmatpush2.bf16.msra.mxu0 0
    %3907 = vmatprep.subr.bf16.mxu0 0
    %3908 = vmatpush2.bf16.msra.mxu0 0
    %3909 = vmatprep.subr.bf16.mxu0 0
    %3910 = vmatpush2.bf16.msra.mxu0 0
    %3911 = vmatprep.subr.bf16.mxu0 0
    %3912 = vmatpush2.bf16.msra.mxu0 0
    %3913 = vmatprep.subr.bf16.mxu0 0
    %3914 = vmatpush2.bf16.msra.mxu0 0
    %3915 = vmatprep.mubr.bf16.mxu0 0
    %3916 = vmatmul.mubr.bf16.gmra.mxu0 %v3875
    %v3917 = vpop.f32.mrf.mxu0
    %v3918 = vadd.f32 0.0, %v3917
    %v3919 = vpop.f32.mrf.mxu0
    %v3920 = vpop.f32.mrf.mxu0
    %v3921 = vadd.f32 0.0, %v3920
    %v3922 = vpop.f32.mrf.mxu0
    %3923 = vmatprep.mubr.bf16.mxu0 0
    %3924 = vmatmul.mubr.bf16.gmra.mxu0 %v3878
    %v3925 = vpop.f32.mrf.mxu0
    %v3926 = vadd.f32 0.0, %v3925
    %v3927 = vpop.f32.mrf.mxu0
    %v3928 = vpop.f32.mrf.mxu0
    %v3929 = vpop.f32.mrf.mxu0
    %3930 = vdwg.mxu0
    %3934 = vrot.lane.b32.xlu0 %v3546, 8
    %v3935 = vpop.permute.xlu0 %3934
    %3936 = vrot.lane.b32.xlu0 %v3549, 8
    %v3937 = vpop.permute.xlu0 %3936
    %3938 = vrot.lane.b32.xlu0 %v3554, 8
    %v3939 = vpop.permute.xlu0 %3938
    %3946 = vrot.lane.b32.xlu0 %v3608, 16
    %v3947 = vpop.permute.xlu0 %3946
    %3948 = vrot.lane.b32.xlu0 %v3611, 16
    %v3949 = vpop.permute.xlu0 %3948
    %3950 = vrot.lane.b32.xlu0 %v3616, 16
    %v3951 = vpop.permute.xlu0 %3950
    %3958 = vrot.lane.b32.xlu0 %v3670, 24
    %v3959 = vpop.permute.xlu0 %3958
    %3960 = vrot.lane.b32.xlu0 %v3673, 24
    %v3961 = vpop.permute.xlu0 %3960
    %3962 = vrot.lane.b32.xlu0 %v3678, 24
    %v3963 = vpop.permute.xlu0 %3962
    %v3967 = vsel %vm414, %v3484, %v3935
    %v3968 = vsel %vm414, %v3487, %v3937
    %v3969 = vsel %vm414, %v3492, %v3939
    %v3970 = vsel %vm1802, %v3967, %v3947
    %v3971 = vsel %vm1802, %v3968, %v3949
    %v3972 = vsel %vm1802, %v3969, %v3951
    %v3973 = vsel %vm985, %v3970, %v3959
    %v3974 = vsel %vm985, %v3971, %v3961
    %v3975 = vsel %vm985, %v3972, %v3963
    %3979 = vrot.lane.b32.xlu0 %v3794, 8
    %v3980 = vpop.permute.xlu0 %3979
    %3981 = vrot.lane.b32.xlu0 %v3797, 8
    %v3982 = vpop.permute.xlu0 %3981
    %3983 = vrot.lane.b32.xlu0 %v3802, 8
    %v3984 = vpop.permute.xlu0 %3983
    %3991 = vrot.lane.b32.xlu0 %v3856, 16
    %v3992 = vpop.permute.xlu0 %3991
    %3993 = vrot.lane.b32.xlu0 %v3859, 16
    %v3994 = vpop.permute.xlu0 %3993
    %3995 = vrot.lane.b32.xlu0 %v3864, 16
    %v3996 = vpop.permute.xlu0 %3995
    %4003 = vrot.lane.b32.xlu0 %v3918, 24
    %v4004 = vpop.permute.xlu0 %4003
    %4005 = vrot.lane.b32.xlu0 %v3921, 24
    %v4006 = vpop.permute.xlu0 %4005
    %4007 = vrot.lane.b32.xlu0 %v3926, 24
    %v4008 = vpop.permute.xlu0 %4007
    %v4012 = vsel %vm414, %v3732, %v3980
    %v4013 = vsel %vm414, %v3735, %v3982
    %v4014 = vsel %vm414, %v3740, %v3984
    %v4015 = vsel %vm1802, %v4012, %v3992
    %v4016 = vsel %vm1802, %v4013, %v3994
    %v4017 = vsel %vm1802, %v4014, %v3996
    %v4018 = vsel %vm985, %v4015, %v4004
    %v4019 = vsel %vm985, %v4016, %v4006
    %v4020 = vsel %vm985, %v4017, %v4008
    %v4021 = vpack.c.bf16 %v3974, %v3973
    %v4022 = vpack.c.bf16 %v4018, %v3975
    %v4023 = vpack.c.bf16 %v4020, %v4019
    %v4024 = vld [vmem:[#allocation2 + $0x78] sm:$0xf]
    %v4025 = vld [vmem:[#allocation2 + $0x7c] sm:$0xf]
    %v4026 = vld [vmem:[#allocation2 + $0x80] sm:$0xf]
    %v4027 = vld [vmem:[#allocation2 + $0x84] sm:$0xf]
    %v4028 = vld [vmem:[%s2 + $0x3b] sm:$0x1]
    %v4029 = vlaneseq
    %v4030 = vshrl.u32 %v4029, 7
    %v4031 = vsub.s32 0, %v4030
    %v4032 = vrot.slane %v4028, %v4031
    %v4037 = vunpack.c.l.b16 %v4024
    %v4038 = vunpack.c.l.b16 %v4025
    %v4039 = vunpack.c.l.b16 %v4026
    %v4040 = vunpack.c.l.b16 %v4027
    %v4041 = vpack.c.b16 %v4038, %v4037
    %v4042 = vpack.c.b16 %v4040, %v4039
    %v4046 = vsel %vm142, %v4021, 0
    %v4049 = vsel %vm142, %v4022, 0
    %v4052 = vsel %vm142, %v4023, 0
    %4054 = vmatprep.subr.bf16.mxu0 0
    %4055 = vmatpush1.bf16.msra.mxu0 0
    %4056 = vmatprep.subr.bf16.mxu0 0
    %4057 = vmatpush1.bf16.msra.mxu0 0
    %4058 = vmatprep.subr.bf16.mxu0 0
    %4059 = vmatpush1.bf16.msra.mxu0 0
    %4060 = vmatprep.subr.bf16.mxu0 0
    %4061 = vmatpush1.bf16.msra.mxu0 0
    %4062 = vmatprep.subr.bf16.mxu0 0
    %4063 = vmatpush1.bf16.msra.mxu0 0
    %4064 = vmatprep.subr.bf16.mxu0 0
    %4065 = vmatpush1.bf16.msra.mxu0 0
    %4066 = vmatprep.subr.bf16.mxu0 0
    %4067 = vmatpush1.bf16.msra.mxu0 %v4042
    %4068 = vmatprep.subr.bf16.mxu0 0
    %4069 = vmatpush1.bf16.msra.mxu0 %v4041
    %4070 = vmatprep.subr.bf16.mxu0 0
    %4071 = vmatpush2.bf16.msra.mxu0 0
    %4072 = vmatprep.subr.bf16.mxu0 0
    %4073 = vmatpush2.bf16.msra.mxu0 0
    %4074 = vmatprep.subr.bf16.mxu0 0
    %4075 = vmatpush2.bf16.msra.mxu0 0
    %4076 = vmatprep.subr.bf16.mxu0 0
    %4077 = vmatpush2.bf16.msra.mxu0 0
    %4078 = vmatprep.subr.bf16.mxu0 0
    %4079 = vmatpush2.bf16.msra.mxu0 0
    %4080 = vmatprep.subr.bf16.mxu0 0
    %4081 = vmatpush2.bf16.msra.mxu0 0
    %4082 = vmatprep.subr.bf16.mxu0 0
    %4083 = vmatpush2.bf16.msra.mxu0 0
    %4084 = vmatprep.subr.bf16.mxu0 0
    %4085 = vmatpush2.bf16.msra.mxu0 0
    %4086 = vmatprep.mubr.bf16.mxu0 0
    %4087 = vmatmul.mubr.bf16.gmra.mxu0 %v4046
    %v4088 = vpop.f32.mrf.mxu0
    %v4089 = vadd.f32 %v4032, %v4088
    %v4090 = vpop.f32.mrf.mxu0
    %v4091 = vpop.f32.mrf.mxu0
    %v4092 = vadd.f32 %v4032, %v4091
    %v4093 = vpop.f32.mrf.mxu0
    %4094 = vmatprep.mubr.bf16.mxu0 0
    %4095 = vmatmul.mubr.bf16.gmra.mxu0 %v4049
    %v4096 = vpop.f32.mrf.mxu0
    %v4097 = vadd.f32 %v4032, %v4096
    %v4098 = vpop.f32.mrf.mxu0
    %v4099 = vpop.f32.mrf.mxu0
    %v4100 = vadd.f32 %v4032, %v4099
    %v4101 = vpop.f32.mrf.mxu0
    %4102 = vmatprep.mubr.bf16.mxu0 0
    %4103 = vmatmul.mubr.bf16.gmra.mxu0 %v4052
    %v4104 = vpop.f32.mrf.mxu0
    %v4105 = vadd.f32 %v4032, %v4104
    %v4106 = vpop.f32.mrf.mxu0
    %v4107 = vpop.f32.mrf.mxu0
    %v4108 = vadd.f32 %v4032, %v4107
    %v4109 = vpop.f32.mrf.mxu0
    %4110 = vdwg.mxu0
    %v4111 = vadd.f32 %v2307, %v4089
    %v4112 = vadd.f32 %v2308, %v4092
    %v4113 = vadd.f32 %v2309, %v4097
    %v4114 = vadd.f32 %v2310, %v4100
    %v4115 = vadd.f32 %v2311, %v4105
    %v4116 = vadd.f32 %v2312, %v4108
    %v4117 = vld [vmem:[%s2 + $0x3c] sm:$0x1]
    %v4118 = vld [vmem:[%s2 + $0x3d] sm:$0x1]
    %v4119 = vsel %vm142, %v4111, 0.0
    %4120 = vadd.xlane.f32.xlu0 %v4119
    %v4121 = vpop.xlane.xlu0 %4120
    %v4122 = vsel %vm142, %v4112, 0.0
    %4123 = vadd.xlane.f32.xlu0 %v4122
    %v4124 = vpop.xlane.xlu0 %4123
    %v4125 = vsel %vm142, %v4113, 0.0
    %4126 = vadd.xlane.f32.xlu0 %v4125
    %v4127 = vpop.xlane.xlu0 %4126
    %v4128 = vsel %vm142, %v4114, 0.0
    %4129 = vadd.xlane.f32.xlu0 %v4128
    %v4130 = vpop.xlane.xlu0 %4129
    %v4131 = vsel %vm142, %v4115, 0.0
    %4132 = vadd.xlane.f32.xlu0 %v4131
    %v4133 = vpop.xlane.xlu0 %4132
    %v4134 = vsel %vm142, %v4116, 0.0
    %4135 = vadd.xlane.f32.xlu0 %v4134
    %v4136 = vpop.xlane.xlu0 %4135
    %v4137 = vmul.f32 %v4121, %v161
    %v4138 = vmul.f32 %v4124, %v161
    %v4139 = vmul.f32 %v4127, %v161
    %v4140 = vmul.f32 %v4130, %v161
    %v4141 = vmul.f32 %v4133, %v161
    %v4142 = vmul.f32 %v4136, %v161
    %v4143 = vsub.f32 %v4111, %v4137
    %v4144 = vsub.f32 %v4112, %v4138
    %v4145 = vsub.f32 %v4113, %v4139
    %v4146 = vsub.f32 %v4114, %v4140
    %v4147 = vsub.f32 %v4115, %v4141
    %v4148 = vsub.f32 %v4116, %v4142
    %v4149 = vmul.f32 %v4143, %v4143
    %v4150 = vmul.f32 %v4144, %v4144
    %v4151 = vmul.f32 %v4145, %v4145
    %v4152 = vmul.f32 %v4146, %v4146
    %v4153 = vmul.f32 %v4147, %v4147
    %v4154 = vmul.f32 %v4148, %v4148
    %v4155 = vsel %vm142, %v4149, 0.0
    %4156 = vadd.xlane.f32.xlu0 %v4155
    %v4157 = vpop.xlane.xlu0 %4156
    %v4158 = vsel %vm142, %v4150, 0.0
    %4159 = vadd.xlane.f32.xlu0 %v4158
    %v4160 = vpop.xlane.xlu0 %4159
    %v4161 = vsel %vm142, %v4151, 0.0
    %4162 = vadd.xlane.f32.xlu0 %v4161
    %v4163 = vpop.xlane.xlu0 %4162
    %v4164 = vsel %vm142, %v4152, 0.0
    %4165 = vadd.xlane.f32.xlu0 %v4164
    %v4166 = vpop.xlane.xlu0 %4165
    %v4167 = vsel %vm142, %v4153, 0.0
    %4168 = vadd.xlane.f32.xlu0 %v4167
    %v4169 = vpop.xlane.xlu0 %4168
    %v4170 = vsel %vm142, %v4154, 0.0
    %4171 = vadd.xlane.f32.xlu0 %v4170
    %v4172 = vpop.xlane.xlu0 %4171
    %v4173 = vmul.f32 %v4157, %v161
    %v4174 = vmul.f32 %v4160, %v161
    %v4175 = vmul.f32 %v4163, %v161
    %v4176 = vmul.f32 %v4166, %v161
    %v4177 = vmul.f32 %v4169, %v161
    %v4178 = vmul.f32 %v4172, %v161
    %v4179 = vadd.f32 %v4173, 1e-05
    %v4180 = vadd.f32 %v4174, 1e-05
    %v4181 = vadd.f32 %v4175, 1e-05
    %v4182 = vadd.f32 %v4176, 1e-05
    %v4183 = vadd.f32 %v4177, 1e-05
    %v4184 = vadd.f32 %v4178, 1e-05
    %v4185 = vrsqrt.pop %v4179
    %v4186 = vrsqrt.pop %v4180
    %v4187 = vrsqrt.pop %v4181
    %v4188 = vrsqrt.pop %v4182
    %v4189 = vrsqrt.pop %v4183
    %v4190 = vrsqrt.pop %v4184
    %v4191 = vmul.f32 %v4143, %v4185
    %v4192 = vmul.f32 %v4144, %v4186
    %v4193 = vmul.f32 %v4145, %v4187
    %v4194 = vmul.f32 %v4146, %v4188
    %v4195 = vmul.f32 %v4147, %v4189
    %v4196 = vmul.f32 %v4148, %v4190
    %v4197 = vlaneseq
    %v4198 = vshrl.u32 %v4197, 7
    %v4199 = vsub.s32 0, %v4198
    %v4200 = vrot.slane %v4117, %v4199
    %v4201 = vmul.f32 %v4191, %v4200
    %v4202 = vmul.f32 %v4192, %v4200
    %v4203 = vmul.f32 %v4193, %v4200
    %v4204 = vmul.f32 %v4194, %v4200
    %v4205 = vmul.f32 %v4195, %v4200
    %v4206 = vmul.f32 %v4196, %v4200
    %v4207 = vlaneseq
    %v4208 = vshrl.u32 %v4207, 7
    %v4209 = vsub.s32 0, %v4208
    %v4210 = vrot.slane %v4118, %v4209
    %v4211 = vadd.f32 %v4201, %v4210
    %v4212 = vadd.f32 %v4202, %v4210
    %v4213 = vadd.f32 %v4203, %v4210
    %v4214 = vadd.f32 %v4204, %v4210
    %v4215 = vadd.f32 %v4205, %v4210
    %v4216 = vadd.f32 %v4206, %v4210
    %v4217 = vpack.c.bf16 %v4212, %v4211
    %v4218 = vpack.c.bf16 %v4214, %v4213
    %v4219 = vpack.c.bf16 %v4216, %v4215
    %v4220 = vld [vmem:[#allocation2 + $0x88] sm:$0xf]
    %v4221 = vld [vmem:[#allocation2 + $0x8c] sm:$0xf]
    %v4222 = vld [vmem:[#allocation2 + $0x90] sm:$0xf]
    %v4223 = vld [vmem:[#allocation2 + $0x94] sm:$0xf]
    %v4224 = vld [vmem:[%s2 + $0x3e] sm:$0x1]
    %v4225 = vlaneseq
    %v4226 = vshrl.u32 %v4225, 7
    %v4227 = vsub.s32 0, %v4226
    %v4228 = vrot.slane %v4224, %v4227
    %v4233 = vunpack.c.l.b16 %v4220
    %v4234 = vunpack.c.l.b16 %v4221
    %v4235 = vunpack.c.l.b16 %v4222
    %v4236 = vunpack.c.l.b16 %v4223
    %v4237 = vpack.c.b16 %v4234, %v4233
    %v4238 = vpack.c.b16 %v4236, %v4235
    %v4242 = vsel %vm142, %v4217, 0
    %v4245 = vsel %vm142, %v4218, 0
    %v4248 = vsel %vm142, %v4219, 0
    %4250 = vmatprep.subr.bf16.mxu0 0
    %4251 = vmatpush1.bf16.msra.mxu0 0
    %4252 = vmatprep.subr.bf16.mxu0 0
    %4253 = vmatpush1.bf16.msra.mxu0 0
    %4254 = vmatprep.subr.bf16.mxu0 0
    %4255 = vmatpush1.bf16.msra.mxu0 0
    %4256 = vmatprep.subr.bf16.mxu0 0
    %4257 = vmatpush1.bf16.msra.mxu0 0
    %4258 = vmatprep.subr.bf16.mxu0 0
    %4259 = vmatpush1.bf16.msra.mxu0 0
    %4260 = vmatprep.subr.bf16.mxu0 0
    %4261 = vmatpush1.bf16.msra.mxu0 0
    %4262 = vmatprep.subr.bf16.mxu0 0
    %4263 = vmatpush1.bf16.msra.mxu0 %v4238
    %4264 = vmatprep.subr.bf16.mxu0 0
    %4265 = vmatpush1.bf16.msra.mxu0 %v4237
    %4266 = vmatprep.subr.bf16.mxu0 0
    %4267 = vmatpush2.bf16.msra.mxu0 0
    %4268 = vmatprep.subr.bf16.mxu0 0
    %4269 = vmatpush2.bf16.msra.mxu0 0
    %4270 = vmatprep.subr.bf16.mxu0 0
    %4271 = vmatpush2.bf16.msra.mxu0 0
    %4272 = vmatprep.subr.bf16.mxu0 0
    %4273 = vmatpush2.bf16.msra.mxu0 0
    %4274 = vmatprep.subr.bf16.mxu0 0
    %4275 = vmatpush2.bf16.msra.mxu0 0
    %4276 = vmatprep.subr.bf16.mxu0 0
    %4277 = vmatpush2.bf16.msra.mxu0 0
    %4278 = vmatprep.subr.bf16.mxu0 0
    %4279 = vmatpush2.bf16.msra.mxu0 0
    %4280 = vmatprep.subr.bf16.mxu0 0
    %4281 = vmatpush2.bf16.msra.mxu0 0
    %4282 = vmatprep.mubr.bf16.mxu0 0
    %4283 = vmatmul.mubr.bf16.gmra.mxu0 %v4242
    %v4284 = vpop.f32.mrf.mxu0
    %v4285 = vadd.f32 %v4228, %v4284
    %v4286 = vpop.f32.mrf.mxu0
    %v4287 = vpop.f32.mrf.mxu0
    %v4288 = vadd.f32 %v4228, %v4287
    %v4289 = vpop.f32.mrf.mxu0
    %4290 = vmatprep.mubr.bf16.mxu0 0
    %4291 = vmatmul.mubr.bf16.gmra.mxu0 %v4245
    %v4292 = vpop.f32.mrf.mxu0
    %v4293 = vadd.f32 %v4228, %v4292
    %v4294 = vpop.f32.mrf.mxu0
    %v4295 = vpop.f32.mrf.mxu0
    %v4296 = vadd.f32 %v4228, %v4295
    %v4297 = vpop.f32.mrf.mxu0
    %4298 = vmatprep.mubr.bf16.mxu0 0
    %4299 = vmatmul.mubr.bf16.gmra.mxu0 %v4248
    %v4300 = vpop.f32.mrf.mxu0
    %v4301 = vadd.f32 %v4228, %v4300
    %v4302 = vpop.f32.mrf.mxu0
    %v4303 = vpop.f32.mrf.mxu0
    %v4304 = vadd.f32 %v4228, %v4303
    %v4305 = vpop.f32.mrf.mxu0
    %4306 = vdwg.mxu0
    %v4307 = vmul.f32 %v4285, %v4285
    %v4308 = vmul.f32 %v4288, %v4288
    %v4309 = vmul.f32 %v4293, %v4293
    %v4310 = vmul.f32 %v4296, %v4296
    %v4311 = vmul.f32 %v4301, %v4301
    %v4312 = vmul.f32 %v4304, %v4304
    %v4313 = vmul.f32 %v4285, %v4307
    %v4314 = vmul.f32 %v4288, %v4308
    %v4315 = vmul.f32 %v4293, %v4309
    %v4316 = vmul.f32 %v4296, %v4310
    %v4317 = vmul.f32 %v4301, %v4311
    %v4318 = vmul.f32 %v4304, %v4312
    %v4319 = vmul.f32 %v4313, 0.044715
    %v4320 = vmul.f32 %v4314, 0.044715
    %v4321 = vmul.f32 %v4315, 0.044715
    %v4322 = vmul.f32 %v4316, 0.044715
    %v4323 = vmul.f32 %v4317, 0.044715
    %v4324 = vmul.f32 %v4318, 0.044715
    %v4325 = vadd.f32 %v4285, %v4319
    %v4326 = vadd.f32 %v4288, %v4320
    %v4327 = vadd.f32 %v4293, %v4321
    %v4328 = vadd.f32 %v4296, %v4322
    %v4329 = vadd.f32 %v4301, %v4323
    %v4330 = vadd.f32 %v4304, %v4324
    %v4331 = vmul.f32 %v4325, 0.7978846
    %v4332 = vmul.f32 %v4326, 0.7978846
    %v4333 = vmul.f32 %v4327, 0.7978846
    %v4334 = vmul.f32 %v4328, 0.7978846
    %v4335 = vmul.f32 %v4329, 0.7978846
    %v4336 = vmul.f32 %v4330, 0.7978846
    %v4337 = vtanh.pop %v4331
    %v4338 = vtanh.pop %v4332
    %v4339 = vtanh.pop %v4333
    %v4340 = vtanh.pop %v4334
    %v4341 = vtanh.pop %v4335
    %v4342 = vtanh.pop %v4336
    %v4343 = vadd.f32 %v4337, 1.0
    %v4344 = vadd.f32 %v4338, 1.0
    %v4345 = vadd.f32 %v4339, 1.0
    %v4346 = vadd.f32 %v4340, 1.0
    %v4347 = vadd.f32 %v4341, 1.0
    %v4348 = vadd.f32 %v4342, 1.0
    %v4349 = vmul.f32 %v4343, 0.5
    %v4350 = vmul.f32 %v4344, 0.5
    %v4351 = vmul.f32 %v4345, 0.5
    %v4352 = vmul.f32 %v4346, 0.5
    %v4353 = vmul.f32 %v4347, 0.5
    %v4354 = vmul.f32 %v4348, 0.5
    %v4355 = vmul.f32 %v4285, %v4349
    %v4356 = vmul.f32 %v4288, %v4350
    %v4357 = vmul.f32 %v4293, %v4351
    %v4358 = vmul.f32 %v4296, %v4352
    %v4359 = vmul.f32 %v4301, %v4353
    %v4360 = vmul.f32 %v4304, %v4354
    %v4361 = vpack.c.bf16 %v4356, %v4355
    %v4362 = vpack.c.bf16 %v4358, %v4357
    %v4363 = vpack.c.bf16 %v4360, %v4359
    %v4364 = vld [vmem:[#allocation2 + $0x98] sm:$0xf]
    %v4365 = vld [vmem:[#allocation2 + $0x9c] sm:$0xf]
    %v4366 = vld [vmem:[#allocation2 + $0xa0] sm:$0xf]
    %v4367 = vld [vmem:[#allocation2 + $0xa4] sm:$0xf]
    %v4368 = vld [vmem:[#allocation2 + $0xa8] sm:$0xf]
    %v4369 = vld [vmem:[#allocation2 + $0xac] sm:$0xf]
    %v4370 = vld [vmem:[#allocation2 + $0xb0] sm:$0xf]
    %v4371 = vld [vmem:[#allocation2 + $0xb4] sm:$0xf]
    %v4380 = vunpack.c.l.b16 %v4364
    %v4381 = vunpack.c.l.b16 %v4365
    %v4382 = vunpack.c.l.b16 %v4366
    %v4383 = vunpack.c.l.b16 %v4367
    %v4384 = vunpack.c.l.b16 %v4368
    %v4385 = vunpack.c.l.b16 %v4369
    %v4386 = vunpack.c.l.b16 %v4370
    %v4387 = vunpack.c.l.b16 %v4371
    %v4388 = vpack.c.b16 %v4381, %v4380
    %v4389 = vpack.c.b16 %v4383, %v4382
    %v4390 = vpack.c.b16 %v4385, %v4384
    %v4391 = vpack.c.b16 %v4387, %v4386
    %v4397 = vsel %vm2229, %v4361, 0
    %v4400 = vsel %vm2229, %v4362, 0
    %v4403 = vsel %vm2229, %v4363, 0
    %4405 = vmatprep.subr.bf16.mxu0 0
    %4406 = vmatpush1.bf16.msra.mxu0 0
    %4407 = vmatprep.subr.bf16.mxu0 0
    %4408 = vmatpush1.bf16.msra.mxu0 0
    %4409 = vmatprep.subr.bf16.mxu0 0
    %4410 = vmatpush1.bf16.msra.mxu0 0
    %4411 = vmatprep.subr.bf16.mxu0 0
    %4412 = vmatpush1.bf16.msra.mxu0 0
    %4413 = vmatprep.subr.bf16.mxu0 0
    %4414 = vmatpush1.bf16.msra.mxu0 %v4391
    %4415 = vmatprep.subr.bf16.mxu0 0
    %4416 = vmatpush1.bf16.msra.mxu0 %v4390
    %4417 = vmatprep.subr.bf16.mxu0 0
    %4418 = vmatpush1.bf16.msra.mxu0 %v4389
    %4419 = vmatprep.subr.bf16.mxu0 0
    %4420 = vmatpush1.bf16.msra.mxu0 %v4388
    %4421 = vmatprep.subr.bf16.mxu0 0
    %4422 = vmatpush2.bf16.msra.mxu0 0
    %4423 = vmatprep.subr.bf16.mxu0 0
    %4424 = vmatpush2.bf16.msra.mxu0 0
    %4425 = vmatprep.subr.bf16.mxu0 0
    %4426 = vmatpush2.bf16.msra.mxu0 0
    %4427 = vmatprep.subr.bf16.mxu0 0
    %4428 = vmatpush2.bf16.msra.mxu0 0
    %4429 = vmatprep.subr.bf16.mxu0 0
    %4430 = vmatpush2.bf16.msra.mxu0 0
    %4431 = vmatprep.subr.bf16.mxu0 0
    %4432 = vmatpush2.bf16.msra.mxu0 0
    %4433 = vmatprep.subr.bf16.mxu0 0
    %4434 = vmatpush2.bf16.msra.mxu0 0
    %4435 = vmatprep.subr.bf16.mxu0 0
    %4436 = vmatpush2.bf16.msra.mxu0 0
    %4437 = vmatprep.mubr.bf16.mxu0 0
    %4438 = vmatmul.mubr.bf16.gmra.mxu0 %v4397
    %v4439 = vpop.f32.mrf.mxu0
    %v4440 = vadd.f32 0.0, %v4439
    %v4441 = vpop.f32.mrf.mxu0
    %v4442 = vpop.f32.mrf.mxu0
    %v4443 = vpop.f32.mrf.mxu0
    %4444 = vmatprep.mubr.bf16.mxu0 0
    %4445 = vmatmul.mubr.bf16.gmra.mxu0 %v4400
    %v4446 = vpop.f32.mrf.mxu0
    %v4447 = vpop.f32.mrf.mxu0
    %v4448 = vpop.f32.mrf.mxu0
    %v4449 = vadd.f32 0.0, %v4448
    %v4450 = vpop.f32.mrf.mxu0
    %4451 = vmatprep.mubr.bf16.mxu0 0
    %4452 = vmatmul.mubr.bf16.gmra.mxu0 %v4403
    %v4453 = vpop.f32.mrf.mxu0
    %v4454 = vpop.f32.mrf.mxu0
    %v4455 = vpop.f32.mrf.mxu0
    %v4456 = vpop.f32.mrf.mxu0
    %4457 = vdwg.mxu0
    %v4458 = vadd.f32 %v4111, %v4440
    %v4459 = vadd.f32 %v4114, %v4449
    %v4460 = vld [vmem:[%s2 + $0x3f] sm:$0x1]
    %v4461 = vlaneseq
    %v4462 = vshrl.u32 %v4461, 7
    %v4463 = vsub.s32 0, %v4462
    %v4464 = vrot.slane %v4460, %v4463
    %v4465 = vadd.f32 %v4458, %v4464
    %v4466 = vadd.f32 %v4459, %v4464
    %v4468 = vrot.slane %v4466, 7
    %vm4470 = vcmask 1040384
    %v4471 = vsel %vm4470, %v4465, %v4468
    %v4472 = vpack.c.bf16 %v4471, %v4471
    %v4473 = vld [vmem:[#allocation2 + $0xb8] sm:$0xf]
    %v4474 = vld [vmem:[#allocation2 + $0xbc] sm:$0xf]
    %v4475 = vld [vmem:[#allocation2 + $0xc0] sm:$0xf]
    %v4476 = vld [vmem:[#allocation2 + $0xc4] sm:$0xf]
    %v4477 = vld [vmem:[%s2 + $0x40] sm:$0x1]
    %v4478 = vlaneseq
    %v4479 = vshrl.u32 %v4478, 7
    %v4480 = vsub.s32 0, %v4479
    %v4481 = vrot.slane %v4477, %v4480
    %v4486 = vunpack.c.l.b16 %v4473
    %v4487 = vunpack.c.l.b16 %v4474
    %v4488 = vunpack.c.l.b16 %v4475
    %v4489 = vunpack.c.l.b16 %v4476
    %v4490 = vpack.c.b16 %v4487, %v4486
    %v4491 = vpack.c.b16 %v4489, %v4488
    %v4495 = vsel %vm142, %v4472, 0
    %4497 = vmatprep.subr.bf16.mxu0 0
    %4498 = vmatpush1.bf16.msra.mxu0 0
    %4499 = vmatprep.subr.bf16.mxu0 0
    %4500 = vmatpush1.bf16.msra.mxu0 0
    %4501 = vmatprep.subr.bf16.mxu0 0
    %4502 = vmatpush1.bf16.msra.mxu0 0
    %4503 = vmatprep.subr.bf16.mxu0 0
    %4504 = vmatpush1.bf16.msra.mxu0 0
    %4505 = vmatprep.subr.bf16.mxu0 0
    %4506 = vmatpush1.bf16.msra.mxu0 0
    %4507 = vmatprep.subr.bf16.mxu0 0
    %4508 = vmatpush1.bf16.msra.mxu0 0
    %4509 = vmatprep.subr.bf16.mxu0 0
    %4510 = vmatpush1.bf16.msra.mxu0 %v4491
    %4511 = vmatprep.subr.bf16.mxu0 0
    %4512 = vmatpush1.bf16.msra.mxu0 %v4490
    %4513 = vmatprep.subr.bf16.mxu0 0
    %4514 = vmatpush2.bf16.msra.mxu0 0
    %4515 = vmatprep.subr.bf16.mxu0 0
    %4516 = vmatpush2.bf16.msra.mxu0 0
    %4517 = vmatprep.subr.bf16.mxu0 0
    %4518 = vmatpush2.bf16.msra.mxu0 0
    %4519 = vmatprep.subr.bf16.mxu0 0
    %4520 = vmatpush2.bf16.msra.mxu0 0
    %4521 = vmatprep.subr.bf16.mxu0 0
    %4522 = vmatpush2.bf16.msra.mxu0 0
    %4523 = vmatprep.subr.bf16.mxu0 0
    %4524 = vmatpush2.bf16.msra.mxu0 0
    %4525 = vmatprep.subr.bf16.mxu0 0
    %4526 = vmatpush2.bf16.msra.mxu0 0
    %4527 = vmatprep.subr.bf16.mxu0 0
    %4528 = vmatpush2.bf16.msra.mxu0 0
    %4529 = vmatprep.mubr.bf16.mxu0 0
    %4530 = vmatmul.mubr.bf16.gmra.mxu0 %v4495
    %v4531 = vpop.f32.mrf.mxu0
    %v4532 = vadd.f32 %v4481, %v4531
    %v4533 = vpop.f32.mrf.mxu0
    %v4534 = vpop.f32.mrf.mxu0
    %v4535 = vpop.f32.mrf.mxu0
    %4536 = vdwg.mxu0
    %vm4537 = vcmask 1041408
    %v4538 = vsel %vm4537, %v4532, -inf
    %4539 = vmax.xlane.f32.xlu0 %v4538
    %v4540 = vpop.xlane.xlu0 %4539
    %v4541 = vsub.f32 %v4532, %v4540
    %v4542 = vmul.f32 %v4541, 1.442695
    %v4543 = vpow.pop %v4542
    %v4544 = vsel %vm4537, %v4543, 0.0
    %4545 = vadd.xlane.f32.xlu0 %v4544
    %v4546 = vpop.xlane.xlu0 %4545
    %v4547 = vrcp.pop %v4546
    %v4548 = vmul.f32 %v4543, %v4547
    %4549 = vst [vmem:[#allocation5] sm:$0x3] %v4548
    // Predicated region
    $region18: #{vit_forward.1} parent=1 // pred_check
      _
    $region19: #{vit_forward.1} parent=1 // pred_check_branch
      %4551 = sbr.rel (0) target = $region21
    $region20: #{vit_forward.1} parent=1 // pred_region
      %s4553 = ssub.s32 32, 32
      %4554 = vsyncadd [#allocation4], %s4553
      %s4556 = sshll.u32 [#allocation5], 4
      %s4557 = int_to_ptr.vmem [resolvable:$true] %s4556
      %4559 = dma.vmem_to_hbm [thread:$0]  %s4557, 32, %s3, [#allocation4]
    $region21: #{vit_forward.1} parent=1 // pred_fallthru
      _
    // Predicated region
    $region22: #{vit_forward.1} parent=1 // pred_check
      _
    $region23: #{vit_forward.1} parent=1 // pred_check_branch
      %4561 = sbr.rel (0) target = $region25
    $region24: #{vit_forward.1} parent=1 // pred_region
      %4562 = dma.done [#allocation4], 32
    $region25: #{vit_forward.1} parent=1 // pred_fallthru
      _
    %4563 = vsyncpa [#allocation3], 1
    %4564 = vsyncpa [#allocation4], 1

</llo_original>
